<compile_context>
chip_gen: v7x
topology: tpu7x:2x2x1
jax: 0.10.0
libtpu: 0.0.40
codegen_flags: <defaults>
</compile_context>

<pallas_src>
import functools

import jax
import jax.numpy as jnp
from jax import lax
from jax.experimental import pallas as pl
from jax.experimental.pallas import tpu as pltpu

# MXU input dtype (accumulation is always f32).  Set to jnp.float32 for an
# exact-f32 path on all generations.
MXU_DTYPE = jnp.bfloat16


# ----------------------------------------------------------------------------
# Pallas kernel: GEMM + bias + activation (+ fused max-pool over phase blocks)
# ----------------------------------------------------------------------------
def _gemm_bias_act_pool_kernel(p_ref, w_ref, b_ref, o_ref, *, act, phases):
    # p_ref: (M, K)   w_ref: (K, N)   b_ref: (1, N)   o_ref: (M // phases, N)
    acc = jnp.dot(p_ref[...], w_ref[...], preferred_element_type=jnp.float32)
    acc = acc + b_ref[...]                      # f32 epilogue (v5e-friendly)
    if act == "relu":
        acc = jnp.maximum(acc, 0.0)
    elif act == "tanh":
        acc = jnp.tanh(acc)
    if phases > 1:
        # Fused MaxPool: rows were laid out as `phases` contiguous blocks, one
        # per pool-window offset; pooling = elementwise max over the blocks.
        m = acc.shape[0] // phases
        out = acc[0:m]
        for t in range(1, phases):
            out = jnp.maximum(out, acc[t * m:(t + 1) * m])
        acc = out
    o_ref[...] = acc.astype(o_ref.dtype)


def gemm_bias_act_pool(patches, w2d, b, act, phases=1):
    """(M, K) @ (K, N) + b, activation, optional fused pool over `phases` row blocks."""
    M, K = patches.shape
    K2, N = w2d.shape
    assert K == K2 and M % phases == 0
    Mo = M // phases
    b2 = b.reshape(1, N).astype(jnp.float32)
    # TODO(synk): on v7x, split M into a 2-way "parallel" grid axis so both
    # TensorCores are used (needs M padded to a multiple of 16 and the pool
    # phase split kept inside each block); a single step is already optimal on
    # the single-TC v5e/v6e at these sizes.
    return pl.pallas_call(
        functools.partial(_gemm_bias_act_pool_kernel, act=act, phases=phases),
        out_shape=jax.ShapeDtypeStruct((Mo, N), jnp.float32),
        grid=(1,),
        in_specs=[
            pl.BlockSpec((M, K), lambda i: (0, 0)),
            pl.BlockSpec((K, N), lambda i: (0, 0)),
            pl.BlockSpec((1, N), lambda i: (0, 0)),
        ],
        out_specs=pl.BlockSpec((Mo, N), lambda i: (0, 0)),
        compiler_params=pltpu.CompilerParams(dimension_semantics=("arbitrary",)),
    )(patches.astype(MXU_DTYPE), w2d.astype(MXU_DTYPE), b2)


# ----------------------------------------------------------------------------
# Glue (data movement only: padding, dilation, strided patch extraction)
# ----------------------------------------------------------------------------
def _strided_patches(xp, k, stride, pool_k, pool_stride, Po, Qo):
    """im2col patches at exactly the needed (strided, pooled) output positions.

    xp: (B, Hp, Wp, C) padded (and pre-dilated, for transposed conv) input.
    Returns (pool_k**2 * B*Po*Qo, k*k*C).  Rows are ordered
    (pool_dy, pool_dx, b, po, qo) and columns (ki, kj, c), so a fused pool is a
    max over pool_k**2 contiguous row blocks and the pooled rows come out in
    (b, po, qo) order.  pool_k == 1 gives plain conv patches.
    """
    B, Hp, Wp, C = xp.shape
    step = stride * pool_stride
    blocks = []
    for dy in range(pool_k):
        for dx in range(pool_k):
            cols = []
            for i in range(k):
                for j in range(k):
                    h0 = stride * dy + i
                    w0 = stride * dx + j
                    win = lax.slice(
                        xp,
                        (0, h0, w0, 0),
                        (B, h0 + (Po - 1) * step + 1, w0 + (Qo - 1) * step + 1, C),
                        (1, step, step, 1))          # (B, Po, Qo, C)
                    cols.append(win.reshape(B * Po * Qo, C))
            blocks.append(jnp.concatenate(cols, axis=1))
    return blocks[0] if len(blocks) == 1 else jnp.concatenate(blocks, axis=0)


def conv2d_pool(x, w_oihw, b, *, stride, padding, act, pool_k=1, pool_stride=1):
    """PyTorch Conv2d (+ ReLU + optional MaxPool2d) on NHWC input.

    Returns (rows, (Po, Qo)): rows is (B*Po*Qo, Cout) ordered (b, po, qo).
    """
    Cout, Cin, kh, kw = w_oihw.shape
    assert kh == kw
    B, H, W, C = x.shape
    assert C == Cin
    zero = jnp.zeros((), x.dtype)
    xp = lax.pad(x, zero, ((0, 0, 0), (padding, padding, 0),
                           (padding, padding, 0), (0, 0, 0)))
    Hc = (H + 2 * padding - kh) // stride + 1       # conv output size
    Wc = (W + 2 * padding - kw) // stride + 1
    if pool_k > 1:
        Po = (Hc - pool_k) // pool_stride + 1       # MaxPool2d output size (floor)
        Qo = (Wc - pool_k) // pool_stride + 1
    else:
        Po, Qo = Hc, Wc
    patches = _strided_patches(xp, kh, stride, pool_k, pool_stride, Po, Qo)
    w2d = jnp.transpose(w_oihw, (2, 3, 1, 0)).reshape(kh * kw * Cin, Cout)
    y = gemm_bias_act_pool(patches, w2d, b, act, phases=pool_k * pool_k)
    return y, (Po, Qo)


def conv_transpose2d(x, w_iohw, b, *, stride, padding, act):
    """PyTorch ConvTranspose2d (+ activation) on NHWC input. Returns rows like conv2d_pool."""
    Cin, Cout, kh, kw = w_iohw.shape
    assert kh == kw
    B, H, W, C = x.shape
    assert C == Cin
    assert padding >= 0, "ConvTranspose2d padding must be >= 0 (PyTorch semantics)"
    p = kh - 1 - padding
    assert p >= 0
    zero = jnp.zeros((), x.dtype)
    # Single lax.pad: interior padding dilates by `stride`, outer padding adds
    # the flipped-kernel halo -> equivalent stride-1 convolution.
    xp = lax.pad(x, zero, ((0, 0, 0), (p, p, stride - 1), (p, p, stride - 1), (0, 0, 0)))
    Ho = xp.shape[1] - kh + 1
    Wo = xp.shape[2] - kw + 1
    # TODO(synk): the dilated patches contain structural zeros (~stride^2 MXU
    # waste); a polyphase decomposition would remove it but needs an output
    # interleave that is not worth it at these sizes.
    patches = _strided_patches(xp, kh, 1, 1, 1, Ho, Wo)
    wf = jnp.flip(w_iohw, axis=(2, 3))
    w2d = jnp.transpose(wf, (2, 3, 0, 1)).reshape(kh * kw * Cin, Cout)
    y = gemm_bias_act_pool(patches, w2d, b, act, phases=1)
    return y, (Ho, Wo)


# ----------------------------------------------------------------------------
# AutoEncoder parameters + forward
# ----------------------------------------------------------------------------
def init_params(key, input_channel):
    def u(k, shape, fan_in):
        bound = 1.0 / (fan_in ** 0.5)
        return jax.random.uniform(k, shape, jnp.float32, -bound, bound)

    ks = jax.random.split(key, 10)
    p = {}
    # encoder: Conv2d weights are (Cout, Cin, kh, kw)
    p["e1_w"] = u(ks[0], (16, input_channel, 3, 3), input_channel * 9)
    p["e1_b"] = u(ks[1], (16,), input_channel * 9)
    p["e2_w"] = u(ks[2], (8, 16, 3, 3), 16 * 9)
    p["e2_b"] = u(ks[3], (8,), 16 * 9)
    # decoder: ConvTranspose2d weights are (Cin, Cout, kh, kw)
    p["d1_w"] = u(ks[4], (8, 16, 3, 3), 8 * 9)
    p["d1_b"] = u(ks[5], (16,), 8 * 9)
    p["d2_w"] = u(ks[6], (16, 8, 5, 5), 16 * 25)
    p["d2_b"] = u(ks[7], (8,), 16 * 25)
    p["d3_w"] = u(ks[8], (8, input_channel, 2, 2), 8 * 4)
    p["d3_b"] = u(ks[9], (input_channel,), 8 * 4)
    return p


def autoencoder_forward(params, x_nchw, *, ndim):
    d2_pad = 1 - ndim // 32
    assert d2_pad >= 0, "decoder-middle ConvTranspose2d padding must be >= 0 (ndim < 64)"
    B = x_nchw.shape[0]
    x = jnp.transpose(x_nchw, (0, 2, 3, 1)).astype(jnp.float32)   # NCHW -> NHWC

    # --- encoder ---
    y, (h, w) = conv2d_pool(x, params["e1_w"], params["e1_b"], stride=3, padding=1,
                            act="relu", pool_k=2, pool_stride=2)   # Conv+ReLU+MaxPool(2, s=2)
    x = y.reshape(B, h, w, params["e1_w"].shape[0])
    y, (h, w) = conv2d_pool(x, params["e2_w"], params["e2_b"], stride=2, padding=1,
                            act="relu", pool_k=2, pool_stride=1)   # Conv+ReLU+MaxPool(2, s=1)
    x = y.reshape(B, h, w, params["e2_w"].shape[0])
    # TODO(synk): the PyTorch forward prints the encoder output size here (debug only).

    # --- decoder ---
    y, (h, w) = conv_transpose2d(x, params["d1_w"], params["d1_b"],
                                 stride=2, padding=0, act="relu")
    x = y.reshape(B, h, w, params["d1_w"].shape[1])
    y, (h, w) = conv_transpose2d(x, params["d2_w"], params["d2_b"],
                                 stride=3, padding=d2_pad, act="relu")
    x = y.reshape(B, h, w, params["d2_w"].shape[1])
    y, (h, w) = conv_transpose2d(x, params["d3_w"], params["d3_b"],
                                 stride=2, padding=1, act="tanh")
    x = y.reshape(B, h, w, params["d3_w"].shape[1])
    return jnp.transpose(x, (0, 3, 1, 2))   # NHWC -> NCHW


if __name__ == "__main__":
    key = jax.random.PRNGKey(0)
    kx, kp = jax.random.split(key)

    input_channel, ndim = 4, 16          # ndim < 32 -> decoder middle padding = 1
    B, H, W = 2, 28, 28                  # classic shape for this encoder/decoder chain
    x = jax.random.normal(kx, (B, input_channel, H, W), jnp.float32)
    params = init_params(kp, input_channel)

    fwd = jax.jit(functools.partial(autoencoder_forward, ndim=ndim))
    y = jax.block_until_ready(fwd(params, x))

    assert y.shape == (B, input_channel, H, W), y.shape
    assert bool(jnp.isfinite(y).all())
    print("KERNEL_OK")
</pallas_src>

<mosaic_0001>
module attributes {stable_mosaic.version = 11 : i64} {
  func.func @_gemm_bias_act_pool_kernel(%arg0: i32, %arg1: memref<200x36xbf16, #tpu.memory_space<vmem>>, %arg2: memref<36x16xbf16, #tpu.memory_space<vmem>>, %arg3: memref<1x16xf32, #tpu.memory_space<vmem>>, %arg4: memref<50x16xf32, #tpu.memory_space<vmem>>) attributes {dimension_semantics = [#tpu.dimension_semantics<arbitrary>], iteration_bounds = array<i64: 1>, scalar_prefetch = 0 : i64, scratch_operands = 0 : i64, tpu.core_type = #tpu.core_type<tc>, window_params = [{pipeline_mode = #tpu.pipeline_mode<synchronous>, transform_indices = @transform_0, window_bounds = array<i64: 200, 36>}, {pipeline_mode = #tpu.pipeline_mode<synchronous>, transform_indices = @transform_1, window_bounds = array<i64: 36, 16>}, {pipeline_mode = #tpu.pipeline_mode<synchronous>, transform_indices = @transform_2, window_bounds = array<i64: 1, 16>}, {pipeline_mode = #tpu.pipeline_mode<synchronous>, transform_indices = @transform_3, window_bounds = array<i64: 50, 16>}]} {
    %c0 = arith.constant 0 : index
    %c0_0 = arith.constant 0 : index
    %0 = vector.load %arg1[%c0, %c0_0] : memref<200x36xbf16, #tpu.memory_space<vmem>>, vector<200x36xbf16>
    %c0_1 = arith.constant 0 : index
    %c0_2 = arith.constant 0 : index
    %1 = vector.load %arg2[%c0_1, %c0_2] : memref<36x16xbf16, #tpu.memory_space<vmem>>, vector<36x16xbf16>
    %cst = arith.constant dense<0.000000e+00> : vector<200x16xf32>
    %2 = tpu.matmul %0, %1, %cst {dimension_numbers = #tpu.dot_dimension_numbers<[1], [0], [0], [1], [0, 0, 1, 1], [], []>} : vector<200x36xbf16>, vector<36x16xbf16>, vector<200x16xf32> -> vector<200x16xf32>
    %c0_3 = arith.constant 0 : index
    %c0_4 = arith.constant 0 : index
    %3 = vector.load %arg3[%c0_3, %c0_4] : memref<1x16xf32, #tpu.memory_space<vmem>>, vector<1x16xf32>
    %4 = vector.broadcast %3 : vector<1x16xf32> to vector<200x16xf32>
    %5 = arith.addf %2, %4 : vector<200x16xf32>
    %cst_5 = arith.constant 0.000000e+00 : f32
    %6 = vector.broadcast %cst_5 : f32 to vector<200x16xf32>
    %7 = arith.maximumf %5, %6 : vector<200x16xf32>
    %8 = vector.extract_strided_slice %7 {offsets = [0, 0], sizes = [50, 16], strides = [1, 1]} : vector<200x16xf32> to vector<50x16xf32>
    %9 = vector.extract_strided_slice %7 {offsets = [50, 0], sizes = [50, 16], strides = [1, 1]} : vector<200x16xf32> to vector<50x16xf32>
    %10 = arith.maximumf %8, %9 : vector<50x16xf32>
    %11 = vector.extract_strided_slice %7 {offsets = [100, 0], sizes = [50, 16], strides = [1, 1]} : vector<200x16xf32> to vector<50x16xf32>
    %12 = arith.maximumf %10, %11 : vector<50x16xf32>
    %13 = vector.extract_strided_slice %7 {offsets = [150, 0], sizes = [50, 16], strides = [1, 1]} : vector<200x16xf32> to vector<50x16xf32>
    %14 = arith.maximumf %12, %13 : vector<50x16xf32>
    %c0_6 = arith.constant 0 : index
    %c0_7 = arith.constant 0 : index
    %15 = vector.load %arg4[%c0_6, %c0_7] : memref<50x16xf32, #tpu.memory_space<vmem>>, vector<50x16xf32>
    tpu.vector_store %arg4[%c0_6, %c0_7], %14 {strides = array<i32>} : memref<50x16xf32, #tpu.memory_space<vmem>>, vector<50x16xf32>,
    return
  }
  func.func @transform_0(%arg0: i32) -> (i32, i32) {
    %c0_i32 = arith.constant 0 : i32
    %c0_i32_0 = arith.constant 0 : i32
    %c0_i32_1 = arith.constant 0 : i32
    return %c0_i32, %c0_i32_0 : i32, i32
  }
  func.func @transform_1(%arg0: i32) -> (i32, i32) {
    %c0_i32 = arith.constant 0 : i32
    %c0_i32_0 = arith.constant 0 : i32
    %c0_i32_1 = arith.constant 0 : i32
    return %c0_i32, %c0_i32_0 : i32, i32
  }
  func.func @transform_2(%arg0: i32) -> (i32, i32) {
    %c0_i32 = arith.constant 0 : i32
    %c0_i32_0 = arith.constant 0 : i32
    %c0_i32_1 = arith.constant 0 : i32
    return %c0_i32, %c0_i32_0 : i32, i32
  }
  func.func @transform_3(%arg0: i32) -> (i32, i32) {
    %c0_i32 = arith.constant 0 : i32
    %c0_i32_0 = arith.constant 0 : i32
    %c0_i32_1 = arith.constant 0 : i32
    return %c0_i32, %c0_i32_0 : i32, i32
  }
}

module attributes {stable_mosaic.version = 11 : i64} {
  func.func @_gemm_bias_act_pool_kernel(%arg0: i32, %arg1: memref<32x144xbf16, #tpu.memory_space<vmem>>, %arg2: memref<144x8xbf16, #tpu.memory_space<vmem>>, %arg3: memref<1x8xf32, #tpu.memory_space<vmem>>, %arg4: memref<8x8xf32, #tpu.memory_space<vmem>>) attributes {dimension_semantics = [#tpu.dimension_semantics<arbitrary>], iteration_bounds = array<i64: 1>, scalar_prefetch = 0 : i64, scratch_operands = 0 : i64, tpu.core_type = #tpu.core_type<tc>, window_params = [{pipeline_mode = #tpu.pipeline_mode<synchronous>, transform_indices = @transform_0, window_bounds = array<i64: 32, 144>}, {pipeline_mode = #tpu.pipeline_mode<synchronous>, transform_indices = @transform_1, window_bounds = array<i64: 144, 8>}, {pipeline_mode = #tpu.pipeline_mode<synchronous>, transform_indices = @transform_2, window_bounds = array<i64: 1, 8>}, {pipeline_mode = #tpu.pipeline_mode<synchronous>, transform_indices = @transform_3, window_bounds = array<i64: 8, 8>}]} {
    %c0 = arith.constant 0 : index
    %c0_0 = arith.constant 0 : index
    %0 = vector.load %arg1[%c0, %c0_0] : memref<32x144xbf16, #tpu.memory_space<vmem>>, vector<32x144xbf16>
    %c0_1 = arith.constant 0 : index
    %c0_2 = arith.constant 0 : index
    %1 = vector.load %arg2[%c0_1, %c0_2] : memref<144x8xbf16, #tpu.memory_space<vmem>>, vector<144x8xbf16>
    %cst = arith.constant dense<0.000000e+00> : vector<32x8xf32>
    %2 = tpu.matmul %0, %1, %cst {dimension_numbers = #tpu.dot_dimension_numbers<[1], [0], [0], [1], [0, 0, 1, 1], [], []>} : vector<32x144xbf16>, vector<144x8xbf16>, vector<32x8xf32> -> vector<32x8xf32>
    %c0_3 = arith.constant 0 : index
    %c0_4 = arith.constant 0 : index
    %3 = vector.load %arg3[%c0_3, %c0_4] : memref<1x8xf32, #tpu.memory_space<vmem>>, vector<1x8xf32>
    %4 = vector.broadcast %3 : vector<1x8xf32> to vector<32x8xf32>
    %5 = arith.addf %2, %4 : vector<32x8xf32>
    %cst_5 = arith.constant 0.000000e+00 : f32
    %6 = vector.broadcast %cst_5 : f32 to vector<32x8xf32>
    %7 = arith.maximumf %5, %6 : vector<32x8xf32>
    %8 = vector.extract_strided_slice %7 {offsets = [0, 0], sizes = [8, 8], strides = [1, 1]} : vector<32x8xf32> to vector<8x8xf32>
    %9 = vector.extract_strided_slice %7 {offsets = [8, 0], sizes = [8, 8], strides = [1, 1]} : vector<32x8xf32> to vector<8x8xf32>
    %10 = arith.maximumf %8, %9 : vector<8x8xf32>
    %11 = vector.extract_strided_slice %7 {offsets = [16, 0], sizes = [8, 8], strides = [1, 1]} : vector<32x8xf32> to vector<8x8xf32>
    %12 = arith.maximumf %10, %11 : vector<8x8xf32>
    %13 = vector.extract_strided_slice %7 {offsets = [24, 0], sizes = [8, 8], strides = [1, 1]} : vector<32x8xf32> to vector<8x8xf32>
    %14 = arith.maximumf %12, %13 : vector<8x8xf32>
    %c0_6 = arith.constant 0 : index
    %c0_7 = arith.constant 0 : index
    %15 = vector.load %arg4[%c0_6, %c0_7] : memref<8x8xf32, #tpu.memory_space<vmem>>, vector<8x8xf32>
    tpu.vector_store %arg4[%c0_6, %c0_7], %14 {strides = array<i32>} : memref<8x8xf32, #tpu.memory_space<vmem>>, vector<8x8xf32>,
    return
  }
  func.func @transform_0(%arg0: i32) -> (i32, i32) {
    %c0_i32 = arith.constant 0 : i32
    %c0_i32_0 = arith.constant 0 : i32
    %c0_i32_1 = arith.constant 0 : i32
    return %c0_i32, %c0_i32_0 : i32, i32
  }
  func.func @transform_1(%arg0: i32) -> (i32, i32) {
    %c0_i32 = arith.constant 0 : i32
    %c0_i32_0 = arith.constant 0 : i32
    %c0_i32_1 = arith.constant 0 : i32
    return %c0_i32, %c0_i32_0 : i32, i32
  }
  func.func @transform_2(%arg0: i32) -> (i32, i32) {
    %c0_i32 = arith.constant 0 : i32
    %c0_i32_0 = arith.constant 0 : i32
    %c0_i32_1 = arith.constant 0 : i32
    return %c0_i32, %c0_i32_0 : i32, i32
  }
  func.func @transform_3(%arg0: i32) -> (i32, i32) {
    %c0_i32 = arith.constant 0 : i32
    %c0_i32_0 = arith.constant 0 : i32
    %c0_i32_1 = arith.constant 0 : i32
    return %c0_i32, %c0_i32_0 : i32, i32
  }
}

module attributes {stable_mosaic.version = 11 : i64} {
  func.func @_gemm_bias_act_pool_kernel(%arg0: i32, %arg1: memref<50x72xbf16, #tpu.memory_space<vmem>>, %arg2: memref<72x16xbf16, #tpu.memory_space<vmem>>, %arg3: memref<1x16xf32, #tpu.memory_space<vmem>>, %arg4: memref<50x16xf32, #tpu.memory_space<vmem>>) attributes {dimension_semantics = [#tpu.dimension_semantics<arbitrary>], iteration_bounds = array<i64: 1>, scalar_prefetch = 0 : i64, scratch_operands = 0 : i64, tpu.core_type = #tpu.core_type<tc>, window_params = [{pipeline_mode = #tpu.pipeline_mode<synchronous>, transform_indices = @transform_0, window_bounds = array<i64: 50, 72>}, {pipeline_mode = #tpu.pipeline_mode<synchronous>, transform_indices = @transform_1, window_bounds = array<i64: 72, 16>}, {pipeline_mode = #tpu.pipeline_mode<synchronous>, transform_indices = @transform_2, window_bounds = array<i64: 1, 16>}, {pipeline_mode = #tpu.pipeline_mode<synchronous>, transform_indices = @transform_3, window_bounds = array<i64: 50, 16>}]} {
    %c0 = arith.constant 0 : index
    %c0_0 = arith.constant 0 : index
    %0 = vector.load %arg1[%c0, %c0_0] : memref<50x72xbf16, #tpu.memory_space<vmem>>, vector<50x72xbf16>
    %c0_1 = arith.constant 0 : index
    %c0_2 = arith.constant 0 : index
    %1 = vector.load %arg2[%c0_1, %c0_2] : memref<72x16xbf16, #tpu.memory_space<vmem>>, vector<72x16xbf16>
    %cst = arith.constant dense<0.000000e+00> : vector<50x16xf32>
    %2 = tpu.matmul %0, %1, %cst {dimension_numbers = #tpu.dot_dimension_numbers<[1], [0], [0], [1], [0, 0, 1, 1], [], []>} : vector<50x72xbf16>, vector<72x16xbf16>, vector<50x16xf32> -> vector<50x16xf32>
    %c0_3 = arith.constant 0 : index
    %c0_4 = arith.constant 0 : index
    %3 = vector.load %arg3[%c0_3, %c0_4] : memref<1x16xf32, #tpu.memory_space<vmem>>, vector<1x16xf32>
    %4 = vector.broadcast %3 : vector<1x16xf32> to vector<50x16xf32>
    %5 = arith.addf %2, %4 : vector<50x16xf32>
    %cst_5 = arith.constant 0.000000e+00 : f32
    %6 = vector.broadcast %cst_5 : f32 to vector<50x16xf32>
    %7 = arith.maximumf %5, %6 : vector<50x16xf32>
    %c0_6 = arith.constant 0 : index
    %c0_7 = arith.constant 0 : index
    %8 = vector.load %arg4[%c0_6, %c0_7] : memref<50x16xf32, #tpu.memory_space<vmem>>, vector<50x16xf32>
    tpu.vector_store %arg4[%c0_6, %c0_7], %7 {strides = array<i32>} : memref<50x16xf32, #tpu.memory_space<vmem>>, vector<50x16xf32>,
    return
  }
  func.func @transform_0(%arg0: i32) -> (i32, i32) {
    %c0_i32 = arith.constant 0 : i32
    %c0_i32_0 = arith.constant 0 : i32
    %c0_i32_1 = arith.constant 0 : i32
    return %c0_i32, %c0_i32_0 : i32, i32
  }
  func.func @transform_1(%arg0: i32) -> (i32, i32) {
    %c0_i32 = arith.constant 0 : i32
    %c0_i32_0 = arith.constant 0 : i32
    %c0_i32_1 = arith.constant 0 : i32
    return %c0_i32, %c0_i32_0 : i32, i32
  }
  func.func @transform_2(%arg0: i32) -> (i32, i32) {
    %c0_i32 = arith.constant 0 : i32
    %c0_i32_0 = arith.constant 0 : i32
    %c0_i32_1 = arith.constant 0 : i32
    return %c0_i32, %c0_i32_0 : i32, i32
  }
  func.func @transform_3(%arg0: i32) -> (i32, i32) {
    %c0_i32 = arith.constant 0 : i32
    %c0_i32_0 = arith.constant 0 : i32
    %c0_i32_1 = arith.constant 0 : i32
    return %c0_i32, %c0_i32_0 : i32, i32
  }
}

module attributes {stable_mosaic.version = 11 : i64} {
  func.func @_gemm_bias_act_pool_kernel(%arg0: i32, %arg1: memref<450x400xbf16, #tpu.memory_space<vmem>>, %arg2: memref<400x8xbf16, #tpu.memory_space<vmem>>, %arg3: memref<1x8xf32, #tpu.memory_space<vmem>>, %arg4: memref<450x8xf32, #tpu.memory_space<vmem>>) attributes {dimension_semantics = [#tpu.dimension_semantics<arbitrary>], iteration_bounds = array<i64: 1>, scalar_prefetch = 0 : i64, scratch_operands = 0 : i64, tpu.core_type = #tpu.core_type<tc>, window_params = [{pipeline_mode = #tpu.pipeline_mode<synchronous>, transform_indices = @transform_0, window_bounds = array<i64: 450, 400>}, {pipeline_mode = #tpu.pipeline_mode<synchronous>, transform_indices = @transform_1, window_bounds = array<i64: 400, 8>}, {pipeline_mode = #tpu.pipeline_mode<synchronous>, transform_indices = @transform_2, window_bounds = array<i64: 1, 8>}, {pipeline_mode = #tpu.pipeline_mode<synchronous>, transform_indices = @transform_3, window_bounds = array<i64: 450, 8>}]} {
    %c0 = arith.constant 0 : index
    %c0_0 = arith.constant 0 : index
    %0 = vector.load %arg1[%c0, %c0_0] : memref<450x400xbf16, #tpu.memory_space<vmem>>, vector<450x400xbf16>
    %c0_1 = arith.constant 0 : index
    %c0_2 = arith.constant 0 : index
    %1 = vector.load %arg2[%c0_1, %c0_2] : memref<400x8xbf16, #tpu.memory_space<vmem>>, vector<400x8xbf16>
    %cst = arith.constant dense<0.000000e+00> : vector<450x8xf32>
    %2 = tpu.matmul %0, %1, %cst {dimension_numbers = #tpu.dot_dimension_numbers<[1], [0], [0], [1], [0, 0, 1, 1], [], []>} : vector<450x400xbf16>, vector<400x8xbf16>, vector<450x8xf32> -> vector<450x8xf32>
    %c0_3 = arith.constant 0 : index
    %c0_4 = arith.constant 0 : index
    %3 = vector.load %arg3[%c0_3, %c0_4] : memref<1x8xf32, #tpu.memory_space<vmem>>, vector<1x8xf32>
    %4 = vector.broadcast %3 : vector<1x8xf32> to vector<450x8xf32>
    %5 = arith.addf %2, %4 : vector<450x8xf32>
    %cst_5 = arith.constant 0.000000e+00 : f32
    %6 = vector.broadcast %cst_5 : f32 to vector<450x8xf32>
    %7 = arith.maximumf %5, %6 : vector<450x8xf32>
    %c0_6 = arith.constant 0 : index
    %c0_7 = arith.constant 0 : index
    %8 = vector.load %arg4[%c0_6, %c0_7] : memref<450x8xf32, #tpu.memory_space<vmem>>, vector<450x8xf32>
    tpu.vector_store %arg4[%c0_6, %c0_7], %7 {strides = array<i32>} : memref<450x8xf32, #tpu.memory_space<vmem>>, vector<450x8xf32>,
    return
  }
  func.func @transform_0(%arg0: i32) -> (i32, i32) {
    %c0_i32 = arith.constant 0 : i32
    %c0_i32_0 = arith.constant 0 : i32
    %c0_i32_1 = arith.constant 0 : i32
    return %c0_i32, %c0_i32_0 : i32, i32
  }
  func.func @transform_1(%arg0: i32) -> (i32, i32) {
    %c0_i32 = arith.constant 0 : i32
    %c0_i32_0 = arith.constant 0 : i32
    %c0_i32_1 = arith.constant 0 : i32
    return %c0_i32, %c0_i32_0 : i32, i32
  }
  func.func @transform_2(%arg0: i32) -> (i32, i32) {
    %c0_i32 = arith.constant 0 : i32
    %c0_i32_0 = arith.constant 0 : i32
    %c0_i32_1 = arith.constant 0 : i32
    return %c0_i32, %c0_i32_0 : i32, i32
  }
  func.func @transform_3(%arg0: i32) -> (i32, i32) {
    %c0_i32 = arith.constant 0 : i32
    %c0_i32_0 = arith.constant 0 : i32
    %c0_i32_1 = arith.constant 0 : i32
    return %c0_i32, %c0_i32_0 : i32, i32
  }
}

module attributes {stable_mosaic.version = 11 : i64} {
  func.func @_gemm_bias_act_pool_kernel(%arg0: i32, %arg1: memref<1568x32xbf16, #tpu.memory_space<vmem>>, %arg2: memref<32x4xbf16, #tpu.memory_space<vmem>>, %arg3: memref<1x4xf32, #tpu.memory_space<vmem>>, %arg4: memref<1568x4xf32, #tpu.memory_space<vmem>>) attributes {dimension_semantics = [#tpu.dimension_semantics<arbitrary>], iteration_bounds = array<i64: 1>, scalar_prefetch = 0 : i64, scratch_operands = 0 : i64, tpu.core_type = #tpu.core_type<tc>, window_params = [{pipeline_mode = #tpu.pipeline_mode<synchronous>, transform_indices = @transform_0, window_bounds = array<i64: 1568, 32>}, {pipeline_mode = #tpu.pipeline_mode<synchronous>, transform_indices = @transform_1, window_bounds = array<i64: 32, 4>}, {pipeline_mode = #tpu.pipeline_mode<synchronous>, transform_indices = @transform_2, window_bounds = array<i64: 1, 4>}, {pipeline_mode = #tpu.pipeline_mode<synchronous>, transform_indices = @transform_3, window_bounds = array<i64: 1568, 4>}]} {
    %c0 = arith.constant 0 : index
    %c0_0 = arith.constant 0 : index
    %0 = vector.load %arg1[%c0, %c0_0] : memref<1568x32xbf16, #tpu.memory_space<vmem>>, vector<1568x32xbf16>
    %c0_1 = arith.constant 0 : index
    %c0_2 = arith.constant 0 : index
    %1 = vector.load %arg2[%c0_1, %c0_2] : memref<32x4xbf16, #tpu.memory_space<vmem>>, vector<32x4xbf16>
    %cst = arith.constant dense<0.000000e+00> : vector<1568x4xf32>
    %2 = tpu.matmul %0, %1, %cst {dimension_numbers = #tpu.dot_dimension_numbers<[1], [0], [0], [1], [0, 0, 1, 1], [], []>} : vector<1568x32xbf16>, vector<32x4xbf16>, vector<1568x4xf32> -> vector<1568x4xf32>
    %c0_3 = arith.constant 0 : index
    %c0_4 = arith.constant 0 : index
    %3 = vector.load %arg3[%c0_3, %c0_4] : memref<1x4xf32, #tpu.memory_space<vmem>>, vector<1x4xf32>
    %4 = vector.broadcast %3 : vector<1x4xf32> to vector<1568x4xf32>
    %5 = arith.addf %2, %4 : vector<1568x4xf32>
    %6 = math.tanh %5 : vector<1568x4xf32>
    %c0_5 = arith.constant 0 : index
    %c0_6 = arith.constant 0 : index
    %7 = vector.load %arg4[%c0_5, %c0_6] : memref<1568x4xf32, #tpu.memory_space<vmem>>, vector<1568x4xf32>
    tpu.vector_store %arg4[%c0_5, %c0_6], %6 {strides = array<i32>} : memref<1568x4xf32, #tpu.memory_space<vmem>>, vector<1568x4xf32>,
    return
  }
  func.func @transform_0(%arg0: i32) -> (i32, i32) {
    %c0_i32 = arith.constant 0 : i32
    %c0_i32_0 = arith.constant 0 : i32
    %c0_i32_1 = arith.constant 0 : i32
    return %c0_i32, %c0_i32_0 : i32, i32
  }
  func.func @transform_1(%arg0: i32) -> (i32, i32) {
    %c0_i32 = arith.constant 0 : i32
    %c0_i32_0 = arith.constant 0 : i32
    %c0_i32_1 = arith.constant 0 : i32
    return %c0_i32, %c0_i32_0 : i32, i32
  }
  func.func @transform_2(%arg0: i32) -> (i32, i32) {
    %c0_i32 = arith.constant 0 : i32
    %c0_i32_0 = arith.constant 0 : i32
    %c0_i32_1 = arith.constant 0 : i32
    return %c0_i32, %c0_i32_0 : i32, i32
  }
  func.func @transform_3(%arg0: i32) -> (i32, i32) {
    %c0_i32 = arith.constant 0 : i32
    %c0_i32_0 = arith.constant 0 : i32
    %c0_i32_1 = arith.constant 0 : i32
    return %c0_i32, %c0_i32_0 : i32, i32
  }
}

</mosaic_0001>

<llo_original>
// kernel: autoencoder_forward.5
$region0: #{autoencoder_forward.5}
  #allocation0 [shape = 'u32[]', space=smem, size = 0x4, offset = 0x4, fixed_abs, tag = 'smem constant byte address 0x4 - core index']
  #allocation1 [shape = 'u32[144,128]{1,0:T(1,128)}', space=vmem, size = 0x12000, scoped, tag = 'internal scratch']
  %s0 = inlined_call_operand.vmem [shape: bf16[200,36], index: 0, kind: input, shape index: {}]
  %s1 = inlined_call_operand.vmem [shape: bf16[36,16], index: 1, kind: input, shape index: {}]
  %s2 = inlined_call_operand.vmem [shape: f32[1,16], index: 2, kind: input, shape index: {}]
  %s3 = inlined_call_operand.vmem [shape: f32[50,16], index: 3, kind: output, shape index: {}]
  %s4 = sld [smem:[#allocation0]]
  $region22: #{autoencoder_forward.5} parent=0
    _
  %s6 = ssub.s32 1, %s4
  %s7 = scalar_select 0, %s6, %s4
  // Predicated region
  $region2: #{autoencoder_forward.5} parent=0 // pred_check
    _
  $region3: #{autoencoder_forward.5} parent=0 // pred_check_branch
    %9 = sbr.rel (0) target = $region5
  $region4: #{autoencoder_forward.5} parent=0 // pred_region
    _
  $region5: #{autoencoder_forward.5} parent=0 // pred_fallthru
    _
  // Predicated region
  $region6: #{autoencoder_forward.5} parent=0 // pred_check
    _
  $region7: #{autoencoder_forward.5} parent=0 // pred_check_branch
    %11 = sbr.rel (0) target = $region9
  $region8: #{autoencoder_forward.5} parent=0 // pred_region
    _
  $region9: #{autoencoder_forward.5} parent=0 // pred_fallthru
    _
  // Predicated region
  $region10: #{autoencoder_forward.5} parent=0 // pred_check
    _
  $region11: #{autoencoder_forward.5} parent=0 // pred_check_branch
    %13 = sbr.rel (0) target = $region13
  $region12: #{autoencoder_forward.5} parent=0 // pred_region
    _
  $region13: #{autoencoder_forward.5} parent=0 // pred_fallthru
    _
  %v15 = vld [vmem:[%s0] sm:$0xf]
  %v16 = vld [vmem:[%s0 + $0x4] sm:$0xf]
  %v17 = vld [vmem:[%s0 + $0x8] sm:$0xf]
  %v18 = vld [vmem:[%s0 + $0xc] sm:$0xf]
  %v19 = vld [vmem:[%s0 + $0x10] sm:$0xf]
  %v20 = vld [vmem:[%s0 + $0x14] sm:$0xf]
  %v21 = vld [vmem:[%s0 + $0x18] sm:$0xf]
  %v22 = vld [vmem:[%s0 + $0x1c] sm:$0xf]
  %v23 = vld [vmem:[%s0 + $0x20] sm:$0xf]
  %v24 = vld [vmem:[%s0 + $0x24] sm:$0xf]
  %v25 = vld [vmem:[%s0 + $0x28] sm:$0xf]
  %v26 = vld [vmem:[%s0 + $0x2c] sm:$0xf]
  %v27 = vld [vmem:[%s0 + $0x30] sm:$0xf]
  %v28 = vld [vmem:[%s0 + $0x34] sm:$0xf]
  %v29 = vld [vmem:[%s0 + $0x38] sm:$0xf]
  %v30 = vld [vmem:[%s0 + $0x3c] sm:$0xf]
  %v31 = vld [vmem:[%s0 + $0x40] sm:$0xf]
  %v32 = vld [vmem:[%s0 + $0x44] sm:$0xf]
  %v33 = vld [vmem:[%s0 + $0x48] sm:$0xf]
  %v34 = vld [vmem:[%s0 + $0x4c] sm:$0xf]
  %v35 = vld [vmem:[%s0 + $0x50] sm:$0xf]
  %v36 = vld [vmem:[%s0 + $0x54] sm:$0xf]
  %v37 = vld [vmem:[%s0 + $0x58] sm:$0xf]
  %v38 = vld [vmem:[%s0 + $0x5c] sm:$0xf]
  %v39 = vld [vmem:[%s0 + $0x60] sm:$0xf]
  %v40 = vld [vmem:[%s1] sm:$0xf]
  %v41 = vld [vmem:[%s1 + $0x4] sm:$0xf]
  %v42 = vld [vmem:[%s1 + $0x8] sm:$0xf]
  %v43 = vld [vmem:[%s1 + $0xc] sm:$0xf]
  %v44 = vld [vmem:[%s1 + $0x10] sm:$0x3]
  %v45 = vld [vmem:[%s2] sm:$0x1]
  %v47 = vlaneseq
  %v48 = vshrl.u32 %v47, 7
  %v49 = vsub.s32 0, %v48
  %v50 = vrot.slane %v45, %v49
  %v77 = vunpack.c.l.b16 %v15
  %v78 = vunpack.c.l.b16 %v16
  %v79 = vunpack.c.l.b16 %v17
  %v80 = vunpack.c.l.b16 %v18
  %v81 = vunpack.c.l.b16 %v19
  %v82 = vunpack.c.l.b16 %v20
  %v83 = vunpack.c.l.b16 %v21
  %v84 = vunpack.c.l.b16 %v22
  %v85 = vunpack.c.l.b16 %v23
  %v86 = vunpack.c.l.b16 %v24
  %v87 = vunpack.c.l.b16 %v25
  %v88 = vunpack.c.l.b16 %v26
  %v89 = vunpack.c.l.b16 %v27
  %v90 = vunpack.c.l.b16 %v28
  %v91 = vunpack.c.l.b16 %v29
  %v92 = vunpack.c.l.b16 %v30
  %v93 = vunpack.c.l.b16 %v31
  %v94 = vunpack.c.l.b16 %v32
  %v95 = vunpack.c.l.b16 %v33
  %v96 = vunpack.c.l.b16 %v34
  %v97 = vunpack.c.l.b16 %v35
  %v98 = vunpack.c.l.b16 %v36
  %v99 = vunpack.c.l.b16 %v37
  %v100 = vunpack.c.l.b16 %v38
  %v101 = vunpack.c.l.b16 %v39
  %v102 = vpack.c.b16 %v78, %v77
  %v103 = vpack.c.b16 %v80, %v79
  %v104 = vpack.c.b16 %v82, %v81
  %v105 = vpack.c.b16 %v84, %v83
  %v106 = vpack.c.b16 %v86, %v85
  %v107 = vpack.c.b16 %v88, %v87
  %v108 = vpack.c.b16 %v90, %v89
  %v109 = vpack.c.b16 %v92, %v91
  %v110 = vpack.c.b16 %v94, %v93
  %v111 = vpack.c.b16 %v96, %v95
  %v112 = vpack.c.b16 %v98, %v97
  %v113 = vpack.c.b16 %v100, %v99
  %v114 = vpack.c.b16 %v101, %v101
  %v120 = vunpack.c.l.b16 %v40
  %v121 = vunpack.c.l.b16 %v41
  %v122 = vunpack.c.l.b16 %v42
  %v123 = vunpack.c.l.b16 %v43
  %v124 = vunpack.c.l.b16 %v44
  %v125 = vpack.c.b16 %v121, %v120
  %v126 = vpack.c.b16 %v123, %v122
  %v127 = vpack.c.b16 %v124, %v124
  %vm130 = vcmask 293888
  %v132 = vsel %vm130, %v102, 0
  %v135 = vsel %vm130, %v103, 0
  %v138 = vsel %vm130, %v104, 0
  %v141 = vsel %vm130, %v105, 0
  %v144 = vsel %vm130, %v106, 0
  %v147 = vsel %vm130, %v107, 0
  %v150 = vsel %vm130, %v108, 0
  %v153 = vsel %vm130, %v109, 0
  %v156 = vsel %vm130, %v110, 0
  %v159 = vsel %vm130, %v111, 0
  %v162 = vsel %vm130, %v112, 0
  %v165 = vsel %vm130, %v113, 0
  %v168 = vsel %vm130, %v114, 0
  %vm170 = vcmask 1041408
  %v172 = vsel %vm170, %v127, 0
  %174 = vmatprep.subr.bf16.mxu0 0
  %175 = vmatpush1.bf16.msra.mxu0 %v125
  %176 = vmatprep.subr.bf16.mxu0 0
  %177 = vmatpush1.bf16.msra.mxu0 %v126
  %178 = vmatprep.subr.bf16.mxu0 0
  %179 = vmatpush1.bf16.msra.mxu0 %v172
  %180 = vmatprep.subr.bf16.mxu0 0
  %181 = vmatpush1.bf16.msra.mxu0 0
  %182 = vmatprep.subr.bf16.mxu0 0
  %183 = vmatpush1.bf16.msra.mxu0 0
  %184 = vmatprep.subr.bf16.mxu0 0
  %185 = vmatpush1.bf16.msra.mxu0 0
  %186 = vmatprep.subr.bf16.mxu0 0
  %187 = vmatpush1.bf16.msra.mxu0 0
  %188 = vmatprep.subr.bf16.mxu0 0
  %189 = vmatpush1.bf16.msra.mxu0 0
  %190 = vmatprep.subr.bf16.mxu0 0
  %191 = vmatpush1.bf16.msra.mxu0 0
  %192 = vmatprep.subr.bf16.mxu0 0
  %193 = vmatpush1.bf16.msra.mxu0 0
  %194 = vmatprep.subr.bf16.mxu0 0
  %195 = vmatpush1.bf16.msra.mxu0 0
  %196 = vmatprep.subr.bf16.mxu0 0
  %197 = vmatpush1.bf16.msra.mxu0 0
  %198 = vmatprep.subr.bf16.mxu0 0
  %199 = vmatpush1.bf16.msra.mxu0 0
  %200 = vmatprep.subr.bf16.mxu0 0
  %201 = vmatpush1.bf16.msra.mxu0 0
  %202 = vmatprep.subr.bf16.mxu0 0
  %203 = vmatpush1.bf16.msra.mxu0 0
  %204 = vmatprep.subr.bf16.mxu0 0
  %205 = vmatpush1.bf16.msra.mxu0 0
  %206 = vmatprep.mubr.bf16.mxu0 0
  %207 = vmatmul.mubr.bf16.gmra.mrb[0].mxu0 %v132
  %v208 = vpop.f32.mrb[0].mxu0
  %v209 = vadd.f32 %v50, %v208
  %v210 = vpop.f32.mrb[0].mxu0
  %v211 = vpop.f32.mrb[0].mxu0
  %v212 = vadd.f32 %v50, %v211
  %v213 = vpop.f32.mrb[0].mxu0
  %214 = vmatprep.mubr.bf16.mxu0 0
  %215 = vmatmul.mubr.bf16.gmra.mrb[0].mxu0 %v135
  %v216 = vpop.f32.mrb[0].mxu0
  %v217 = vadd.f32 %v50, %v216
  %v218 = vpop.f32.mrb[0].mxu0
  %v219 = vpop.f32.mrb[0].mxu0
  %v220 = vadd.f32 %v50, %v219
  %v221 = vpop.f32.mrb[0].mxu0
  %222 = vmatprep.mubr.bf16.mxu0 0
  %223 = vmatmul.mubr.bf16.gmra.mrb[0].mxu0 %v138
  %v224 = vpop.f32.mrb[0].mxu0
  %v225 = vadd.f32 %v50, %v224
  %v226 = vpop.f32.mrb[0].mxu0
  %v227 = vpop.f32.mrb[0].mxu0
  %v228 = vadd.f32 %v50, %v227
  %v229 = vpop.f32.mrb[0].mxu0
  %230 = vmatprep.mubr.bf16.mxu0 0
  %231 = vmatmul.mubr.bf16.gmra.mrb[0].mxu0 %v141
  %v232 = vpop.f32.mrb[0].mxu0
  %v233 = vadd.f32 %v50, %v232
  %v234 = vpop.f32.mrb[0].mxu0
  %v235 = vpop.f32.mrb[0].mxu0
  %v236 = vadd.f32 %v50, %v235
  %v237 = vpop.f32.mrb[0].mxu0
  %238 = vmatprep.mubr.bf16.mxu0 0
  %239 = vmatmul.mubr.bf16.gmra.mrb[0].mxu0 %v144
  %v240 = vpop.f32.mrb[0].mxu0
  %v241 = vadd.f32 %v50, %v240
  %v242 = vpop.f32.mrb[0].mxu0
  %v243 = vpop.f32.mrb[0].mxu0
  %v244 = vadd.f32 %v50, %v243
  %v245 = vpop.f32.mrb[0].mxu0
  %246 = vmatprep.mubr.bf16.mxu0 0
  %247 = vmatmul.mubr.bf16.gmra.mrb[0].mxu0 %v147
  %v248 = vpop.f32.mrb[0].mxu0
  %v249 = vadd.f32 %v50, %v248
  %v250 = vpop.f32.mrb[0].mxu0
  %v251 = vpop.f32.mrb[0].mxu0
  %v252 = vadd.f32 %v50, %v251
  %v253 = vpop.f32.mrb[0].mxu0
  %254 = vmatprep.mubr.bf16.mxu0 0
  %255 = vmatmul.mubr.bf16.gmra.mrb[0].mxu0 %v150
  %v256 = vpop.f32.mrb[0].mxu0
  %v257 = vadd.f32 %v50, %v256
  %v258 = vpop.f32.mrb[0].mxu0
  %v259 = vpop.f32.mrb[0].mxu0
  %v260 = vadd.f32 %v50, %v259
  %v261 = vpop.f32.mrb[0].mxu0
  %262 = vmatprep.mubr.bf16.mxu0 0
  %263 = vmatmul.mubr.bf16.gmra.mrb[0].mxu0 %v153
  %v264 = vpop.f32.mrb[0].mxu0
  %v265 = vadd.f32 %v50, %v264
  %v266 = vpop.f32.mrb[0].mxu0
  %v267 = vpop.f32.mrb[0].mxu0
  %v268 = vadd.f32 %v50, %v267
  %v269 = vpop.f32.mrb[0].mxu0
  %270 = vmatprep.mubr.bf16.mxu0 0
  %271 = vmatmul.mubr.bf16.gmra.mrb[0].mxu0 %v156
  %v272 = vpop.f32.mrb[0].mxu0
  %v273 = vadd.f32 %v50, %v272
  %v274 = vpop.f32.mrb[0].mxu0
  %v275 = vpop.f32.mrb[0].mxu0
  %v276 = vadd.f32 %v50, %v275
  %v277 = vpop.f32.mrb[0].mxu0
  %278 = vmatprep.mubr.bf16.mxu0 0
  %279 = vmatmul.mubr.bf16.gmra.mrb[0].mxu0 %v159
  %v280 = vpop.f32.mrb[0].mxu0
  %v281 = vadd.f32 %v50, %v280
  %v282 = vpop.f32.mrb[0].mxu0
  %v283 = vpop.f32.mrb[0].mxu0
  %v284 = vadd.f32 %v50, %v283
  %v285 = vpop.f32.mrb[0].mxu0
  %286 = vmatprep.mubr.bf16.mxu0 0
  %287 = vmatmul.mubr.bf16.gmra.mrb[0].mxu0 %v162
  %v288 = vpop.f32.mrb[0].mxu0
  %v289 = vadd.f32 %v50, %v288
  %v290 = vpop.f32.mrb[0].mxu0
  %v291 = vpop.f32.mrb[0].mxu0
  %v292 = vadd.f32 %v50, %v291
  %v293 = vpop.f32.mrb[0].mxu0
  %294 = vmatprep.mubr.bf16.mxu0 0
  %295 = vmatmul.mubr.bf16.gmra.mrb[0].mxu0 %v165
  %v296 = vpop.f32.mrb[0].mxu0
  %v297 = vadd.f32 %v50, %v296
  %v298 = vpop.f32.mrb[0].mxu0
  %v299 = vpop.f32.mrb[0].mxu0
  %v300 = vadd.f32 %v50, %v299
  %v301 = vpop.f32.mrb[0].mxu0
  %302 = vmatprep.mubr.bf16.mxu0 0
  %303 = vmatmul.mubr.bf16.gmra.mrb[0].mxu0 %v168
  %v304 = vpop.f32.mrb[0].mxu0
  %v305 = vadd.f32 %v50, %v304
  %v306 = vpop.f32.mrb[0].mxu0
  %v307 = vpop.f32.mrb[0].mxu0
  %v308 = vpop.f32.mrb[0].mxu0
  %309 = vdwg.mxu0
  %v310 = vmax.f32 %v209, 0.0
  %v311 = vmax.f32 %v212, 0.0
  %v312 = vmax.f32 %v217, 0.0
  %v313 = vmax.f32 %v220, 0.0
  %v314 = vmax.f32 %v225, 0.0
  %v315 = vmax.f32 %v228, 0.0
  %v316 = vmax.f32 %v233, 0.0
  %v317 = vmax.f32 %v236, 0.0
  %v318 = vmax.f32 %v241, 0.0
  %v319 = vmax.f32 %v244, 0.0
  %v320 = vmax.f32 %v249, 0.0
  %v321 = vmax.f32 %v252, 0.0
  %v322 = vmax.f32 %v257, 0.0
  %v323 = vmax.f32 %v260, 0.0
  %v324 = vmax.f32 %v265, 0.0
  %v325 = vmax.f32 %v268, 0.0
  %v326 = vmax.f32 %v273, 0.0
  %v327 = vmax.f32 %v276, 0.0
  %v328 = vmax.f32 %v281, 0.0
  %v329 = vmax.f32 %v284, 0.0
  %v330 = vmax.f32 %v289, 0.0
  %v331 = vmax.f32 %v292, 0.0
  %v332 = vmax.f32 %v297, 0.0
  %v333 = vmax.f32 %v300, 0.0
  %v334 = vmax.f32 %v305, 0.0
  %vm342 = vcmask 1045504
  %v343 = vrot.slane %v316, 2
  %v344 = vrot.slane %v317, 2
  %v345 = vsel %vm342, %v343, %v344
  %v346 = vrot.slane %v318, 2
  %v347 = vsel %vm342, %v344, %v346
  %v348 = vrot.slane %v319, 2
  %v349 = vsel %vm342, %v346, %v348
  %v350 = vrot.slane %v320, 2
  %v351 = vsel %vm342, %v348, %v350
  %v352 = vrot.slane %v321, 2
  %v353 = vsel %vm342, %v350, %v352
  %v354 = vrot.slane %v322, 2
  %v355 = vsel %vm342, %v352, %v354
  %v363 = vmax.f32 %v310, %v345
  %v364 = vmax.f32 %v311, %v347
  %v365 = vmax.f32 %v312, %v349
  %v366 = vmax.f32 %v313, %v351
  %v367 = vmax.f32 %v314, %v353
  %v368 = vmax.f32 %v315, %v355
  %v369 = vmax.f32 %v316, %v354
  %vm376 = vcmask 1043456
  %v377 = vrot.slane %v322, 4
  %v378 = vrot.slane %v323, 4
  %v379 = vsel %vm376, %v377, %v378
  %v380 = vrot.slane %v324, 4
  %v381 = vsel %vm376, %v378, %v380
  %v382 = vrot.slane %v325, 4
  %v383 = vsel %vm376, %v380, %v382
  %v384 = vrot.slane %v326, 4
  %v385 = vsel %vm376, %v382, %v384
  %v386 = vrot.slane %v327, 4
  %v387 = vsel %vm376, %v384, %v386
  %v388 = vrot.slane %v328, 4
  %v389 = vsel %vm376, %v386, %v388
  %v397 = vmax.f32 %v363, %v379
  %v398 = vmax.f32 %v364, %v381
  %v399 = vmax.f32 %v365, %v383
  %v400 = vmax.f32 %v366, %v385
  %v401 = vmax.f32 %v367, %v387
  %v402 = vmax.f32 %v368, %v389
  %v403 = vmax.f32 %v369, %v388
  %v410 = vrot.slane %v328, 6
  %v411 = vrot.slane %v329, 6
  %v412 = vsel %vm170, %v410, %v411
  %v413 = vrot.slane %v330, 6
  %v414 = vsel %vm170, %v411, %v413
  %v415 = vrot.slane %v331, 6
  %v416 = vsel %vm170, %v413, %v415
  %v417 = vrot.slane %v332, 6
  %v418 = vsel %vm170, %v415, %v417
  %v419 = vrot.slane %v333, 6
  %v420 = vsel %vm170, %v417, %v419
  %v421 = vrot.slane %v334, 6
  %v422 = vsel %vm170, %v419, %v421
  %v430 = vmax.f32 %v397, %v412
  %v431 = vmax.f32 %v398, %v414
  %v432 = vmax.f32 %v399, %v416
  %v433 = vmax.f32 %v400, %v418
  %v434 = vmax.f32 %v401, %v420
  %v435 = vmax.f32 %v402, %v422
  %v436 = vmax.f32 %v403, %v421
  %vm437 = vcmask 130048
  %438 = vst.msk [vmem:[%s3] sm:$0xff] %vm437, %v430
  %439 = vst.msk [vmem:[%s3 + $0x8] sm:$0xff] %vm437, %v431
  %440 = vst.msk [vmem:[%s3 + $0x10] sm:$0xff] %vm437, %v432
  %441 = vst.msk [vmem:[%s3 + $0x18] sm:$0xff] %vm437, %v433
  %442 = vst.msk [vmem:[%s3 + $0x20] sm:$0xff] %vm437, %v434
  %443 = vst.msk [vmem:[%s3 + $0x28] sm:$0xff] %vm437, %v435
  %vm444 = vcmask 123904
  %445 = vst.msk [vmem:[%s3 + $0x30] sm:$0x3] %vm444, %v436
  // Predicated region
  $region14: #{autoencoder_forward.5} parent=0 // pred_check
    _
  $region15: #{autoencoder_forward.5} parent=0 // pred_check_branch
    %447 = sbr.rel (0) target = $region17
  $region16: #{autoencoder_forward.5} parent=0 // pred_region
    _
  $region17: #{autoencoder_forward.5} parent=0 // pred_fallthru
    _
  // Predicated region
  $region18: #{autoencoder_forward.5} parent=0 // pred_check
    _
  $region19: #{autoencoder_forward.5} parent=0 // pred_check_branch
    %449 = sbr.rel (0) target = $region21
  $region20: #{autoencoder_forward.5} parent=0 // pred_region
    _
  $region21: #{autoencoder_forward.5} parent=0 // pred_fallthru
    _

// kernel: autoencoder_forward.6
$region0: #{autoencoder_forward.6}
  #allocation0 [shape = 'u32[]', space=smem, size = 0x4, offset = 0x4, fixed_abs, tag = 'smem constant byte address 0x4 - core index']
  #allocation1 [shape = 'u32[144,128]{1,0:T(1,128)}', space=vmem, size = 0x12000, scoped, tag = 'internal scratch']
  %s0 = inlined_call_operand.vmem [shape: bf16[32,144], index: 0, kind: input, shape index: {}]
  %s1 = inlined_call_operand.vmem [shape: bf16[144,8], index: 1, kind: input, shape index: {}]
  %s2 = inlined_call_operand.vmem [shape: f32[1,8], index: 2, kind: input, shape index: {}]
  %s3 = inlined_call_operand.vmem [shape: f32[8,8], index: 3, kind: output, shape index: {}]
  %s4 = sld [smem:[#allocation0]]
  $region22: #{autoencoder_forward.6} parent=0
    _
  %s6 = ssub.s32 1, %s4
  %s7 = scalar_select 0, %s6, %s4
  // Predicated region
  $region2: #{autoencoder_forward.6} parent=0 // pred_check
    _
  $region3: #{autoencoder_forward.6} parent=0 // pred_check_branch
    %9 = sbr.rel (0) target = $region5
  $region4: #{autoencoder_forward.6} parent=0 // pred_region
    _
  $region5: #{autoencoder_forward.6} parent=0 // pred_fallthru
    _
  // Predicated region
  $region6: #{autoencoder_forward.6} parent=0 // pred_check
    _
  $region7: #{autoencoder_forward.6} parent=0 // pred_check_branch
    %11 = sbr.rel (0) target = $region9
  $region8: #{autoencoder_forward.6} parent=0 // pred_region
    _
  $region9: #{autoencoder_forward.6} parent=0 // pred_fallthru
    _
  // Predicated region
  $region10: #{autoencoder_forward.6} parent=0 // pred_check
    _
  $region11: #{autoencoder_forward.6} parent=0 // pred_check_branch
    %13 = sbr.rel (0) target = $region13
  $region12: #{autoencoder_forward.6} parent=0 // pred_region
    _
  $region13: #{autoencoder_forward.6} parent=0 // pred_fallthru
    _
  %v15 = vld [vmem:[%s0] sm:$0xff]
  %v16 = vld [vmem:[%s0 + $0x8] sm:$0xff]
  %v17 = vld [vmem:[%s0 + $0x10] sm:$0xff]
  %v18 = vld [vmem:[%s0 + $0x18] sm:$0xff]
  %v19 = vld [vmem:[%s1] sm:$0xf]
  %v20 = vld [vmem:[%s1 + $0x4] sm:$0xf]
  %v21 = vld [vmem:[%s1 + $0x8] sm:$0xf]
  %v22 = vld [vmem:[%s1 + $0xc] sm:$0xf]
  %v23 = vld [vmem:[%s1 + $0x10] sm:$0xf]
  %v24 = vld [vmem:[%s1 + $0x14] sm:$0xf]
  %v25 = vld [vmem:[%s1 + $0x18] sm:$0xf]
  %v26 = vld [vmem:[%s1 + $0x1c] sm:$0xf]
  %v27 = vld [vmem:[%s1 + $0x20] sm:$0xf]
  %v28 = vld [vmem:[%s1 + $0x24] sm:$0xf]
  %v29 = vld [vmem:[%s1 + $0x28] sm:$0xf]
  %v30 = vld [vmem:[%s1 + $0x2c] sm:$0xf]
  %v31 = vld [vmem:[%s1 + $0x30] sm:$0xf]
  %v32 = vld [vmem:[%s1 + $0x34] sm:$0xf]
  %v33 = vld [vmem:[%s1 + $0x38] sm:$0xf]
  %v34 = vld [vmem:[%s1 + $0x3c] sm:$0xf]
  %v35 = vld [vmem:[%s1 + $0x40] sm:$0xf]
  %v36 = vld [vmem:[%s1 + $0x44] sm:$0xf]
  %v37 = vld [vmem:[%s2] sm:$0x1]
  %v39 = vlaneseq
  %v40 = vshrl.u32 %v39, 7
  %v41 = vsub.s32 0, %v40
  %v42 = vrot.slane %v37, %v41
  %v48 = vunpack.c.l.b16 %v15
  %v49 = vunpack.c.h.b16 %v15
  %v50 = vunpack.c.l.b16 %v16
  %v51 = vunpack.c.h.b16 %v16
  %v52 = vunpack.c.l.b16 %v17
  %v53 = vunpack.c.h.b16 %v17
  %v54 = vunpack.c.l.b16 %v18
  %v55 = vunpack.c.h.b16 %v18
  %v56 = vpack.c.b16 %v50, %v48
  %v57 = vpack.c.b16 %v51, %v49
  %v58 = vpack.c.b16 %v54, %v52
  %v59 = vpack.c.b16 %v55, %v53
  %v80 = vunpack.c.l.b16 %v19
  %v81 = vunpack.c.l.b16 %v20
  %v82 = vunpack.c.l.b16 %v21
  %v83 = vunpack.c.l.b16 %v22
  %v84 = vunpack.c.l.b16 %v23
  %v85 = vunpack.c.l.b16 %v24
  %v86 = vunpack.c.l.b16 %v25
  %v87 = vunpack.c.l.b16 %v26
  %v88 = vunpack.c.l.b16 %v27
  %v89 = vunpack.c.l.b16 %v28
  %v90 = vunpack.c.l.b16 %v29
  %v91 = vunpack.c.l.b16 %v30
  %v92 = vunpack.c.l.b16 %v31
  %v93 = vunpack.c.l.b16 %v32
  %v94 = vunpack.c.l.b16 %v33
  %v95 = vunpack.c.l.b16 %v34
  %v96 = vunpack.c.l.b16 %v35
  %v97 = vunpack.c.l.b16 %v36
  %v98 = vpack.c.b16 %v81, %v80
  %v99 = vpack.c.b16 %v83, %v82
  %v100 = vpack.c.b16 %v85, %v84
  %v101 = vpack.c.b16 %v87, %v86
  %v102 = vpack.c.b16 %v89, %v88
  %v103 = vpack.c.b16 %v91, %v90
  %v104 = vpack.c.b16 %v93, %v92
  %v105 = vpack.c.b16 %v95, %v94
  %v106 = vpack.c.b16 %v97, %v96
  %vm116 = vcmask 130048
  %v118 = vsel %vm116, %v57, 0
  %v121 = vsel %vm116, %v59, 0
  %123 = vmatprep.subr.bf16.mxu0 0
  %124 = vmatpush1.bf16.msra.mxu0 %v98
  %125 = vmatprep.subr.bf16.mxu0 0
  %126 = vmatpush1.bf16.msra.mxu0 %v99
  %127 = vmatprep.subr.bf16.mxu0 0
  %128 = vmatpush1.bf16.msra.mxu0 %v100
  %129 = vmatprep.subr.bf16.mxu0 0
  %130 = vmatpush1.bf16.msra.mxu0 %v101
  %131 = vmatprep.subr.bf16.mxu0 0
  %132 = vmatpush1.bf16.msra.mxu0 %v102
  %133 = vmatprep.subr.bf16.mxu0 0
  %134 = vmatpush1.bf16.msra.mxu0 %v103
  %135 = vmatprep.subr.bf16.mxu0 0
  %136 = vmatpush1.bf16.msra.mxu0 %v104
  %137 = vmatprep.subr.bf16.mxu0 0
  %138 = vmatpush1.bf16.msra.mxu0 %v105
  %139 = vmatprep.subr.bf16.mxu0 0
  %140 = vmatpush1.bf16.msra.mxu0 %v106
  %141 = vmatprep.subr.bf16.mxu0 0
  %142 = vmatpush1.bf16.msra.mxu0 0
  %143 = vmatprep.subr.bf16.mxu0 0
  %144 = vmatpush1.bf16.msra.mxu0 0
  %145 = vmatprep.subr.bf16.mxu0 0
  %146 = vmatpush1.bf16.msra.mxu0 0
  %147 = vmatprep.subr.bf16.mxu0 0
  %148 = vmatpush1.bf16.msra.mxu0 0
  %149 = vmatprep.subr.bf16.mxu0 0
  %150 = vmatpush1.bf16.msra.mxu0 0
  %151 = vmatprep.subr.bf16.mxu0 0
  %152 = vmatpush1.bf16.msra.mxu0 0
  %153 = vmatprep.subr.bf16.mxu0 0
  %154 = vmatpush1.bf16.msra.mxu0 0
  %155 = vmatprep.mubr.bf16.mxu0 %v118
  %156 = vmatmul.mubr.bf16.gmra.mrb[0].mxu0 %v56
  %v157 = vpop.f32.mrb[0].mxu0
  %v158 = vadd.f32 %v42, %v157
  %v159 = vpop.f32.mrb[0].mxu0
  %v160 = vpop.f32.mrb[0].mxu0
  %v161 = vadd.f32 %v42, %v160
  %v162 = vpop.f32.mrb[0].mxu0
  %163 = vmatprep.mubr.bf16.mxu0 %v121
  %164 = vmatmul.mubr.bf16.gmra.mrb[0].mxu0 %v58
  %v165 = vpop.f32.mrb[0].mxu0
  %v166 = vadd.f32 %v42, %v165
  %v167 = vpop.f32.mrb[0].mxu0
  %v168 = vpop.f32.mrb[0].mxu0
  %v169 = vadd.f32 %v42, %v168
  %v170 = vpop.f32.mrb[0].mxu0
  %171 = vdwg.mxu0
  %v172 = vmax.f32 %v158, 0.0
  %v173 = vmax.f32 %v161, 0.0
  %v174 = vmax.f32 %v166, 0.0
  %v175 = vmax.f32 %v169, 0.0
  %v176 = vmax.f32 %v172, %v173
  %v177 = vmax.f32 %v176, %v174
  %v178 = vmax.f32 %v177, %v175
  %vm179 = vcmask 64512
  %180 = vst.msk [vmem:[%s3] sm:$0xff] %vm179, %v178
  // Predicated region
  $region14: #{autoencoder_forward.6} parent=0 // pred_check
    _
  $region15: #{autoencoder_forward.6} parent=0 // pred_check_branch
    %182 = sbr.rel (0) target = $region17
  $region16: #{autoencoder_forward.6} parent=0 // pred_region
    _
  $region17: #{autoencoder_forward.6} parent=0 // pred_fallthru
    _
  // Predicated region
  $region18: #{autoencoder_forward.6} parent=0 // pred_check
    _
  $region19: #{autoencoder_forward.6} parent=0 // pred_check_branch
    %184 = sbr.rel (0) target = $region21
  $region20: #{autoencoder_forward.6} parent=0 // pred_region
    _
  $region21: #{autoencoder_forward.6} parent=0 // pred_fallthru
    _

// kernel: autoencoder_forward.7
$region0: #{autoencoder_forward.7}
  #allocation0 [shape = 'u32[]', space=smem, size = 0x4, offset = 0x4, fixed_abs, tag = 'smem constant byte address 0x4 - core index']
  #allocation1 [shape = 'u32[144,128]{1,0:T(1,128)}', space=vmem, size = 0x12000, scoped, tag = 'internal scratch']
  %s0 = inlined_call_operand.vmem [shape: bf16[50,72], index: 0, kind: input, shape index: {}]
  %s1 = inlined_call_operand.vmem [shape: bf16[72,16], index: 1, kind: input, shape index: {}]
  %s2 = inlined_call_operand.vmem [shape: f32[1,16], index: 2, kind: input, shape index: {}]
  %s3 = inlined_call_operand.vmem [shape: f32[50,16], index: 3, kind: output, shape index: {}]
  %s4 = sld [smem:[#allocation0]]
  $region22: #{autoencoder_forward.7} parent=0
    _
  %s6 = ssub.s32 1, %s4
  %s7 = scalar_select 0, %s6, %s4
  // Predicated region
  $region2: #{autoencoder_forward.7} parent=0 // pred_check
    _
  $region3: #{autoencoder_forward.7} parent=0 // pred_check_branch
    %9 = sbr.rel (0) target = $region5
  $region4: #{autoencoder_forward.7} parent=0 // pred_region
    _
  $region5: #{autoencoder_forward.7} parent=0 // pred_fallthru
    _
  // Predicated region
  $region6: #{autoencoder_forward.7} parent=0 // pred_check
    _
  $region7: #{autoencoder_forward.7} parent=0 // pred_check_branch
    %11 = sbr.rel (0) target = $region9
  $region8: #{autoencoder_forward.7} parent=0 // pred_region
    _
  $region9: #{autoencoder_forward.7} parent=0 // pred_fallthru
    _
  // Predicated region
  $region10: #{autoencoder_forward.7} parent=0 // pred_check
    _
  $region11: #{autoencoder_forward.7} parent=0 // pred_check_branch
    %13 = sbr.rel (0) target = $region13
  $region12: #{autoencoder_forward.7} parent=0 // pred_region
    _
  $region13: #{autoencoder_forward.7} parent=0 // pred_fallthru
    _
  %v15 = vld [vmem:[%s0] sm:$0xf]
  %v16 = vld [vmem:[%s0 + $0x4] sm:$0xf]
  %v17 = vld [vmem:[%s0 + $0x8] sm:$0xf]
  %v18 = vld [vmem:[%s0 + $0xc] sm:$0xf]
  %v19 = vld [vmem:[%s0 + $0x10] sm:$0xf]
  %v20 = vld [vmem:[%s0 + $0x14] sm:$0xf]
  %v21 = vld [vmem:[%s0 + $0x18] sm:$0x1]
  %v22 = vld [vmem:[%s1] sm:$0xf]
  %v23 = vld [vmem:[%s1 + $0x4] sm:$0xf]
  %v24 = vld [vmem:[%s1 + $0x8] sm:$0xf]
  %v25 = vld [vmem:[%s1 + $0xc] sm:$0xf]
  %v26 = vld [vmem:[%s1 + $0x10] sm:$0xf]
  %v27 = vld [vmem:[%s1 + $0x14] sm:$0xf]
  %v28 = vld [vmem:[%s1 + $0x18] sm:$0xf]
  %v29 = vld [vmem:[%s1 + $0x1c] sm:$0xf]
  %v30 = vld [vmem:[%s1 + $0x20] sm:$0xf]
  %v31 = vld [vmem:[%s2] sm:$0x1]
  %v33 = vlaneseq
  %v34 = vshrl.u32 %v33, 7
  %v35 = vsub.s32 0, %v34
  %v36 = vrot.slane %v31, %v35
  %v45 = vunpack.c.l.b16 %v15
  %v46 = vunpack.c.l.b16 %v16
  %v47 = vunpack.c.l.b16 %v17
  %v48 = vunpack.c.l.b16 %v18
  %v49 = vunpack.c.l.b16 %v19
  %v50 = vunpack.c.l.b16 %v20
  %v51 = vunpack.c.l.b16 %v21
  %v52 = vpack.c.b16 %v46, %v45
  %v53 = vpack.c.b16 %v48, %v47
  %v54 = vpack.c.b16 %v50, %v49
  %v55 = vpack.c.b16 %v51, %v51
  %v65 = vunpack.c.l.b16 %v22
  %v66 = vunpack.c.l.b16 %v23
  %v67 = vunpack.c.l.b16 %v24
  %v68 = vunpack.c.l.b16 %v25
  %v69 = vunpack.c.l.b16 %v26
  %v70 = vunpack.c.l.b16 %v27
  %v71 = vunpack.c.l.b16 %v28
  %v72 = vunpack.c.l.b16 %v29
  %v73 = vunpack.c.l.b16 %v30
  %v74 = vpack.c.b16 %v66, %v65
  %v75 = vpack.c.b16 %v68, %v67
  %v76 = vpack.c.b16 %v70, %v69
  %v77 = vpack.c.b16 %v72, %v71
  %v78 = vpack.c.b16 %v73, %v73
  %vm83 = vcmask 588800
  %v85 = vsel %vm83, %v52, 0
  %v88 = vsel %vm83, %v53, 0
  %v91 = vsel %vm83, %v54, 0
  %v94 = vsel %vm83, %v55, 0
  %vm96 = vcmask 1043456
  %v98 = vsel %vm96, %v78, 0
  %100 = vmatprep.subr.bf16.mxu0 0
  %101 = vmatpush1.bf16.msra.mxu0 %v74
  %102 = vmatprep.subr.bf16.mxu0 0
  %103 = vmatpush1.bf16.msra.mxu0 %v75
  %104 = vmatprep.subr.bf16.mxu0 0
  %105 = vmatpush1.bf16.msra.mxu0 %v76
  %106 = vmatprep.subr.bf16.mxu0 0
  %107 = vmatpush1.bf16.msra.mxu0 %v77
  %108 = vmatprep.subr.bf16.mxu0 0
  %109 = vmatpush1.bf16.msra.mxu0 %v98
  %110 = vmatprep.subr.bf16.mxu0 0
  %111 = vmatpush1.bf16.msra.mxu0 0
  %112 = vmatprep.subr.bf16.mxu0 0
  %113 = vmatpush1.bf16.msra.mxu0 0
  %114 = vmatprep.subr.bf16.mxu0 0
  %115 = vmatpush1.bf16.msra.mxu0 0
  %116 = vmatprep.subr.bf16.mxu0 0
  %117 = vmatpush1.bf16.msra.mxu0 0
  %118 = vmatprep.subr.bf16.mxu0 0
  %119 = vmatpush1.bf16.msra.mxu0 0
  %120 = vmatprep.subr.bf16.mxu0 0
  %121 = vmatpush1.bf16.msra.mxu0 0
  %122 = vmatprep.subr.bf16.mxu0 0
  %123 = vmatpush1.bf16.msra.mxu0 0
  %124 = vmatprep.subr.bf16.mxu0 0
  %125 = vmatpush1.bf16.msra.mxu0 0
  %126 = vmatprep.subr.bf16.mxu0 0
  %127 = vmatpush1.bf16.msra.mxu0 0
  %128 = vmatprep.subr.bf16.mxu0 0
  %129 = vmatpush1.bf16.msra.mxu0 0
  %130 = vmatprep.subr.bf16.mxu0 0
  %131 = vmatpush1.bf16.msra.mxu0 0
  %132 = vmatprep.mubr.bf16.mxu0 0
  %133 = vmatmul.mubr.bf16.gmra.mrb[0].mxu0 %v85
  %v134 = vpop.f32.mrb[0].mxu0
  %v135 = vadd.f32 %v36, %v134
  %v136 = vpop.f32.mrb[0].mxu0
  %v137 = vpop.f32.mrb[0].mxu0
  %v138 = vadd.f32 %v36, %v137
  %v139 = vpop.f32.mrb[0].mxu0
  %140 = vmatprep.mubr.bf16.mxu0 0
  %141 = vmatmul.mubr.bf16.gmra.mrb[0].mxu0 %v88
  %v142 = vpop.f32.mrb[0].mxu0
  %v143 = vadd.f32 %v36, %v142
  %v144 = vpop.f32.mrb[0].mxu0
  %v145 = vpop.f32.mrb[0].mxu0
  %v146 = vadd.f32 %v36, %v145
  %v147 = vpop.f32.mrb[0].mxu0
  %148 = vmatprep.mubr.bf16.mxu0 0
  %149 = vmatmul.mubr.bf16.gmra.mrb[0].mxu0 %v91
  %v150 = vpop.f32.mrb[0].mxu0
  %v151 = vadd.f32 %v36, %v150
  %v152 = vpop.f32.mrb[0].mxu0
  %v153 = vpop.f32.mrb[0].mxu0
  %v154 = vadd.f32 %v36, %v153
  %v155 = vpop.f32.mrb[0].mxu0
  %156 = vmatprep.mubr.bf16.mxu0 0
  %157 = vmatmul.mubr.bf16.gmra.mrb[0].mxu0 %v94
  %v158 = vpop.f32.mrb[0].mxu0
  %v159 = vadd.f32 %v36, %v158
  %v160 = vpop.f32.mrb[0].mxu0
  %v161 = vpop.f32.mrb[0].mxu0
  %v162 = vpop.f32.mrb[0].mxu0
  %163 = vdwg.mxu0
  %v164 = vmax.f32 %v135, 0.0
  %v165 = vmax.f32 %v138, 0.0
  %v166 = vmax.f32 %v143, 0.0
  %v167 = vmax.f32 %v146, 0.0
  %v168 = vmax.f32 %v151, 0.0
  %v169 = vmax.f32 %v154, 0.0
  %v170 = vmax.f32 %v159, 0.0
  %vm171 = vcmask 130048
  %172 = vst.msk [vmem:[%s3] sm:$0xff] %vm171, %v164
  %173 = vst.msk [vmem:[%s3 + $0x8] sm:$0xff] %vm171, %v165
  %174 = vst.msk [vmem:[%s3 + $0x10] sm:$0xff] %vm171, %v166
  %175 = vst.msk [vmem:[%s3 + $0x18] sm:$0xff] %vm171, %v167
  %176 = vst.msk [vmem:[%s3 + $0x20] sm:$0xff] %vm171, %v168
  %177 = vst.msk [vmem:[%s3 + $0x28] sm:$0xff] %vm171, %v169
  %vm178 = vcmask 123904
  %179 = vst.msk [vmem:[%s3 + $0x30] sm:$0x3] %vm178, %v170
  // Predicated region
  $region14: #{autoencoder_forward.7} parent=0 // pred_check
    _
  $region15: #{autoencoder_forward.7} parent=0 // pred_check_branch
    %181 = sbr.rel (0) target = $region17
  $region16: #{autoencoder_forward.7} parent=0 // pred_region
    _
  $region17: #{autoencoder_forward.7} parent=0 // pred_fallthru
    _
  // Predicated region
  $region18: #{autoencoder_forward.7} parent=0 // pred_check
    _
  $region19: #{autoencoder_forward.7} parent=0 // pred_check_branch
    %183 = sbr.rel (0) target = $region21
  $region20: #{autoencoder_forward.7} parent=0 // pred_region
    _
  $region21: #{autoencoder_forward.7} parent=0 // pred_fallthru
    _

// kernel: autoencoder_forward.8
$region0: #{autoencoder_forward.8}
  #allocation0 [shape = 'u32[]', space=smem, size = 0x4, offset = 0x4, fixed_abs, tag = 'smem constant byte address 0x4 - core index']
  #allocation1 [shape = 'u32[144,128]{1,0:T(1,128)}', space=vmem, size = 0x12000, scoped, tag = 'internal scratch']
  %s0 = inlined_call_operand.vmem [shape: bf16[450,400], index: 0, kind: input, shape index: {}]
  %s1 = inlined_call_operand.vmem [shape: bf16[400,8], index: 1, kind: input, shape index: {}]
  %s2 = inlined_call_operand.vmem [shape: f32[1,8], index: 2, kind: input, shape index: {}]
  %s3 = inlined_call_operand.vmem [shape: f32[450,8], index: 3, kind: output, shape index: {}]
  %s4 = sld [smem:[#allocation0]]
  $region22: #{autoencoder_forward.8} parent=0
    _
  %s6 = ssub.s32 1, %s4
  %s7 = scalar_select 0, %s6, %s4
  // Predicated region
  $region2: #{autoencoder_forward.8} parent=0 // pred_check
    _
  $region3: #{autoencoder_forward.8} parent=0 // pred_check_branch
    %9 = sbr.rel (0) target = $region5
  $region4: #{autoencoder_forward.8} parent=0 // pred_region
    _
  $region5: #{autoencoder_forward.8} parent=0 // pred_fallthru
    _
  // Predicated region
  $region6: #{autoencoder_forward.8} parent=0 // pred_check
    _
  $region7: #{autoencoder_forward.8} parent=0 // pred_check_branch
    %11 = sbr.rel (0) target = $region9
  $region8: #{autoencoder_forward.8} parent=0 // pred_region
    _
  $region9: #{autoencoder_forward.8} parent=0 // pred_fallthru
    _
  // Predicated region
  $region10: #{autoencoder_forward.8} parent=0 // pred_check
    _
  $region11: #{autoencoder_forward.8} parent=0 // pred_check_branch
    %13 = sbr.rel (0) target = $region13
  $region12: #{autoencoder_forward.8} parent=0 // pred_region
    _
  $region13: #{autoencoder_forward.8} parent=0 // pred_fallthru
    _
  %v15 = vld [vmem:[%s0] sm:$0xff]
  %v16 = vld [vmem:[%s0 + $0x8] sm:$0xff]
  %v17 = vld [vmem:[%s0 + $0x10] sm:$0xff]
  %v18 = vld [vmem:[%s0 + $0x18] sm:$0xff]
  %v19 = vld [vmem:[%s0 + $0x20] sm:$0xff]
  %v20 = vld [vmem:[%s0 + $0x28] sm:$0xff]
  %v21 = vld [vmem:[%s0 + $0x30] sm:$0xff]
  %v22 = vld [vmem:[%s0 + $0x38] sm:$0xff]
  %v23 = vld [vmem:[%s0 + $0x40] sm:$0xff]
  %v24 = vld [vmem:[%s0 + $0x48] sm:$0xff]
  %v25 = vld [vmem:[%s0 + $0x50] sm:$0xff]
  %v26 = vld [vmem:[%s0 + $0x58] sm:$0xff]
  %v27 = vld [vmem:[%s0 + $0x60] sm:$0xff]
  %v28 = vld [vmem:[%s0 + $0x68] sm:$0xff]
  %v29 = vld [vmem:[%s0 + $0x70] sm:$0xff]
  %v30 = vld [vmem:[%s0 + $0x78] sm:$0xff]
  %v31 = vld [vmem:[%s0 + $0x80] sm:$0xff]
  %v32 = vld [vmem:[%s0 + $0x88] sm:$0xff]
  %v33 = vld [vmem:[%s0 + $0x90] sm:$0xff]
  %v34 = vld [vmem:[%s0 + $0x98] sm:$0xff]
  %v35 = vld [vmem:[%s0 + $0xa0] sm:$0xff]
  %v36 = vld [vmem:[%s0 + $0xa8] sm:$0xff]
  %v37 = vld [vmem:[%s0 + $0xb0] sm:$0xff]
  %v38 = vld [vmem:[%s0 + $0xb8] sm:$0xff]
  %v39 = vld [vmem:[%s0 + $0xc0] sm:$0xff]
  %v40 = vld [vmem:[%s0 + $0xc8] sm:$0xff]
  %v41 = vld [vmem:[%s0 + $0xd0] sm:$0xff]
  %v42 = vld [vmem:[%s0 + $0xd8] sm:$0xff]
  %v43 = vld [vmem:[%s0 + $0xe0] sm:$0xff]
  %v44 = vld [vmem:[%s0 + $0xe8] sm:$0xff]
  %v45 = vld [vmem:[%s0 + $0xf0] sm:$0xff]
  %v46 = vld [vmem:[%s0 + $0xf8] sm:$0xff]
  %v47 = vld [vmem:[%s0 + $0x100] sm:$0xff]
  %v48 = vld [vmem:[%s0 + $0x108] sm:$0xff]
  %v49 = vld [vmem:[%s0 + $0x110] sm:$0xff]
  %v50 = vld [vmem:[%s0 + $0x118] sm:$0xff]
  %v51 = vld [vmem:[%s0 + $0x120] sm:$0xff]
  %v52 = vld [vmem:[%s0 + $0x128] sm:$0xff]
  %v53 = vld [vmem:[%s0 + $0x130] sm:$0xff]
  %v54 = vld [vmem:[%s0 + $0x138] sm:$0xff]
  %v55 = vld [vmem:[%s0 + $0x140] sm:$0xff]
  %v56 = vld [vmem:[%s0 + $0x148] sm:$0xff]
  %v57 = vld [vmem:[%s0 + $0x150] sm:$0xff]
  %v58 = vld [vmem:[%s0 + $0x158] sm:$0xff]
  %v59 = vld [vmem:[%s0 + $0x160] sm:$0xff]
  %v60 = vld [vmem:[%s0 + $0x168] sm:$0xff]
  %v61 = vld [vmem:[%s0 + $0x170] sm:$0xff]
  %v62 = vld [vmem:[%s0 + $0x178] sm:$0xff]
  %v63 = vld [vmem:[%s0 + $0x180] sm:$0xff]
  %v64 = vld [vmem:[%s0 + $0x188] sm:$0xff]
  %v65 = vld [vmem:[%s0 + $0x190] sm:$0xff]
  %v66 = vld [vmem:[%s0 + $0x198] sm:$0xff]
  %v67 = vld [vmem:[%s0 + $0x1a0] sm:$0xff]
  %v68 = vld [vmem:[%s0 + $0x1a8] sm:$0xff]
  %v69 = vld [vmem:[%s0 + $0x1b0] sm:$0xff]
  %v70 = vld [vmem:[%s0 + $0x1b8] sm:$0xff]
  %v71 = vld [vmem:[%s0 + $0x1c0] sm:$0xff]
  %v72 = vld [vmem:[%s0 + $0x1c8] sm:$0xff]
  %v73 = vld [vmem:[%s0 + $0x1d0] sm:$0xff]
  %v74 = vld [vmem:[%s0 + $0x1d8] sm:$0xff]
  %v75 = vld [vmem:[%s0 + $0x1e0] sm:$0xff]
  %v76 = vld [vmem:[%s0 + $0x1e8] sm:$0xff]
  %v77 = vld [vmem:[%s0 + $0x1f0] sm:$0xff]
  %v78 = vld [vmem:[%s0 + $0x1f8] sm:$0xff]
  %v79 = vld [vmem:[%s0 + $0x200] sm:$0xff]
  %v80 = vld [vmem:[%s0 + $0x208] sm:$0xff]
  %v81 = vld [vmem:[%s0 + $0x210] sm:$0xff]
  %v82 = vld [vmem:[%s0 + $0x218] sm:$0xff]
  %v83 = vld [vmem:[%s0 + $0x220] sm:$0xff]
  %v84 = vld [vmem:[%s0 + $0x228] sm:$0xff]
  %v85 = vld [vmem:[%s0 + $0x230] sm:$0xff]
  %v86 = vld [vmem:[%s0 + $0x238] sm:$0xff]
  %v87 = vld [vmem:[%s0 + $0x240] sm:$0xff]
  %v88 = vld [vmem:[%s0 + $0x248] sm:$0xff]
  %v89 = vld [vmem:[%s0 + $0x250] sm:$0xff]
  %v90 = vld [vmem:[%s0 + $0x258] sm:$0xff]
  %v91 = vld [vmem:[%s0 + $0x260] sm:$0xff]
  %v92 = vld [vmem:[%s0 + $0x268] sm:$0xff]
  %v93 = vld [vmem:[%s0 + $0x270] sm:$0xff]
  %v94 = vld [vmem:[%s0 + $0x278] sm:$0xff]
  %v95 = vld [vmem:[%s0 + $0x280] sm:$0xff]
  %v96 = vld [vmem:[%s0 + $0x288] sm:$0xff]
  %v97 = vld [vmem:[%s0 + $0x290] sm:$0xff]
  %v98 = vld [vmem:[%s0 + $0x298] sm:$0xff]
  %v99 = vld [vmem:[%s0 + $0x2a0] sm:$0xff]
  %v100 = vld [vmem:[%s0 + $0x2a8] sm:$0xff]
  %v101 = vld [vmem:[%s0 + $0x2b0] sm:$0xff]
  %v102 = vld [vmem:[%s0 + $0x2b8] sm:$0xff]
  %v103 = vld [vmem:[%s0 + $0x2c0] sm:$0xff]
  %v104 = vld [vmem:[%s0 + $0x2c8] sm:$0xff]
  %v105 = vld [vmem:[%s0 + $0x2d0] sm:$0xff]
  %v106 = vld [vmem:[%s0 + $0x2d8] sm:$0xff]
  %v107 = vld [vmem:[%s0 + $0x2e0] sm:$0xff]
  %v108 = vld [vmem:[%s0 + $0x2e8] sm:$0xff]
  %v109 = vld [vmem:[%s0 + $0x2f0] sm:$0xff]
  %v110 = vld [vmem:[%s0 + $0x2f8] sm:$0xff]
  %v111 = vld [vmem:[%s0 + $0x300] sm:$0xff]
  %v112 = vld [vmem:[%s0 + $0x308] sm:$0xff]
  %v113 = vld [vmem:[%s0 + $0x310] sm:$0xff]
  %v114 = vld [vmem:[%s0 + $0x318] sm:$0xff]
  %v115 = vld [vmem:[%s0 + $0x320] sm:$0xff]
  %v116 = vld [vmem:[%s0 + $0x328] sm:$0xff]
  %v117 = vld [vmem:[%s0 + $0x330] sm:$0xff]
  %v118 = vld [vmem:[%s0 + $0x338] sm:$0xff]
  %v119 = vld [vmem:[%s0 + $0x340] sm:$0xff]
  %v120 = vld [vmem:[%s0 + $0x348] sm:$0xff]
  %v121 = vld [vmem:[%s0 + $0x350] sm:$0xff]
  %v122 = vld [vmem:[%s0 + $0x358] sm:$0xff]
  %v123 = vld [vmem:[%s0 + $0x360] sm:$0xff]
  %v124 = vld [vmem:[%s0 + $0x368] sm:$0xff]
  %v125 = vld [vmem:[%s0 + $0x370] sm:$0xff]
  %v126 = vld [vmem:[%s0 + $0x378] sm:$0xff]
  %v127 = vld [vmem:[%s0 + $0x380] sm:$0x11]
  %v128 = vld [vmem:[%s0 + $0x388] sm:$0x11]
  %v129 = vld [vmem:[%s1] sm:$0xf]
  %v130 = vld [vmem:[%s1 + $0x4] sm:$0xf]
  %v131 = vld [vmem:[%s1 + $0x8] sm:$0xf]
  %v132 = vld [vmem:[%s1 + $0xc] sm:$0xf]
  %v133 = vld [vmem:[%s1 + $0x10] sm:$0xf]
  %v134 = vld [vmem:[%s1 + $0x14] sm:$0xf]
  %v135 = vld [vmem:[%s1 + $0x18] sm:$0xf]
  %v136 = vld [vmem:[%s1 + $0x1c] sm:$0xf]
  %v137 = vld [vmem:[%s1 + $0x20] sm:$0xf]
  %v138 = vld [vmem:[%s1 + $0x24] sm:$0xf]
  %v139 = vld [vmem:[%s1 + $0x28] sm:$0xf]
  %v140 = vld [vmem:[%s1 + $0x2c] sm:$0xf]
  %v141 = vld [vmem:[%s1 + $0x30] sm:$0xf]
  %v142 = vld [vmem:[%s1 + $0x34] sm:$0xf]
  %v143 = vld [vmem:[%s1 + $0x38] sm:$0xf]
  %v144 = vld [vmem:[%s1 + $0x3c] sm:$0xf]
  %v145 = vld [vmem:[%s1 + $0x40] sm:$0xf]
  %v146 = vld [vmem:[%s1 + $0x44] sm:$0xf]
  %v147 = vld [vmem:[%s1 + $0x48] sm:$0xf]
  %v148 = vld [vmem:[%s1 + $0x4c] sm:$0xf]
  %v149 = vld [vmem:[%s1 + $0x50] sm:$0xf]
  %v150 = vld [vmem:[%s1 + $0x54] sm:$0xf]
  %v151 = vld [vmem:[%s1 + $0x58] sm:$0xf]
  %v152 = vld [vmem:[%s1 + $0x5c] sm:$0xf]
  %v153 = vld [vmem:[%s1 + $0x60] sm:$0xf]
  %v154 = vld [vmem:[%s1 + $0x64] sm:$0xf]
  %v155 = vld [vmem:[%s1 + $0x68] sm:$0xf]
  %v156 = vld [vmem:[%s1 + $0x6c] sm:$0xf]
  %v157 = vld [vmem:[%s1 + $0x70] sm:$0xf]
  %v158 = vld [vmem:[%s1 + $0x74] sm:$0xf]
  %v159 = vld [vmem:[%s1 + $0x78] sm:$0xf]
  %v160 = vld [vmem:[%s1 + $0x7c] sm:$0xf]
  %v161 = vld [vmem:[%s1 + $0x80] sm:$0xf]
  %v162 = vld [vmem:[%s1 + $0x84] sm:$0xf]
  %v163 = vld [vmem:[%s1 + $0x88] sm:$0xf]
  %v164 = vld [vmem:[%s1 + $0x8c] sm:$0xf]
  %v165 = vld [vmem:[%s1 + $0x90] sm:$0xf]
  %v166 = vld [vmem:[%s1 + $0x94] sm:$0xf]
  %v167 = vld [vmem:[%s1 + $0x98] sm:$0xf]
  %v168 = vld [vmem:[%s1 + $0x9c] sm:$0xf]
  %v169 = vld [vmem:[%s1 + $0xa0] sm:$0xf]
  %v170 = vld [vmem:[%s1 + $0xa4] sm:$0xf]
  %v171 = vld [vmem:[%s1 + $0xa8] sm:$0xf]
  %v172 = vld [vmem:[%s1 + $0xac] sm:$0xf]
  %v173 = vld [vmem:[%s1 + $0xb0] sm:$0xf]
  %v174 = vld [vmem:[%s1 + $0xb4] sm:$0xf]
  %v175 = vld [vmem:[%s1 + $0xb8] sm:$0xf]
  %v176 = vld [vmem:[%s1 + $0xbc] sm:$0xf]
  %v177 = vld [vmem:[%s1 + $0xc0] sm:$0xf]
  %v178 = vld [vmem:[%s1 + $0xc4] sm:$0xf]
  %v179 = vld [vmem:[%s2] sm:$0x1]
  %v181 = vlaneseq
  %v182 = vshrl.u32 %v181, 7
  %v183 = vsub.s32 0, %v182
  %v184 = vrot.slane %v179, %v183
  %v300 = vunpack.c.l.b16 %v15
  %v301 = vunpack.c.h.b16 %v15
  %v302 = vunpack.c.l.b16 %v16
  %v303 = vunpack.c.h.b16 %v16
  %v304 = vunpack.c.l.b16 %v17
  %v305 = vunpack.c.h.b16 %v17
  %v306 = vunpack.c.l.b16 %v18
  %v307 = vunpack.c.h.b16 %v18
  %v308 = vunpack.c.l.b16 %v19
  %v309 = vunpack.c.h.b16 %v19
  %v310 = vunpack.c.l.b16 %v20
  %v311 = vunpack.c.h.b16 %v20
  %v312 = vunpack.c.l.b16 %v21
  %v313 = vunpack.c.h.b16 %v21
  %v314 = vunpack.c.l.b16 %v22
  %v315 = vunpack.c.h.b16 %v22
  %v316 = vunpack.c.l.b16 %v23
  %v317 = vunpack.c.h.b16 %v23
  %v318 = vunpack.c.l.b16 %v24
  %v319 = vunpack.c.h.b16 %v24
  %v320 = vunpack.c.l.b16 %v25
  %v321 = vunpack.c.h.b16 %v25
  %v322 = vunpack.c.l.b16 %v26
  %v323 = vunpack.c.h.b16 %v26
  %v324 = vunpack.c.l.b16 %v27
  %v325 = vunpack.c.h.b16 %v27
  %v326 = vunpack.c.l.b16 %v28
  %v327 = vunpack.c.h.b16 %v28
  %v328 = vunpack.c.l.b16 %v29
  %v329 = vunpack.c.h.b16 %v29
  %v330 = vunpack.c.l.b16 %v30
  %v331 = vunpack.c.h.b16 %v30
  %v332 = vunpack.c.l.b16 %v31
  %v333 = vunpack.c.h.b16 %v31
  %v334 = vunpack.c.l.b16 %v32
  %v335 = vunpack.c.h.b16 %v32
  %v336 = vunpack.c.l.b16 %v33
  %v337 = vunpack.c.h.b16 %v33
  %v338 = vunpack.c.l.b16 %v34
  %v339 = vunpack.c.h.b16 %v34
  %v340 = vunpack.c.l.b16 %v35
  %v341 = vunpack.c.h.b16 %v35
  %v342 = vunpack.c.l.b16 %v36
  %v343 = vunpack.c.h.b16 %v36
  %v344 = vunpack.c.l.b16 %v37
  %v345 = vunpack.c.h.b16 %v37
  %v346 = vunpack.c.l.b16 %v38
  %v347 = vunpack.c.h.b16 %v38
  %v348 = vunpack.c.l.b16 %v39
  %v349 = vunpack.c.h.b16 %v39
  %v350 = vunpack.c.l.b16 %v40
  %v351 = vunpack.c.h.b16 %v40
  %v352 = vunpack.c.l.b16 %v41
  %v353 = vunpack.c.h.b16 %v41
  %v354 = vunpack.c.l.b16 %v42
  %v355 = vunpack.c.h.b16 %v42
  %v356 = vunpack.c.l.b16 %v43
  %v357 = vunpack.c.h.b16 %v43
  %v358 = vunpack.c.l.b16 %v44
  %v359 = vunpack.c.h.b16 %v44
  %v360 = vunpack.c.l.b16 %v45
  %v361 = vunpack.c.h.b16 %v45
  %v362 = vunpack.c.l.b16 %v46
  %v363 = vunpack.c.h.b16 %v46
  %v364 = vunpack.c.l.b16 %v47
  %v365 = vunpack.c.h.b16 %v47
  %v366 = vunpack.c.l.b16 %v48
  %v367 = vunpack.c.h.b16 %v48
  %v368 = vunpack.c.l.b16 %v49
  %v369 = vunpack.c.h.b16 %v49
  %v370 = vunpack.c.l.b16 %v50
  %v371 = vunpack.c.h.b16 %v50
  %v372 = vunpack.c.l.b16 %v51
  %v373 = vunpack.c.h.b16 %v51
  %v374 = vunpack.c.l.b16 %v52
  %v375 = vunpack.c.h.b16 %v52
  %v376 = vunpack.c.l.b16 %v53
  %v377 = vunpack.c.h.b16 %v53
  %v378 = vunpack.c.l.b16 %v54
  %v379 = vunpack.c.h.b16 %v54
  %v380 = vunpack.c.l.b16 %v55
  %v381 = vunpack.c.h.b16 %v55
  %v382 = vunpack.c.l.b16 %v56
  %v383 = vunpack.c.h.b16 %v56
  %v384 = vunpack.c.l.b16 %v57
  %v385 = vunpack.c.h.b16 %v57
  %v386 = vunpack.c.l.b16 %v58
  %v387 = vunpack.c.h.b16 %v58
  %v388 = vunpack.c.l.b16 %v59
  %v389 = vunpack.c.h.b16 %v59
  %v390 = vunpack.c.l.b16 %v60
  %v391 = vunpack.c.h.b16 %v60
  %v392 = vunpack.c.l.b16 %v61
  %v393 = vunpack.c.h.b16 %v61
  %v394 = vunpack.c.l.b16 %v62
  %v395 = vunpack.c.h.b16 %v62
  %v396 = vunpack.c.l.b16 %v63
  %v397 = vunpack.c.h.b16 %v63
  %v398 = vunpack.c.l.b16 %v64
  %v399 = vunpack.c.h.b16 %v64
  %v400 = vunpack.c.l.b16 %v65
  %v401 = vunpack.c.h.b16 %v65
  %v402 = vunpack.c.l.b16 %v66
  %v403 = vunpack.c.h.b16 %v66
  %v404 = vunpack.c.l.b16 %v67
  %v405 = vunpack.c.h.b16 %v67
  %v406 = vunpack.c.l.b16 %v68
  %v407 = vunpack.c.h.b16 %v68
  %v408 = vunpack.c.l.b16 %v69
  %v409 = vunpack.c.h.b16 %v69
  %v410 = vunpack.c.l.b16 %v70
  %v411 = vunpack.c.h.b16 %v70
  %v412 = vunpack.c.l.b16 %v71
  %v413 = vunpack.c.h.b16 %v71
  %v414 = vunpack.c.l.b16 %v72
  %v415 = vunpack.c.h.b16 %v72
  %v416 = vunpack.c.l.b16 %v73
  %v417 = vunpack.c.h.b16 %v73
  %v418 = vunpack.c.l.b16 %v74
  %v419 = vunpack.c.h.b16 %v74
  %v420 = vunpack.c.l.b16 %v75
  %v421 = vunpack.c.h.b16 %v75
  %v422 = vunpack.c.l.b16 %v76
  %v423 = vunpack.c.h.b16 %v76
  %v424 = vunpack.c.l.b16 %v77
  %v425 = vunpack.c.h.b16 %v77
  %v426 = vunpack.c.l.b16 %v78
  %v427 = vunpack.c.h.b16 %v78
  %v428 = vunpack.c.l.b16 %v79
  %v429 = vunpack.c.h.b16 %v79
  %v430 = vunpack.c.l.b16 %v80
  %v431 = vunpack.c.h.b16 %v80
  %v432 = vunpack.c.l.b16 %v81
  %v433 = vunpack.c.h.b16 %v81
  %v434 = vunpack.c.l.b16 %v82
  %v435 = vunpack.c.h.b16 %v82
  %v436 = vunpack.c.l.b16 %v83
  %v437 = vunpack.c.h.b16 %v83
  %v438 = vunpack.c.l.b16 %v84
  %v439 = vunpack.c.h.b16 %v84
  %v440 = vunpack.c.l.b16 %v85
  %v441 = vunpack.c.h.b16 %v85
  %v442 = vunpack.c.l.b16 %v86
  %v443 = vunpack.c.h.b16 %v86
  %v444 = vunpack.c.l.b16 %v87
  %v445 = vunpack.c.h.b16 %v87
  %v446 = vunpack.c.l.b16 %v88
  %v447 = vunpack.c.h.b16 %v88
  %v448 = vunpack.c.l.b16 %v89
  %v449 = vunpack.c.h.b16 %v89
  %v450 = vunpack.c.l.b16 %v90
  %v451 = vunpack.c.h.b16 %v90
  %v452 = vunpack.c.l.b16 %v91
  %v453 = vunpack.c.h.b16 %v91
  %v454 = vunpack.c.l.b16 %v92
  %v455 = vunpack.c.h.b16 %v92
  %v456 = vunpack.c.l.b16 %v93
  %v457 = vunpack.c.h.b16 %v93
  %v458 = vunpack.c.l.b16 %v94
  %v459 = vunpack.c.h.b16 %v94
  %v460 = vunpack.c.l.b16 %v95
  %v461 = vunpack.c.h.b16 %v95
  %v462 = vunpack.c.l.b16 %v96
  %v463 = vunpack.c.h.b16 %v96
  %v464 = vunpack.c.l.b16 %v97
  %v465 = vunpack.c.h.b16 %v97
  %v466 = vunpack.c.l.b16 %v98
  %v467 = vunpack.c.h.b16 %v98
  %v468 = vunpack.c.l.b16 %v99
  %v469 = vunpack.c.h.b16 %v99
  %v470 = vunpack.c.l.b16 %v100
  %v471 = vunpack.c.h.b16 %v100
  %v472 = vunpack.c.l.b16 %v101
  %v473 = vunpack.c.h.b16 %v101
  %v474 = vunpack.c.l.b16 %v102
  %v475 = vunpack.c.h.b16 %v102
  %v476 = vunpack.c.l.b16 %v103
  %v477 = vunpack.c.h.b16 %v103
  %v478 = vunpack.c.l.b16 %v104
  %v479 = vunpack.c.h.b16 %v104
  %v480 = vunpack.c.l.b16 %v105
  %v481 = vunpack.c.h.b16 %v105
  %v482 = vunpack.c.l.b16 %v106
  %v483 = vunpack.c.h.b16 %v106
  %v484 = vunpack.c.l.b16 %v107
  %v485 = vunpack.c.h.b16 %v107
  %v486 = vunpack.c.l.b16 %v108
  %v487 = vunpack.c.h.b16 %v108
  %v488 = vunpack.c.l.b16 %v109
  %v489 = vunpack.c.h.b16 %v109
  %v490 = vunpack.c.l.b16 %v110
  %v491 = vunpack.c.h.b16 %v110
  %v492 = vunpack.c.l.b16 %v111
  %v493 = vunpack.c.h.b16 %v111
  %v494 = vunpack.c.l.b16 %v112
  %v495 = vunpack.c.h.b16 %v112
  %v496 = vunpack.c.l.b16 %v113
  %v497 = vunpack.c.h.b16 %v113
  %v498 = vunpack.c.l.b16 %v114
  %v499 = vunpack.c.h.b16 %v114
  %v500 = vunpack.c.l.b16 %v115
  %v501 = vunpack.c.h.b16 %v115
  %v502 = vunpack.c.l.b16 %v116
  %v503 = vunpack.c.h.b16 %v116
  %v504 = vunpack.c.l.b16 %v117
  %v505 = vunpack.c.h.b16 %v117
  %v506 = vunpack.c.l.b16 %v118
  %v507 = vunpack.c.h.b16 %v118
  %v508 = vunpack.c.l.b16 %v119
  %v509 = vunpack.c.h.b16 %v119
  %v510 = vunpack.c.l.b16 %v120
  %v511 = vunpack.c.h.b16 %v120
  %v512 = vunpack.c.l.b16 %v121
  %v513 = vunpack.c.h.b16 %v121
  %v514 = vunpack.c.l.b16 %v122
  %v515 = vunpack.c.h.b16 %v122
  %v516 = vunpack.c.l.b16 %v123
  %v517 = vunpack.c.h.b16 %v123
  %v518 = vunpack.c.l.b16 %v124
  %v519 = vunpack.c.h.b16 %v124
  %v520 = vunpack.c.l.b16 %v125
  %v521 = vunpack.c.h.b16 %v125
  %v522 = vunpack.c.l.b16 %v126
  %v523 = vunpack.c.h.b16 %v126
  %v524 = vunpack.c.l.b16 %v127
  %v525 = vunpack.c.h.b16 %v127
  %v526 = vunpack.c.l.b16 %v128
  %v527 = vunpack.c.h.b16 %v128
  %v528 = vpack.c.b16 %v304, %v300
  %v529 = vpack.c.b16 %v305, %v301
  %v530 = vpack.c.b16 %v306, %v302
  %v531 = vpack.c.b16 %v307, %v303
  %v532 = vpack.c.b16 %v312, %v308
  %v533 = vpack.c.b16 %v313, %v309
  %v534 = vpack.c.b16 %v314, %v310
  %v535 = vpack.c.b16 %v315, %v311
  %v536 = vpack.c.b16 %v320, %v316
  %v537 = vpack.c.b16 %v321, %v317
  %v538 = vpack.c.b16 %v322, %v318
  %v539 = vpack.c.b16 %v323, %v319
  %v540 = vpack.c.b16 %v328, %v324
  %v541 = vpack.c.b16 %v329, %v325
  %v542 = vpack.c.b16 %v330, %v326
  %v543 = vpack.c.b16 %v331, %v327
  %v544 = vpack.c.b16 %v336, %v332
  %v545 = vpack.c.b16 %v337, %v333
  %v546 = vpack.c.b16 %v338, %v334
  %v547 = vpack.c.b16 %v339, %v335
  %v548 = vpack.c.b16 %v344, %v340
  %v549 = vpack.c.b16 %v345, %v341
  %v550 = vpack.c.b16 %v346, %v342
  %v551 = vpack.c.b16 %v347, %v343
  %v552 = vpack.c.b16 %v352, %v348
  %v553 = vpack.c.b16 %v353, %v349
  %v554 = vpack.c.b16 %v354, %v350
  %v555 = vpack.c.b16 %v355, %v351
  %v556 = vpack.c.b16 %v360, %v356
  %v557 = vpack.c.b16 %v361, %v357
  %v558 = vpack.c.b16 %v362, %v358
  %v559 = vpack.c.b16 %v363, %v359
  %v560 = vpack.c.b16 %v368, %v364
  %v561 = vpack.c.b16 %v369, %v365
  %v562 = vpack.c.b16 %v370, %v366
  %v563 = vpack.c.b16 %v371, %v367
  %v564 = vpack.c.b16 %v376, %v372
  %v565 = vpack.c.b16 %v377, %v373
  %v566 = vpack.c.b16 %v378, %v374
  %v567 = vpack.c.b16 %v379, %v375
  %v568 = vpack.c.b16 %v384, %v380
  %v569 = vpack.c.b16 %v385, %v381
  %v570 = vpack.c.b16 %v386, %v382
  %v571 = vpack.c.b16 %v387, %v383
  %v572 = vpack.c.b16 %v392, %v388
  %v573 = vpack.c.b16 %v393, %v389
  %v574 = vpack.c.b16 %v394, %v390
  %v575 = vpack.c.b16 %v395, %v391
  %v576 = vpack.c.b16 %v400, %v396
  %v577 = vpack.c.b16 %v401, %v397
  %v578 = vpack.c.b16 %v402, %v398
  %v579 = vpack.c.b16 %v403, %v399
  %v580 = vpack.c.b16 %v408, %v404
  %v581 = vpack.c.b16 %v409, %v405
  %v582 = vpack.c.b16 %v410, %v406
  %v583 = vpack.c.b16 %v411, %v407
  %v584 = vpack.c.b16 %v416, %v412
  %v585 = vpack.c.b16 %v417, %v413
  %v586 = vpack.c.b16 %v418, %v414
  %v587 = vpack.c.b16 %v419, %v415
  %v588 = vpack.c.b16 %v424, %v420
  %v589 = vpack.c.b16 %v425, %v421
  %v590 = vpack.c.b16 %v426, %v422
  %v591 = vpack.c.b16 %v427, %v423
  %v592 = vpack.c.b16 %v432, %v428
  %v593 = vpack.c.b16 %v433, %v429
  %v594 = vpack.c.b16 %v434, %v430
  %v595 = vpack.c.b16 %v435, %v431
  %v596 = vpack.c.b16 %v440, %v436
  %v597 = vpack.c.b16 %v441, %v437
  %v598 = vpack.c.b16 %v442, %v438
  %v599 = vpack.c.b16 %v443, %v439
  %v600 = vpack.c.b16 %v448, %v444
  %v601 = vpack.c.b16 %v449, %v445
  %v602 = vpack.c.b16 %v450, %v446
  %v603 = vpack.c.b16 %v451, %v447
  %v604 = vpack.c.b16 %v456, %v452
  %v605 = vpack.c.b16 %v457, %v453
  %v606 = vpack.c.b16 %v458, %v454
  %v607 = vpack.c.b16 %v459, %v455
  %v608 = vpack.c.b16 %v464, %v460
  %v609 = vpack.c.b16 %v465, %v461
  %v610 = vpack.c.b16 %v466, %v462
  %v611 = vpack.c.b16 %v467, %v463
  %v612 = vpack.c.b16 %v472, %v468
  %v613 = vpack.c.b16 %v473, %v469
  %v614 = vpack.c.b16 %v474, %v470
  %v615 = vpack.c.b16 %v475, %v471
  %v616 = vpack.c.b16 %v480, %v476
  %v617 = vpack.c.b16 %v481, %v477
  %v618 = vpack.c.b16 %v482, %v478
  %v619 = vpack.c.b16 %v483, %v479
  %v620 = vpack.c.b16 %v488, %v484
  %v621 = vpack.c.b16 %v489, %v485
  %v622 = vpack.c.b16 %v490, %v486
  %v623 = vpack.c.b16 %v491, %v487
  %v624 = vpack.c.b16 %v496, %v492
  %v625 = vpack.c.b16 %v497, %v493
  %v626 = vpack.c.b16 %v498, %v494
  %v627 = vpack.c.b16 %v499, %v495
  %v628 = vpack.c.b16 %v504, %v500
  %v629 = vpack.c.b16 %v505, %v501
  %v630 = vpack.c.b16 %v506, %v502
  %v631 = vpack.c.b16 %v507, %v503
  %v632 = vpack.c.b16 %v512, %v508
  %v633 = vpack.c.b16 %v513, %v509
  %v634 = vpack.c.b16 %v514, %v510
  %v635 = vpack.c.b16 %v515, %v511
  %v636 = vpack.c.b16 %v520, %v516
  %v637 = vpack.c.b16 %v521, %v517
  %v638 = vpack.c.b16 %v522, %v518
  %v639 = vpack.c.b16 %v523, %v519
  %v640 = vpack.c.b16 %v524, %v524
  %v641 = vpack.c.b16 %v525, %v525
  %v642 = vpack.c.b16 %v526, %v526
  %v643 = vpack.c.b16 %v527, %v527
  %v781 = vunpack.c.l.b16 %v129
  %v782 = vunpack.c.l.b16 %v130
  %v783 = vunpack.c.l.b16 %v131
  %v784 = vunpack.c.l.b16 %v132
  %v785 = vunpack.c.l.b16 %v133
  %v786 = vunpack.c.l.b16 %v134
  %v787 = vunpack.c.l.b16 %v135
  %v788 = vunpack.c.l.b16 %v136
  %v789 = vunpack.c.l.b16 %v137
  %v790 = vunpack.c.l.b16 %v138
  %v791 = vunpack.c.l.b16 %v139
  %v792 = vunpack.c.l.b16 %v140
  %v793 = vunpack.c.l.b16 %v141
  %v794 = vunpack.c.l.b16 %v142
  %v795 = vunpack.c.l.b16 %v143
  %v796 = vunpack.c.l.b16 %v144
  %v797 = vunpack.c.l.b16 %v145
  %v798 = vunpack.c.l.b16 %v146
  %v799 = vunpack.c.l.b16 %v147
  %v800 = vunpack.c.l.b16 %v148
  %v801 = vunpack.c.l.b16 %v149
  %v802 = vunpack.c.l.b16 %v150
  %v803 = vunpack.c.l.b16 %v151
  %v804 = vunpack.c.l.b16 %v152
  %v805 = vunpack.c.l.b16 %v153
  %v806 = vunpack.c.l.b16 %v154
  %v807 = vunpack.c.l.b16 %v155
  %v808 = vunpack.c.l.b16 %v156
  %v809 = vunpack.c.l.b16 %v157
  %v810 = vunpack.c.l.b16 %v158
  %v811 = vunpack.c.l.b16 %v159
  %v812 = vunpack.c.l.b16 %v160
  %v813 = vunpack.c.l.b16 %v161
  %v814 = vunpack.c.l.b16 %v162
  %v815 = vunpack.c.l.b16 %v163
  %v816 = vunpack.c.l.b16 %v164
  %v817 = vunpack.c.l.b16 %v165
  %v818 = vunpack.c.l.b16 %v166
  %v819 = vunpack.c.l.b16 %v167
  %v820 = vunpack.c.l.b16 %v168
  %v821 = vunpack.c.l.b16 %v169
  %v822 = vunpack.c.l.b16 %v170
  %v823 = vunpack.c.l.b16 %v171
  %v824 = vunpack.c.l.b16 %v172
  %v825 = vunpack.c.l.b16 %v173
  %v826 = vunpack.c.l.b16 %v174
  %v827 = vunpack.c.l.b16 %v175
  %v828 = vunpack.c.l.b16 %v176
  %v829 = vunpack.c.l.b16 %v177
  %v830 = vunpack.c.l.b16 %v178
  %v831 = vpack.c.b16 %v782, %v781
  %v832 = vpack.c.b16 %v784, %v783
  %v833 = vpack.c.b16 %v786, %v785
  %v834 = vpack.c.b16 %v788, %v787
  %v835 = vpack.c.b16 %v790, %v789
  %v836 = vpack.c.b16 %v792, %v791
  %v837 = vpack.c.b16 %v794, %v793
  %v838 = vpack.c.b16 %v796, %v795
  %v839 = vpack.c.b16 %v798, %v797
  %v840 = vpack.c.b16 %v800, %v799
  %v841 = vpack.c.b16 %v802, %v801
  %v842 = vpack.c.b16 %v804, %v803
  %v843 = vpack.c.b16 %v806, %v805
  %v844 = vpack.c.b16 %v808, %v807
  %v845 = vpack.c.b16 %v810, %v809
  %v846 = vpack.c.b16 %v812, %v811
  %v847 = vpack.c.b16 %v814, %v813
  %v848 = vpack.c.b16 %v816, %v815
  %v849 = vpack.c.b16 %v818, %v817
  %v850 = vpack.c.b16 %v820, %v819
  %v851 = vpack.c.b16 %v822, %v821
  %v852 = vpack.c.b16 %v824, %v823
  %v853 = vpack.c.b16 %v826, %v825
  %v854 = vpack.c.b16 %v828, %v827
  %v855 = vpack.c.b16 %v830, %v829
  %vm881 = vcmask 130048
  %v883 = vsel %vm881, %v531, 0
  %v886 = vsel %vm881, %v535, 0
  %v889 = vsel %vm881, %v539, 0
  %v892 = vsel %vm881, %v543, 0
  %v895 = vsel %vm881, %v547, 0
  %v898 = vsel %vm881, %v551, 0
  %v901 = vsel %vm881, %v555, 0
  %v904 = vsel %vm881, %v559, 0
  %v907 = vsel %vm881, %v563, 0
  %v910 = vsel %vm881, %v567, 0
  %v913 = vsel %vm881, %v571, 0
  %v916 = vsel %vm881, %v575, 0
  %v919 = vsel %vm881, %v579, 0
  %v922 = vsel %vm881, %v583, 0
  %v925 = vsel %vm881, %v587, 0
  %v928 = vsel %vm881, %v591, 0
  %v931 = vsel %vm881, %v595, 0
  %v934 = vsel %vm881, %v599, 0
  %v937 = vsel %vm881, %v603, 0
  %v940 = vsel %vm881, %v607, 0
  %v943 = vsel %vm881, %v611, 0
  %v946 = vsel %vm881, %v615, 0
  %v949 = vsel %vm881, %v619, 0
  %v952 = vsel %vm881, %v623, 0
  %v955 = vsel %vm881, %v627, 0
  %v958 = vsel %vm881, %v631, 0
  %v961 = vsel %vm881, %v635, 0
  %v964 = vsel %vm881, %v639, 0
  %v967 = vsel %vm881, %v643, 0
  %969 = vmatprep.subr.bf16.mxu0 0
  %970 = vmatpush1.bf16.msra.mxu0 %v831
  %971 = vmatprep.subr.bf16.mxu0 0
  %972 = vmatpush1.bf16.msra.mxu0 %v832
  %973 = vmatprep.subr.bf16.mxu0 0
  %974 = vmatpush1.bf16.msra.mxu0 %v833
  %975 = vmatprep.subr.bf16.mxu0 0
  %976 = vmatpush1.bf16.msra.mxu0 %v834
  %977 = vmatprep.subr.bf16.mxu0 0
  %978 = vmatpush1.bf16.msra.mxu0 %v835
  %979 = vmatprep.subr.bf16.mxu0 0
  %980 = vmatpush1.bf16.msra.mxu0 %v836
  %981 = vmatprep.subr.bf16.mxu0 0
  %982 = vmatpush1.bf16.msra.mxu0 %v837
  %983 = vmatprep.subr.bf16.mxu0 0
  %984 = vmatpush1.bf16.msra.mxu0 %v838
  %985 = vmatprep.subr.bf16.mxu0 0
  %986 = vmatpush1.bf16.msra.mxu0 %v839
  %987 = vmatprep.subr.bf16.mxu0 0
  %988 = vmatpush1.bf16.msra.mxu0 %v840
  %989 = vmatprep.subr.bf16.mxu0 0
  %990 = vmatpush1.bf16.msra.mxu0 %v841
  %991 = vmatprep.subr.bf16.mxu0 0
  %992 = vmatpush1.bf16.msra.mxu0 %v842
  %993 = vmatprep.subr.bf16.mxu0 0
  %994 = vmatpush1.bf16.msra.mxu0 %v843
  %995 = vmatprep.subr.bf16.mxu0 0
  %996 = vmatpush1.bf16.msra.mxu0 %v844
  %997 = vmatprep.subr.bf16.mxu0 0
  %998 = vmatpush1.bf16.msra.mxu0 %v845
  %999 = vmatprep.subr.bf16.mxu0 0
  %1000 = vmatpush1.bf16.msra.mxu0 %v846
  %1001 = vmatprep.mubr.bf16.mxu0 %v529
  %1002 = vmatmul.mubr.bf16.gmra.mrb[0].mxu0 %v528
  %v1003 = vpop.f32.mrb[0].mxu0
  %v1004 = vadd.f32 %v184, %v1003
  %v1005 = vpop.f32.mrb[0].mxu0
  %v1006 = vpop.f32.mrb[0].mxu0
  %v1007 = vadd.f32 %v184, %v1006
  %v1008 = vpop.f32.mrb[0].mxu0
  %1009 = vmatprep.mubr.bf16.mxu0 %v533
  %1010 = vmatmul.mubr.bf16.gmra.mrb[0].mxu0 %v532
  %v1011 = vpop.f32.mrb[0].mxu0
  %v1012 = vadd.f32 %v184, %v1011
  %v1013 = vpop.f32.mrb[0].mxu0
  %v1014 = vpop.f32.mrb[0].mxu0
  %v1015 = vadd.f32 %v184, %v1014
  %v1016 = vpop.f32.mrb[0].mxu0
  %1017 = vmatprep.mubr.bf16.mxu0 %v537
  %1018 = vmatmul.mubr.bf16.gmra.mrb[0].mxu0 %v536
  %v1019 = vpop.f32.mrb[0].mxu0
  %v1020 = vadd.f32 %v184, %v1019
  %v1021 = vpop.f32.mrb[0].mxu0
  %v1022 = vpop.f32.mrb[0].mxu0
  %v1023 = vadd.f32 %v184, %v1022
  %v1024 = vpop.f32.mrb[0].mxu0
  %1025 = vmatprep.mubr.bf16.mxu0 %v541
  %1026 = vmatmul.mubr.bf16.gmra.mrb[0].mxu0 %v540
  %v1027 = vpop.f32.mrb[0].mxu0
  %v1028 = vadd.f32 %v184, %v1027
  %v1029 = vpop.f32.mrb[0].mxu0
  %v1030 = vpop.f32.mrb[0].mxu0
  %v1031 = vadd.f32 %v184, %v1030
  %v1032 = vpop.f32.mrb[0].mxu0
  %1033 = vmatprep.mubr.bf16.mxu0 %v545
  %1034 = vmatmul.mubr.bf16.gmra.mrb[0].mxu0 %v544
  %v1035 = vpop.f32.mrb[0].mxu0
  %v1036 = vadd.f32 %v184, %v1035
  %v1037 = vpop.f32.mrb[0].mxu0
  %v1038 = vpop.f32.mrb[0].mxu0
  %v1039 = vadd.f32 %v184, %v1038
  %v1040 = vpop.f32.mrb[0].mxu0
  %1041 = vmatprep.mubr.bf16.mxu0 %v549
  %1042 = vmatmul.mubr.bf16.gmra.mrb[0].mxu0 %v548
  %v1043 = vpop.f32.mrb[0].mxu0
  %v1044 = vadd.f32 %v184, %v1043
  %v1045 = vpop.f32.mrb[0].mxu0
  %v1046 = vpop.f32.mrb[0].mxu0
  %v1047 = vadd.f32 %v184, %v1046
  %v1048 = vpop.f32.mrb[0].mxu0
  %1049 = vmatprep.mubr.bf16.mxu0 %v553
  %1050 = vmatmul.mubr.bf16.gmra.mrb[0].mxu0 %v552
  %v1051 = vpop.f32.mrb[0].mxu0
  %v1052 = vadd.f32 %v184, %v1051
  %v1053 = vpop.f32.mrb[0].mxu0
  %v1054 = vpop.f32.mrb[0].mxu0
  %v1055 = vadd.f32 %v184, %v1054
  %v1056 = vpop.f32.mrb[0].mxu0
  %1057 = vmatprep.mubr.bf16.mxu0 %v557
  %1058 = vmatmul.mubr.bf16.gmra.mrb[0].mxu0 %v556
  %v1059 = vpop.f32.mrb[0].mxu0
  %v1060 = vadd.f32 %v184, %v1059
  %v1061 = vpop.f32.mrb[0].mxu0
  %v1062 = vpop.f32.mrb[0].mxu0
  %v1063 = vadd.f32 %v184, %v1062
  %v1064 = vpop.f32.mrb[0].mxu0
  %1065 = vmatprep.mubr.bf16.mxu0 %v561
  %1066 = vmatmul.mubr.bf16.gmra.mrb[0].mxu0 %v560
  %v1067 = vpop.f32.mrb[0].mxu0
  %v1068 = vadd.f32 %v184, %v1067
  %v1069 = vpop.f32.mrb[0].mxu0
  %v1070 = vpop.f32.mrb[0].mxu0
  %v1071 = vadd.f32 %v184, %v1070
  %v1072 = vpop.f32.mrb[0].mxu0
  %1073 = vmatprep.mubr.bf16.mxu0 %v565
  %1074 = vmatmul.mubr.bf16.gmra.mrb[0].mxu0 %v564
  %v1075 = vpop.f32.mrb[0].mxu0
  %v1076 = vadd.f32 %v184, %v1075
  %v1077 = vpop.f32.mrb[0].mxu0
  %v1078 = vpop.f32.mrb[0].mxu0
  %v1079 = vadd.f32 %v184, %v1078
  %v1080 = vpop.f32.mrb[0].mxu0
  %1081 = vmatprep.mubr.bf16.mxu0 %v569
  %1082 = vmatmul.mubr.bf16.gmra.mrb[0].mxu0 %v568
  %v1083 = vpop.f32.mrb[0].mxu0
  %v1084 = vadd.f32 %v184, %v1083
  %v1085 = vpop.f32.mrb[0].mxu0
  %v1086 = vpop.f32.mrb[0].mxu0
  %v1087 = vadd.f32 %v184, %v1086
  %v1088 = vpop.f32.mrb[0].mxu0
  %1089 = vmatprep.mubr.bf16.mxu0 %v573
  %1090 = vmatmul.mubr.bf16.gmra.mrb[0].mxu0 %v572
  %v1091 = vpop.f32.mrb[0].mxu0
  %v1092 = vadd.f32 %v184, %v1091
  %v1093 = vpop.f32.mrb[0].mxu0
  %v1094 = vpop.f32.mrb[0].mxu0
  %v1095 = vadd.f32 %v184, %v1094
  %v1096 = vpop.f32.mrb[0].mxu0
  %1097 = vmatprep.mubr.bf16.mxu0 %v577
  %1098 = vmatmul.mubr.bf16.gmra.mrb[0].mxu0 %v576
  %v1099 = vpop.f32.mrb[0].mxu0
  %v1100 = vadd.f32 %v184, %v1099
  %v1101 = vpop.f32.mrb[0].mxu0
  %v1102 = vpop.f32.mrb[0].mxu0
  %v1103 = vadd.f32 %v184, %v1102
  %v1104 = vpop.f32.mrb[0].mxu0
  %1105 = vmatprep.mubr.bf16.mxu0 %v581
  %1106 = vmatmul.mubr.bf16.gmra.mrb[0].mxu0 %v580
  %v1107 = vpop.f32.mrb[0].mxu0
  %v1108 = vadd.f32 %v184, %v1107
  %v1109 = vpop.f32.mrb[0].mxu0
  %v1110 = vpop.f32.mrb[0].mxu0
  %v1111 = vadd.f32 %v184, %v1110
  %v1112 = vpop.f32.mrb[0].mxu0
  %1113 = vmatprep.mubr.bf16.mxu0 %v585
  %1114 = vmatmul.mubr.bf16.gmra.mrb[0].mxu0 %v584
  %v1115 = vpop.f32.mrb[0].mxu0
  %v1116 = vadd.f32 %v184, %v1115
  %v1117 = vpop.f32.mrb[0].mxu0
  %v1118 = vpop.f32.mrb[0].mxu0
  %v1119 = vadd.f32 %v184, %v1118
  %v1120 = vpop.f32.mrb[0].mxu0
  %1121 = vmatprep.mubr.bf16.mxu0 %v589
  %1122 = vmatmul.mubr.bf16.gmra.mrb[0].mxu0 %v588
  %v1123 = vpop.f32.mrb[0].mxu0
  %v1124 = vadd.f32 %v184, %v1123
  %v1125 = vpop.f32.mrb[0].mxu0
  %v1126 = vpop.f32.mrb[0].mxu0
  %v1127 = vadd.f32 %v184, %v1126
  %v1128 = vpop.f32.mrb[0].mxu0
  %1129 = vmatprep.mubr.bf16.mxu0 %v593
  %1130 = vmatmul.mubr.bf16.gmra.mrb[0].mxu0 %v592
  %v1131 = vpop.f32.mrb[0].mxu0
  %v1132 = vadd.f32 %v184, %v1131
  %v1133 = vpop.f32.mrb[0].mxu0
  %v1134 = vpop.f32.mrb[0].mxu0
  %v1135 = vadd.f32 %v184, %v1134
  %v1136 = vpop.f32.mrb[0].mxu0
  %1137 = vmatprep.mubr.bf16.mxu0 %v597
  %1138 = vmatmul.mubr.bf16.gmra.mrb[0].mxu0 %v596
  %v1139 = vpop.f32.mrb[0].mxu0
  %v1140 = vadd.f32 %v184, %v1139
  %v1141 = vpop.f32.mrb[0].mxu0
  %v1142 = vpop.f32.mrb[0].mxu0
  %v1143 = vadd.f32 %v184, %v1142
  %v1144 = vpop.f32.mrb[0].mxu0
  %1145 = vmatprep.mubr.bf16.mxu0 %v601
  %1146 = vmatmul.mubr.bf16.gmra.mrb[0].mxu0 %v600
  %v1147 = vpop.f32.mrb[0].mxu0
  %v1148 = vadd.f32 %v184, %v1147
  %v1149 = vpop.f32.mrb[0].mxu0
  %v1150 = vpop.f32.mrb[0].mxu0
  %v1151 = vadd.f32 %v184, %v1150
  %v1152 = vpop.f32.mrb[0].mxu0
  %1153 = vmatprep.mubr.bf16.mxu0 %v605
  %1154 = vmatmul.mubr.bf16.gmra.mrb[0].mxu0 %v604
  %v1155 = vpop.f32.mrb[0].mxu0
  %v1156 = vadd.f32 %v184, %v1155
  %v1157 = vpop.f32.mrb[0].mxu0
  %v1158 = vpop.f32.mrb[0].mxu0
  %v1159 = vadd.f32 %v184, %v1158
  %v1160 = vpop.f32.mrb[0].mxu0
  %1161 = vmatprep.mubr.bf16.mxu0 %v609
  %1162 = vmatmul.mubr.bf16.gmra.mrb[0].mxu0 %v608
  %v1163 = vpop.f32.mrb[0].mxu0
  %v1164 = vadd.f32 %v184, %v1163
  %v1165 = vpop.f32.mrb[0].mxu0
  %v1166 = vpop.f32.mrb[0].mxu0
  %v1167 = vadd.f32 %v184, %v1166
  %v1168 = vpop.f32.mrb[0].mxu0
  %1169 = vmatprep.mubr.bf16.mxu0 %v613
  %1170 = vmatmul.mubr.bf16.gmra.mrb[0].mxu0 %v612
  %v1171 = vpop.f32.mrb[0].mxu0
  %v1172 = vadd.f32 %v184, %v1171
  %v1173 = vpop.f32.mrb[0].mxu0
  %v1174 = vpop.f32.mrb[0].mxu0
  %v1175 = vadd.f32 %v184, %v1174
  %v1176 = vpop.f32.mrb[0].mxu0
  %1177 = vmatprep.mubr.bf16.mxu0 %v617
  %1178 = vmatmul.mubr.bf16.gmra.mrb[0].mxu0 %v616
  %v1179 = vpop.f32.mrb[0].mxu0
  %v1180 = vadd.f32 %v184, %v1179
  %v1181 = vpop.f32.mrb[0].mxu0
  %v1182 = vpop.f32.mrb[0].mxu0
  %v1183 = vadd.f32 %v184, %v1182
  %v1184 = vpop.f32.mrb[0].mxu0
  %1185 = vmatprep.mubr.bf16.mxu0 %v621
  %1186 = vmatmul.mubr.bf16.gmra.mrb[0].mxu0 %v620
  %v1187 = vpop.f32.mrb[0].mxu0
  %v1188 = vadd.f32 %v184, %v1187
  %v1189 = vpop.f32.mrb[0].mxu0
  %v1190 = vpop.f32.mrb[0].mxu0
  %v1191 = vadd.f32 %v184, %v1190
  %v1192 = vpop.f32.mrb[0].mxu0
  %1193 = vmatprep.mubr.bf16.mxu0 %v625
  %1194 = vmatmul.mubr.bf16.gmra.mrb[0].mxu0 %v624
  %v1195 = vpop.f32.mrb[0].mxu0
  %v1196 = vadd.f32 %v184, %v1195
  %v1197 = vpop.f32.mrb[0].mxu0
  %v1198 = vpop.f32.mrb[0].mxu0
  %v1199 = vadd.f32 %v184, %v1198
  %v1200 = vpop.f32.mrb[0].mxu0
  %1201 = vmatprep.mubr.bf16.mxu0 %v629
  %1202 = vmatmul.mubr.bf16.gmra.mrb[0].mxu0 %v628
  %v1203 = vpop.f32.mrb[0].mxu0
  %v1204 = vadd.f32 %v184, %v1203
  %v1205 = vpop.f32.mrb[0].mxu0
  %v1206 = vpop.f32.mrb[0].mxu0
  %v1207 = vadd.f32 %v184, %v1206
  %v1208 = vpop.f32.mrb[0].mxu0
  %1209 = vmatprep.mubr.bf16.mxu0 %v633
  %1210 = vmatmul.mubr.bf16.gmra.mrb[0].mxu0 %v632
  %v1211 = vpop.f32.mrb[0].mxu0
  %v1212 = vadd.f32 %v184, %v1211
  %v1213 = vpop.f32.mrb[0].mxu0
  %v1214 = vpop.f32.mrb[0].mxu0
  %v1215 = vadd.f32 %v184, %v1214
  %v1216 = vpop.f32.mrb[0].mxu0
  %1217 = vmatprep.mubr.bf16.mxu0 %v637
  %1218 = vmatmul.mubr.bf16.gmra.mrb[0].mxu0 %v636
  %v1219 = vpop.f32.mrb[0].mxu0
  %v1220 = vadd.f32 %v184, %v1219
  %v1221 = vpop.f32.mrb[0].mxu0
  %v1222 = vpop.f32.mrb[0].mxu0
  %v1223 = vadd.f32 %v184, %v1222
  %v1224 = vpop.f32.mrb[0].mxu0
  %1225 = vmatprep.mubr.bf16.mxu0 %v641
  %1226 = vmatmul.mubr.bf16.gmra.mrb[0].mxu0 %v640
  %v1227 = vpop.f32.mrb[0].mxu0
  %v1228 = vadd.f32 %v184, %v1227
  %v1229 = vpop.f32.mrb[0].mxu0
  %v1230 = vpop.f32.mrb[0].mxu0
  %v1231 = vpop.f32.mrb[0].mxu0
  %1232 = vdwg.mxu0
  %1233 = vmatprep.subr.bf16.mxu0 0
  %1234 = vmatpush1.bf16.msra.mxu0 %v847
  %1235 = vmatprep.subr.bf16.mxu0 0
  %1236 = vmatpush1.bf16.msra.mxu0 %v848
  %1237 = vmatprep.subr.bf16.mxu0 0
  %1238 = vmatpush1.bf16.msra.mxu0 %v849
  %1239 = vmatprep.subr.bf16.mxu0 0
  %1240 = vmatpush1.bf16.msra.mxu0 %v850
  %1241 = vmatprep.subr.bf16.mxu0 0
  %1242 = vmatpush1.bf16.msra.mxu0 %v851
  %1243 = vmatprep.subr.bf16.mxu0 0
  %1244 = vmatpush1.bf16.msra.mxu0 %v852
  %1245 = vmatprep.subr.bf16.mxu0 0
  %1246 = vmatpush1.bf16.msra.mxu0 %v853
  %1247 = vmatprep.subr.bf16.mxu0 0
  %1248 = vmatpush1.bf16.msra.mxu0 %v854
  %1249 = vmatprep.subr.bf16.mxu0 0
  %1250 = vmatpush1.bf16.msra.mxu0 %v855
  %1251 = vmatprep.subr.bf16.mxu0 0
  %1252 = vmatpush1.bf16.msra.mxu0 0
  %1253 = vmatprep.subr.bf16.mxu0 0
  %1254 = vmatpush1.bf16.msra.mxu0 0
  %1255 = vmatprep.subr.bf16.mxu0 0
  %1256 = vmatpush1.bf16.msra.mxu0 0
  %1257 = vmatprep.subr.bf16.mxu0 0
  %1258 = vmatpush1.bf16.msra.mxu0 0
  %1259 = vmatprep.subr.bf16.mxu0 0
  %1260 = vmatpush1.bf16.msra.mxu0 0
  %1261 = vmatprep.subr.bf16.mxu0 0
  %1262 = vmatpush1.bf16.msra.mxu0 0
  %1263 = vmatprep.subr.bf16.mxu0 0
  %1264 = vmatpush1.bf16.msra.mxu0 0
  %1265 = vmatprep.mubr.bf16.mxu0 %v883
  %1266 = vmatmul.mubr.bf16.gmra.mrb[0].mxu0 %v530
  %v1267 = vpop.f32.mrb[0].mxu0
  %v1268 = vadd.f32 %v1004, %v1267
  %v1269 = vpop.f32.mrb[0].mxu0
  %v1270 = vpop.f32.mrb[0].mxu0
  %v1271 = vadd.f32 %v1007, %v1270
  %v1272 = vpop.f32.mrb[0].mxu0
  %1273 = vmatprep.mubr.bf16.mxu0 %v886
  %1274 = vmatmul.mubr.bf16.gmra.mrb[0].mxu0 %v534
  %v1275 = vpop.f32.mrb[0].mxu0
  %v1276 = vadd.f32 %v1012, %v1275
  %v1277 = vpop.f32.mrb[0].mxu0
  %v1278 = vpop.f32.mrb[0].mxu0
  %v1279 = vadd.f32 %v1015, %v1278
  %v1280 = vpop.f32.mrb[0].mxu0
  %1281 = vmatprep.mubr.bf16.mxu0 %v889
  %1282 = vmatmul.mubr.bf16.gmra.mrb[0].mxu0 %v538
  %v1283 = vpop.f32.mrb[0].mxu0
  %v1284 = vadd.f32 %v1020, %v1283
  %v1285 = vpop.f32.mrb[0].mxu0
  %v1286 = vpop.f32.mrb[0].mxu0
  %v1287 = vadd.f32 %v1023, %v1286
  %v1288 = vpop.f32.mrb[0].mxu0
  %1289 = vmatprep.mubr.bf16.mxu0 %v892
  %1290 = vmatmul.mubr.bf16.gmra.mrb[0].mxu0 %v542
  %v1291 = vpop.f32.mrb[0].mxu0
  %v1292 = vadd.f32 %v1028, %v1291
  %v1293 = vpop.f32.mrb[0].mxu0
  %v1294 = vpop.f32.mrb[0].mxu0
  %v1295 = vadd.f32 %v1031, %v1294
  %v1296 = vpop.f32.mrb[0].mxu0
  %1297 = vmatprep.mubr.bf16.mxu0 %v895
  %1298 = vmatmul.mubr.bf16.gmra.mrb[0].mxu0 %v546
  %v1299 = vpop.f32.mrb[0].mxu0
  %v1300 = vadd.f32 %v1036, %v1299
  %v1301 = vpop.f32.mrb[0].mxu0
  %v1302 = vpop.f32.mrb[0].mxu0
  %v1303 = vadd.f32 %v1039, %v1302
  %v1304 = vpop.f32.mrb[0].mxu0
  %1305 = vmatprep.mubr.bf16.mxu0 %v898
  %1306 = vmatmul.mubr.bf16.gmra.mrb[0].mxu0 %v550
  %v1307 = vpop.f32.mrb[0].mxu0
  %v1308 = vadd.f32 %v1044, %v1307
  %v1309 = vpop.f32.mrb[0].mxu0
  %v1310 = vpop.f32.mrb[0].mxu0
  %v1311 = vadd.f32 %v1047, %v1310
  %v1312 = vpop.f32.mrb[0].mxu0
  %1313 = vmatprep.mubr.bf16.mxu0 %v901
  %1314 = vmatmul.mubr.bf16.gmra.mrb[0].mxu0 %v554
  %v1315 = vpop.f32.mrb[0].mxu0
  %v1316 = vadd.f32 %v1052, %v1315
  %v1317 = vpop.f32.mrb[0].mxu0
  %v1318 = vpop.f32.mrb[0].mxu0
  %v1319 = vadd.f32 %v1055, %v1318
  %v1320 = vpop.f32.mrb[0].mxu0
  %1321 = vmatprep.mubr.bf16.mxu0 %v904
  %1322 = vmatmul.mubr.bf16.gmra.mrb[0].mxu0 %v558
  %v1323 = vpop.f32.mrb[0].mxu0
  %v1324 = vadd.f32 %v1060, %v1323
  %v1325 = vpop.f32.mrb[0].mxu0
  %v1326 = vpop.f32.mrb[0].mxu0
  %v1327 = vadd.f32 %v1063, %v1326
  %v1328 = vpop.f32.mrb[0].mxu0
  %1329 = vmatprep.mubr.bf16.mxu0 %v907
  %1330 = vmatmul.mubr.bf16.gmra.mrb[0].mxu0 %v562
  %v1331 = vpop.f32.mrb[0].mxu0
  %v1332 = vadd.f32 %v1068, %v1331
  %v1333 = vpop.f32.mrb[0].mxu0
  %v1334 = vpop.f32.mrb[0].mxu0
  %v1335 = vadd.f32 %v1071, %v1334
  %v1336 = vpop.f32.mrb[0].mxu0
  %1337 = vmatprep.mubr.bf16.mxu0 %v910
  %1338 = vmatmul.mubr.bf16.gmra.mrb[0].mxu0 %v566
  %v1339 = vpop.f32.mrb[0].mxu0
  %v1340 = vadd.f32 %v1076, %v1339
  %v1341 = vpop.f32.mrb[0].mxu0
  %v1342 = vpop.f32.mrb[0].mxu0
  %v1343 = vadd.f32 %v1079, %v1342
  %v1344 = vpop.f32.mrb[0].mxu0
  %1345 = vmatprep.mubr.bf16.mxu0 %v913
  %1346 = vmatmul.mubr.bf16.gmra.mrb[0].mxu0 %v570
  %v1347 = vpop.f32.mrb[0].mxu0
  %v1348 = vadd.f32 %v1084, %v1347
  %v1349 = vpop.f32.mrb[0].mxu0
  %v1350 = vpop.f32.mrb[0].mxu0
  %v1351 = vadd.f32 %v1087, %v1350
  %v1352 = vpop.f32.mrb[0].mxu0
  %1353 = vmatprep.mubr.bf16.mxu0 %v916
  %1354 = vmatmul.mubr.bf16.gmra.mrb[0].mxu0 %v574
  %v1355 = vpop.f32.mrb[0].mxu0
  %v1356 = vadd.f32 %v1092, %v1355
  %v1357 = vpop.f32.mrb[0].mxu0
  %v1358 = vpop.f32.mrb[0].mxu0
  %v1359 = vadd.f32 %v1095, %v1358
  %v1360 = vpop.f32.mrb[0].mxu0
  %1361 = vmatprep.mubr.bf16.mxu0 %v919
  %1362 = vmatmul.mubr.bf16.gmra.mrb[0].mxu0 %v578
  %v1363 = vpop.f32.mrb[0].mxu0
  %v1364 = vadd.f32 %v1100, %v1363
  %v1365 = vpop.f32.mrb[0].mxu0
  %v1366 = vpop.f32.mrb[0].mxu0
  %v1367 = vadd.f32 %v1103, %v1366
  %v1368 = vpop.f32.mrb[0].mxu0
  %1369 = vmatprep.mubr.bf16.mxu0 %v922
  %1370 = vmatmul.mubr.bf16.gmra.mrb[0].mxu0 %v582
  %v1371 = vpop.f32.mrb[0].mxu0
  %v1372 = vadd.f32 %v1108, %v1371
  %v1373 = vpop.f32.mrb[0].mxu0
  %v1374 = vpop.f32.mrb[0].mxu0
  %v1375 = vadd.f32 %v1111, %v1374
  %v1376 = vpop.f32.mrb[0].mxu0
  %1377 = vmatprep.mubr.bf16.mxu0 %v925
  %1378 = vmatmul.mubr.bf16.gmra.mrb[0].mxu0 %v586
  %v1379 = vpop.f32.mrb[0].mxu0
  %v1380 = vadd.f32 %v1116, %v1379
  %v1381 = vpop.f32.mrb[0].mxu0
  %v1382 = vpop.f32.mrb[0].mxu0
  %v1383 = vadd.f32 %v1119, %v1382
  %v1384 = vpop.f32.mrb[0].mxu0
  %1385 = vmatprep.mubr.bf16.mxu0 %v928
  %1386 = vmatmul.mubr.bf16.gmra.mrb[0].mxu0 %v590
  %v1387 = vpop.f32.mrb[0].mxu0
  %v1388 = vadd.f32 %v1124, %v1387
  %v1389 = vpop.f32.mrb[0].mxu0
  %v1390 = vpop.f32.mrb[0].mxu0
  %v1391 = vadd.f32 %v1127, %v1390
  %v1392 = vpop.f32.mrb[0].mxu0
  %1393 = vmatprep.mubr.bf16.mxu0 %v931
  %1394 = vmatmul.mubr.bf16.gmra.mrb[0].mxu0 %v594
  %v1395 = vpop.f32.mrb[0].mxu0
  %v1396 = vadd.f32 %v1132, %v1395
  %v1397 = vpop.f32.mrb[0].mxu0
  %v1398 = vpop.f32.mrb[0].mxu0
  %v1399 = vadd.f32 %v1135, %v1398
  %v1400 = vpop.f32.mrb[0].mxu0
  %1401 = vmatprep.mubr.bf16.mxu0 %v934
  %1402 = vmatmul.mubr.bf16.gmra.mrb[0].mxu0 %v598
  %v1403 = vpop.f32.mrb[0].mxu0
  %v1404 = vadd.f32 %v1140, %v1403
  %v1405 = vpop.f32.mrb[0].mxu0
  %v1406 = vpop.f32.mrb[0].mxu0
  %v1407 = vadd.f32 %v1143, %v1406
  %v1408 = vpop.f32.mrb[0].mxu0
  %1409 = vmatprep.mubr.bf16.mxu0 %v937
  %1410 = vmatmul.mubr.bf16.gmra.mrb[0].mxu0 %v602
  %v1411 = vpop.f32.mrb[0].mxu0
  %v1412 = vadd.f32 %v1148, %v1411
  %v1413 = vpop.f32.mrb[0].mxu0
  %v1414 = vpop.f32.mrb[0].mxu0
  %v1415 = vadd.f32 %v1151, %v1414
  %v1416 = vpop.f32.mrb[0].mxu0
  %1417 = vmatprep.mubr.bf16.mxu0 %v940
  %1418 = vmatmul.mubr.bf16.gmra.mrb[0].mxu0 %v606
  %v1419 = vpop.f32.mrb[0].mxu0
  %v1420 = vadd.f32 %v1156, %v1419
  %v1421 = vpop.f32.mrb[0].mxu0
  %v1422 = vpop.f32.mrb[0].mxu0
  %v1423 = vadd.f32 %v1159, %v1422
  %v1424 = vpop.f32.mrb[0].mxu0
  %1425 = vmatprep.mubr.bf16.mxu0 %v943
  %1426 = vmatmul.mubr.bf16.gmra.mrb[0].mxu0 %v610
  %v1427 = vpop.f32.mrb[0].mxu0
  %v1428 = vadd.f32 %v1164, %v1427
  %v1429 = vpop.f32.mrb[0].mxu0
  %v1430 = vpop.f32.mrb[0].mxu0
  %v1431 = vadd.f32 %v1167, %v1430
  %v1432 = vpop.f32.mrb[0].mxu0
  %1433 = vmatprep.mubr.bf16.mxu0 %v946
  %1434 = vmatmul.mubr.bf16.gmra.mrb[0].mxu0 %v614
  %v1435 = vpop.f32.mrb[0].mxu0
  %v1436 = vadd.f32 %v1172, %v1435
  %v1437 = vpop.f32.mrb[0].mxu0
  %v1438 = vpop.f32.mrb[0].mxu0
  %v1439 = vadd.f32 %v1175, %v1438
  %v1440 = vpop.f32.mrb[0].mxu0
  %1441 = vmatprep.mubr.bf16.mxu0 %v949
  %1442 = vmatmul.mubr.bf16.gmra.mrb[0].mxu0 %v618
  %v1443 = vpop.f32.mrb[0].mxu0
  %v1444 = vadd.f32 %v1180, %v1443
  %v1445 = vpop.f32.mrb[0].mxu0
  %v1446 = vpop.f32.mrb[0].mxu0
  %v1447 = vadd.f32 %v1183, %v1446
  %v1448 = vpop.f32.mrb[0].mxu0
  %1449 = vmatprep.mubr.bf16.mxu0 %v952
  %1450 = vmatmul.mubr.bf16.gmra.mrb[0].mxu0 %v622
  %v1451 = vpop.f32.mrb[0].mxu0
  %v1452 = vadd.f32 %v1188, %v1451
  %v1453 = vpop.f32.mrb[0].mxu0
  %v1454 = vpop.f32.mrb[0].mxu0
  %v1455 = vadd.f32 %v1191, %v1454
  %v1456 = vpop.f32.mrb[0].mxu0
  %1457 = vmatprep.mubr.bf16.mxu0 %v955
  %1458 = vmatmul.mubr.bf16.gmra.mrb[0].mxu0 %v626
  %v1459 = vpop.f32.mrb[0].mxu0
  %v1460 = vadd.f32 %v1196, %v1459
  %v1461 = vpop.f32.mrb[0].mxu0
  %v1462 = vpop.f32.mrb[0].mxu0
  %v1463 = vadd.f32 %v1199, %v1462
  %v1464 = vpop.f32.mrb[0].mxu0
  %1465 = vmatprep.mubr.bf16.mxu0 %v958
  %1466 = vmatmul.mubr.bf16.gmra.mrb[0].mxu0 %v630
  %v1467 = vpop.f32.mrb[0].mxu0
  %v1468 = vadd.f32 %v1204, %v1467
  %v1469 = vpop.f32.mrb[0].mxu0
  %v1470 = vpop.f32.mrb[0].mxu0
  %v1471 = vadd.f32 %v1207, %v1470
  %v1472 = vpop.f32.mrb[0].mxu0
  %1473 = vmatprep.mubr.bf16.mxu0 %v961
  %1474 = vmatmul.mubr.bf16.gmra.mrb[0].mxu0 %v634
  %v1475 = vpop.f32.mrb[0].mxu0
  %v1476 = vadd.f32 %v1212, %v1475
  %v1477 = vpop.f32.mrb[0].mxu0
  %v1478 = vpop.f32.mrb[0].mxu0
  %v1479 = vadd.f32 %v1215, %v1478
  %v1480 = vpop.f32.mrb[0].mxu0
  %1481 = vmatprep.mubr.bf16.mxu0 %v964
  %1482 = vmatmul.mubr.bf16.gmra.mrb[0].mxu0 %v638
  %v1483 = vpop.f32.mrb[0].mxu0
  %v1484 = vadd.f32 %v1220, %v1483
  %v1485 = vpop.f32.mrb[0].mxu0
  %v1486 = vpop.f32.mrb[0].mxu0
  %v1487 = vadd.f32 %v1223, %v1486
  %v1488 = vpop.f32.mrb[0].mxu0
  %1489 = vmatprep.mubr.bf16.mxu0 %v967
  %1490 = vmatmul.mubr.bf16.gmra.mrb[0].mxu0 %v642
  %v1491 = vpop.f32.mrb[0].mxu0
  %v1492 = vadd.f32 %v1228, %v1491
  %v1493 = vpop.f32.mrb[0].mxu0
  %v1494 = vpop.f32.mrb[0].mxu0
  %v1495 = vpop.f32.mrb[0].mxu0
  %1496 = vdwg.mxu0
  %v1497 = vmax.f32 %v1268, 0.0
  %v1498 = vmax.f32 %v1271, 0.0
  %v1499 = vmax.f32 %v1276, 0.0
  %v1500 = vmax.f32 %v1279, 0.0
  %v1501 = vmax.f32 %v1284, 0.0
  %v1502 = vmax.f32 %v1287, 0.0
  %v1503 = vmax.f32 %v1292, 0.0
  %v1504 = vmax.f32 %v1295, 0.0
  %v1505 = vmax.f32 %v1300, 0.0
  %v1506 = vmax.f32 %v1303, 0.0
  %v1507 = vmax.f32 %v1308, 0.0
  %v1508 = vmax.f32 %v1311, 0.0
  %v1509 = vmax.f32 %v1316, 0.0
  %v1510 = vmax.f32 %v1319, 0.0
  %v1511 = vmax.f32 %v1324, 0.0
  %v1512 = vmax.f32 %v1327, 0.0
  %v1513 = vmax.f32 %v1332, 0.0
  %v1514 = vmax.f32 %v1335, 0.0
  %v1515 = vmax.f32 %v1340, 0.0
  %v1516 = vmax.f32 %v1343, 0.0
  %v1517 = vmax.f32 %v1348, 0.0
  %v1518 = vmax.f32 %v1351, 0.0
  %v1519 = vmax.f32 %v1356, 0.0
  %v1520 = vmax.f32 %v1359, 0.0
  %v1521 = vmax.f32 %v1364, 0.0
  %v1522 = vmax.f32 %v1367, 0.0
  %v1523 = vmax.f32 %v1372, 0.0
  %v1524 = vmax.f32 %v1375, 0.0
  %v1525 = vmax.f32 %v1380, 0.0
  %v1526 = vmax.f32 %v1383, 0.0
  %v1527 = vmax.f32 %v1388, 0.0
  %v1528 = vmax.f32 %v1391, 0.0
  %v1529 = vmax.f32 %v1396, 0.0
  %v1530 = vmax.f32 %v1399, 0.0
  %v1531 = vmax.f32 %v1404, 0.0
  %v1532 = vmax.f32 %v1407, 0.0
  %v1533 = vmax.f32 %v1412, 0.0
  %v1534 = vmax.f32 %v1415, 0.0
  %v1535 = vmax.f32 %v1420, 0.0
  %v1536 = vmax.f32 %v1423, 0.0
  %v1537 = vmax.f32 %v1428, 0.0
  %v1538 = vmax.f32 %v1431, 0.0
  %v1539 = vmax.f32 %v1436, 0.0
  %v1540 = vmax.f32 %v1439, 0.0
  %v1541 = vmax.f32 %v1444, 0.0
  %v1542 = vmax.f32 %v1447, 0.0
  %v1543 = vmax.f32 %v1452, 0.0
  %v1544 = vmax.f32 %v1455, 0.0
  %v1545 = vmax.f32 %v1460, 0.0
  %v1546 = vmax.f32 %v1463, 0.0
  %v1547 = vmax.f32 %v1468, 0.0
  %v1548 = vmax.f32 %v1471, 0.0
  %v1549 = vmax.f32 %v1476, 0.0
  %v1550 = vmax.f32 %v1479, 0.0
  %v1551 = vmax.f32 %v1484, 0.0
  %v1552 = vmax.f32 %v1487, 0.0
  %v1553 = vmax.f32 %v1492, 0.0
  %vm1554 = vcmask 64512
  %1555 = vst.msk [vmem:[%s3] sm:$0xff] %vm1554, %v1497
  %1556 = vst.msk [vmem:[%s3 + $0x8] sm:$0xff] %vm1554, %v1498
  %1557 = vst.msk [vmem:[%s3 + $0x10] sm:$0xff] %vm1554, %v1499
  %1558 = vst.msk [vmem:[%s3 + $0x18] sm:$0xff] %vm1554, %v1500
  %1559 = vst.msk [vmem:[%s3 + $0x20] sm:$0xff] %vm1554, %v1501
  %1560 = vst.msk [vmem:[%s3 + $0x28] sm:$0xff] %vm1554, %v1502
  %1561 = vst.msk [vmem:[%s3 + $0x30] sm:$0xff] %vm1554, %v1503
  %1562 = vst.msk [vmem:[%s3 + $0x38] sm:$0xff] %vm1554, %v1504
  %1563 = vst.msk [vmem:[%s3 + $0x40] sm:$0xff] %vm1554, %v1505
  %1564 = vst.msk [vmem:[%s3 + $0x48] sm:$0xff] %vm1554, %v1506
  %1565 = vst.msk [vmem:[%s3 + $0x50] sm:$0xff] %vm1554, %v1507
  %1566 = vst.msk [vmem:[%s3 + $0x58] sm:$0xff] %vm1554, %v1508
  %1567 = vst.msk [vmem:[%s3 + $0x60] sm:$0xff] %vm1554, %v1509
  %1568 = vst.msk [vmem:[%s3 + $0x68] sm:$0xff] %vm1554, %v1510
  %1569 = vst.msk [vmem:[%s3 + $0x70] sm:$0xff] %vm1554, %v1511
  %1570 = vst.msk [vmem:[%s3 + $0x78] sm:$0xff] %vm1554, %v1512
  %1571 = vst.msk [vmem:[%s3 + $0x80] sm:$0xff] %vm1554, %v1513
  %1572 = vst.msk [vmem:[%s3 + $0x88] sm:$0xff] %vm1554, %v1514
  %1573 = vst.msk [vmem:[%s3 + $0x90] sm:$0xff] %vm1554, %v1515
  %1574 = vst.msk [vmem:[%s3 + $0x98] sm:$0xff] %vm1554, %v1516
  %1575 = vst.msk [vmem:[%s3 + $0xa0] sm:$0xff] %vm1554, %v1517
  %1576 = vst.msk [vmem:[%s3 + $0xa8] sm:$0xff] %vm1554, %v1518
  %1577 = vst.msk [vmem:[%s3 + $0xb0] sm:$0xff] %vm1554, %v1519
  %1578 = vst.msk [vmem:[%s3 + $0xb8] sm:$0xff] %vm1554, %v1520
  %1579 = vst.msk [vmem:[%s3 + $0xc0] sm:$0xff] %vm1554, %v1521
  %1580 = vst.msk [vmem:[%s3 + $0xc8] sm:$0xff] %vm1554, %v1522
  %1581 = vst.msk [vmem:[%s3 + $0xd0] sm:$0xff] %vm1554, %v1523
  %1582 = vst.msk [vmem:[%s3 + $0xd8] sm:$0xff] %vm1554, %v1524
  %1583 = vst.msk [vmem:[%s3 + $0xe0] sm:$0xff] %vm1554, %v1525
  %1584 = vst.msk [vmem:[%s3 + $0xe8] sm:$0xff] %vm1554, %v1526
  %1585 = vst.msk [vmem:[%s3 + $0xf0] sm:$0xff] %vm1554, %v1527
  %1586 = vst.msk [vmem:[%s3 + $0xf8] sm:$0xff] %vm1554, %v1528
  %1587 = vst.msk [vmem:[%s3 + $0x100] sm:$0xff] %vm1554, %v1529
  %1588 = vst.msk [vmem:[%s3 + $0x108] sm:$0xff] %vm1554, %v1530
  %1589 = vst.msk [vmem:[%s3 + $0x110] sm:$0xff] %vm1554, %v1531
  %1590 = vst.msk [vmem:[%s3 + $0x118] sm:$0xff] %vm1554, %v1532
  %1591 = vst.msk [vmem:[%s3 + $0x120] sm:$0xff] %vm1554, %v1533
  %1592 = vst.msk [vmem:[%s3 + $0x128] sm:$0xff] %vm1554, %v1534
  %1593 = vst.msk [vmem:[%s3 + $0x130] sm:$0xff] %vm1554, %v1535
  %1594 = vst.msk [vmem:[%s3 + $0x138] sm:$0xff] %vm1554, %v1536
  %1595 = vst.msk [vmem:[%s3 + $0x140] sm:$0xff] %vm1554, %v1537
  %1596 = vst.msk [vmem:[%s3 + $0x148] sm:$0xff] %vm1554, %v1538
  %1597 = vst.msk [vmem:[%s3 + $0x150] sm:$0xff] %vm1554, %v1539
  %1598 = vst.msk [vmem:[%s3 + $0x158] sm:$0xff] %vm1554, %v1540
  %1599 = vst.msk [vmem:[%s3 + $0x160] sm:$0xff] %vm1554, %v1541
  %1600 = vst.msk [vmem:[%s3 + $0x168] sm:$0xff] %vm1554, %v1542
  %1601 = vst.msk [vmem:[%s3 + $0x170] sm:$0xff] %vm1554, %v1543
  %1602 = vst.msk [vmem:[%s3 + $0x178] sm:$0xff] %vm1554, %v1544
  %1603 = vst.msk [vmem:[%s3 + $0x180] sm:$0xff] %vm1554, %v1545
  %1604 = vst.msk [vmem:[%s3 + $0x188] sm:$0xff] %vm1554, %v1546
  %1605 = vst.msk [vmem:[%s3 + $0x190] sm:$0xff] %vm1554, %v1547
  %1606 = vst.msk [vmem:[%s3 + $0x198] sm:$0xff] %vm1554, %v1548
  %1607 = vst.msk [vmem:[%s3 + $0x1a0] sm:$0xff] %vm1554, %v1549
  %1608 = vst.msk [vmem:[%s3 + $0x1a8] sm:$0xff] %vm1554, %v1550
  %1609 = vst.msk [vmem:[%s3 + $0x1b0] sm:$0xff] %vm1554, %v1551
  %1610 = vst.msk [vmem:[%s3 + $0x1b8] sm:$0xff] %vm1554, %v1552
  %vm1611 = vcmask 58368
  %1612 = vst.msk [vmem:[%s3 + $0x1c0] sm:$0x3] %vm1611, %v1553
  // Predicated region
  $region14: #{autoencoder_forward.8} parent=0 // pred_check
    _
  $region15: #{autoencoder_forward.8} parent=0 // pred_check_branch
    %1614 = sbr.rel (0) target = $region17
  $region16: #{autoencoder_forward.8} parent=0 // pred_region
    _
  $region17: #{autoencoder_forward.8} parent=0 // pred_fallthru
    _
  // Predicated region
  $region18: #{autoencoder_forward.8} parent=0 // pred_check
    _
  $region19: #{autoencoder_forward.8} parent=0 // pred_check_branch
    %1616 = sbr.rel (0) target = $region21
  $region20: #{autoencoder_forward.8} parent=0 // pred_region
    _
  $region21: #{autoencoder_forward.8} parent=0 // pred_fallthru
    _

// kernel: autoencoder_forward.9
$region0: #{autoencoder_forward.9}
  #allocation0 [shape = 'u32[]', space=smem, size = 0x4, offset = 0x4, fixed_abs, tag = 'smem constant byte address 0x4 - core index']
  #allocation1 [shape = 'u32[144,128]{1,0:T(1,128)}', space=vmem, size = 0x12000, scoped, tag = 'internal scratch']
  %s0 = inlined_call_operand.vmem [shape: bf16[1568,32], index: 0, kind: input, shape index: {}]
  %s1 = inlined_call_operand.vmem [shape: bf16[32,4], index: 1, kind: input, shape index: {}]
  %s2 = inlined_call_operand.vmem [shape: f32[1,4], index: 2, kind: input, shape index: {}]
  %s3 = inlined_call_operand.vmem [shape: f32[1568,4], index: 3, kind: output, shape index: {}]
  %s4 = sld [smem:[#allocation0]]
  $region22: #{autoencoder_forward.9} parent=0
    _
  %s6 = ssub.s32 1, %s4
  %s7 = scalar_select 0, %s6, %s4
  // Predicated region
  $region2: #{autoencoder_forward.9} parent=0 // pred_check
    _
  $region3: #{autoencoder_forward.9} parent=0 // pred_check_branch
    %9 = sbr.rel (0) target = $region5
  $region4: #{autoencoder_forward.9} parent=0 // pred_region
    _
  $region5: #{autoencoder_forward.9} parent=0 // pred_fallthru
    _
  // Predicated region
  $region6: #{autoencoder_forward.9} parent=0 // pred_check
    _
  $region7: #{autoencoder_forward.9} parent=0 // pred_check_branch
    %11 = sbr.rel (0) target = $region9
  $region8: #{autoencoder_forward.9} parent=0 // pred_region
    _
  $region9: #{autoencoder_forward.9} parent=0 // pred_fallthru
    _
  // Predicated region
  $region10: #{autoencoder_forward.9} parent=0 // pred_check
    _
  $region11: #{autoencoder_forward.9} parent=0 // pred_check_branch
    %13 = sbr.rel (0) target = $region13
  $region12: #{autoencoder_forward.9} parent=0 // pred_region
    _
  $region13: #{autoencoder_forward.9} parent=0 // pred_fallthru
    _
  %v15 = vld [vmem:[%s0] sm:$0xf]
  %v16 = vld [vmem:[%s0 + $0x4] sm:$0xf]
  %v17 = vld [vmem:[%s0 + $0x8] sm:$0xf]
  %v18 = vld [vmem:[%s0 + $0xc] sm:$0xf]
  %v19 = vld [vmem:[%s0 + $0x10] sm:$0xf]
  %v20 = vld [vmem:[%s0 + $0x14] sm:$0xf]
  %v21 = vld [vmem:[%s0 + $0x18] sm:$0xf]
  %v22 = vld [vmem:[%s0 + $0x1c] sm:$0xf]
  %v23 = vld [vmem:[%s0 + $0x20] sm:$0xf]
  %v24 = vld [vmem:[%s0 + $0x24] sm:$0xf]
  %v25 = vld [vmem:[%s0 + $0x28] sm:$0xf]
  %v26 = vld [vmem:[%s0 + $0x2c] sm:$0xf]
  %v27 = vld [vmem:[%s0 + $0x30] sm:$0xf]
  %v28 = vld [vmem:[%s0 + $0x34] sm:$0xf]
  %v29 = vld [vmem:[%s0 + $0x38] sm:$0xf]
  %v30 = vld [vmem:[%s0 + $0x3c] sm:$0xf]
  %v31 = vld [vmem:[%s0 + $0x40] sm:$0xf]
  %v32 = vld [vmem:[%s0 + $0x44] sm:$0xf]
  %v33 = vld [vmem:[%s0 + $0x48] sm:$0xf]
  %v34 = vld [vmem:[%s0 + $0x4c] sm:$0xf]
  %v35 = vld [vmem:[%s0 + $0x50] sm:$0xf]
  %v36 = vld [vmem:[%s0 + $0x54] sm:$0xf]
  %v37 = vld [vmem:[%s0 + $0x58] sm:$0xf]
  %v38 = vld [vmem:[%s0 + $0x5c] sm:$0xf]
  %v39 = vld [vmem:[%s0 + $0x60] sm:$0xf]
  %v40 = vld [vmem:[%s0 + $0x64] sm:$0xf]
  %v41 = vld [vmem:[%s0 + $0x68] sm:$0xf]
  %v42 = vld [vmem:[%s0 + $0x6c] sm:$0xf]
  %v43 = vld [vmem:[%s0 + $0x70] sm:$0xf]
  %v44 = vld [vmem:[%s0 + $0x74] sm:$0xf]
  %v45 = vld [vmem:[%s0 + $0x78] sm:$0xf]
  %v46 = vld [vmem:[%s0 + $0x7c] sm:$0xf]
  %v47 = vld [vmem:[%s0 + $0x80] sm:$0xf]
  %v48 = vld [vmem:[%s0 + $0x84] sm:$0xf]
  %v49 = vld [vmem:[%s0 + $0x88] sm:$0xf]
  %v50 = vld [vmem:[%s0 + $0x8c] sm:$0xf]
  %v51 = vld [vmem:[%s0 + $0x90] sm:$0xf]
  %v52 = vld [vmem:[%s0 + $0x94] sm:$0xf]
  %v53 = vld [vmem:[%s0 + $0x98] sm:$0xf]
  %v54 = vld [vmem:[%s0 + $0x9c] sm:$0xf]
  %v55 = vld [vmem:[%s0 + $0xa0] sm:$0xf]
  %v56 = vld [vmem:[%s0 + $0xa4] sm:$0xf]
  %v57 = vld [vmem:[%s0 + $0xa8] sm:$0xf]
  %v58 = vld [vmem:[%s0 + $0xac] sm:$0xf]
  %v59 = vld [vmem:[%s0 + $0xb0] sm:$0xf]
  %v60 = vld [vmem:[%s0 + $0xb4] sm:$0xf]
  %v61 = vld [vmem:[%s0 + $0xb8] sm:$0xf]
  %v62 = vld [vmem:[%s0 + $0xbc] sm:$0xf]
  %v63 = vld [vmem:[%s0 + $0xc0] sm:$0xf]
  %v64 = vld [vmem:[%s0 + $0xc4] sm:$0xf]
  %v65 = vld [vmem:[%s0 + $0xc8] sm:$0xf]
  %v66 = vld [vmem:[%s0 + $0xcc] sm:$0xf]
  %v67 = vld [vmem:[%s0 + $0xd0] sm:$0xf]
  %v68 = vld [vmem:[%s0 + $0xd4] sm:$0xf]
  %v69 = vld [vmem:[%s0 + $0xd8] sm:$0xf]
  %v70 = vld [vmem:[%s0 + $0xdc] sm:$0xf]
  %v71 = vld [vmem:[%s0 + $0xe0] sm:$0xf]
  %v72 = vld [vmem:[%s0 + $0xe4] sm:$0xf]
  %v73 = vld [vmem:[%s0 + $0xe8] sm:$0xf]
  %v74 = vld [vmem:[%s0 + $0xec] sm:$0xf]
  %v75 = vld [vmem:[%s0 + $0xf0] sm:$0xf]
  %v76 = vld [vmem:[%s0 + $0xf4] sm:$0xf]
  %v77 = vld [vmem:[%s0 + $0xf8] sm:$0xf]
  %v78 = vld [vmem:[%s0 + $0xfc] sm:$0xf]
  %v79 = vld [vmem:[%s0 + $0x100] sm:$0xf]
  %v80 = vld [vmem:[%s0 + $0x104] sm:$0xf]
  %v81 = vld [vmem:[%s0 + $0x108] sm:$0xf]
  %v82 = vld [vmem:[%s0 + $0x10c] sm:$0xf]
  %v83 = vld [vmem:[%s0 + $0x110] sm:$0xf]
  %v84 = vld [vmem:[%s0 + $0x114] sm:$0xf]
  %v85 = vld [vmem:[%s0 + $0x118] sm:$0xf]
  %v86 = vld [vmem:[%s0 + $0x11c] sm:$0xf]
  %v87 = vld [vmem:[%s0 + $0x120] sm:$0xf]
  %v88 = vld [vmem:[%s0 + $0x124] sm:$0xf]
  %v89 = vld [vmem:[%s0 + $0x128] sm:$0xf]
  %v90 = vld [vmem:[%s0 + $0x12c] sm:$0xf]
  %v91 = vld [vmem:[%s0 + $0x130] sm:$0xf]
  %v92 = vld [vmem:[%s0 + $0x134] sm:$0xf]
  %v93 = vld [vmem:[%s0 + $0x138] sm:$0xf]
  %v94 = vld [vmem:[%s0 + $0x13c] sm:$0xf]
  %v95 = vld [vmem:[%s0 + $0x140] sm:$0xf]
  %v96 = vld [vmem:[%s0 + $0x144] sm:$0xf]
  %v97 = vld [vmem:[%s0 + $0x148] sm:$0xf]
  %v98 = vld [vmem:[%s0 + $0x14c] sm:$0xf]
  %v99 = vld [vmem:[%s0 + $0x150] sm:$0xf]
  %v100 = vld [vmem:[%s0 + $0x154] sm:$0xf]
  %v101 = vld [vmem:[%s0 + $0x158] sm:$0xf]
  %v102 = vld [vmem:[%s0 + $0x15c] sm:$0xf]
  %v103 = vld [vmem:[%s0 + $0x160] sm:$0xf]
  %v104 = vld [vmem:[%s0 + $0x164] sm:$0xf]
  %v105 = vld [vmem:[%s0 + $0x168] sm:$0xf]
  %v106 = vld [vmem:[%s0 + $0x16c] sm:$0xf]
  %v107 = vld [vmem:[%s0 + $0x170] sm:$0xf]
  %v108 = vld [vmem:[%s0 + $0x174] sm:$0xf]
  %v109 = vld [vmem:[%s0 + $0x178] sm:$0xf]
  %v110 = vld [vmem:[%s0 + $0x17c] sm:$0xf]
  %v111 = vld [vmem:[%s0 + $0x180] sm:$0xf]
  %v112 = vld [vmem:[%s0 + $0x184] sm:$0xf]
  %v113 = vld [vmem:[%s0 + $0x188] sm:$0xf]
  %v114 = vld [vmem:[%s0 + $0x18c] sm:$0xf]
  %v115 = vld [vmem:[%s0 + $0x190] sm:$0xf]
  %v116 = vld [vmem:[%s0 + $0x194] sm:$0xf]
  %v117 = vld [vmem:[%s0 + $0x198] sm:$0xf]
  %v118 = vld [vmem:[%s0 + $0x19c] sm:$0xf]
  %v119 = vld [vmem:[%s0 + $0x1a0] sm:$0xf]
  %v120 = vld [vmem:[%s0 + $0x1a4] sm:$0xf]
  %v121 = vld [vmem:[%s0 + $0x1a8] sm:$0xf]
  %v122 = vld [vmem:[%s0 + $0x1ac] sm:$0xf]
  %v123 = vld [vmem:[%s0 + $0x1b0] sm:$0xf]
  %v124 = vld [vmem:[%s0 + $0x1b4] sm:$0xf]
  %v125 = vld [vmem:[%s0 + $0x1b8] sm:$0xf]
  %v126 = vld [vmem:[%s0 + $0x1bc] sm:$0xf]
  %v127 = vld [vmem:[%s0 + $0x1c0] sm:$0xf]
  %v128 = vld [vmem:[%s0 + $0x1c4] sm:$0xf]
  %v129 = vld [vmem:[%s0 + $0x1c8] sm:$0xf]
  %v130 = vld [vmem:[%s0 + $0x1cc] sm:$0xf]
  %v131 = vld [vmem:[%s0 + $0x1d0] sm:$0xf]
  %v132 = vld [vmem:[%s0 + $0x1d4] sm:$0xf]
  %v133 = vld [vmem:[%s0 + $0x1d8] sm:$0xf]
  %v134 = vld [vmem:[%s0 + $0x1dc] sm:$0xf]
  %v135 = vld [vmem:[%s0 + $0x1e0] sm:$0xf]
  %v136 = vld [vmem:[%s0 + $0x1e4] sm:$0xf]
  %v137 = vld [vmem:[%s0 + $0x1e8] sm:$0xf]
  %v138 = vld [vmem:[%s0 + $0x1ec] sm:$0xf]
  %v139 = vld [vmem:[%s0 + $0x1f0] sm:$0xf]
  %v140 = vld [vmem:[%s0 + $0x1f4] sm:$0xf]
  %v141 = vld [vmem:[%s0 + $0x1f8] sm:$0xf]
  %v142 = vld [vmem:[%s0 + $0x1fc] sm:$0xf]
  %v143 = vld [vmem:[%s0 + $0x200] sm:$0xf]
  %v144 = vld [vmem:[%s0 + $0x204] sm:$0xf]
  %v145 = vld [vmem:[%s0 + $0x208] sm:$0xf]
  %v146 = vld [vmem:[%s0 + $0x20c] sm:$0xf]
  %v147 = vld [vmem:[%s0 + $0x210] sm:$0xf]
  %v148 = vld [vmem:[%s0 + $0x214] sm:$0xf]
  %v149 = vld [vmem:[%s0 + $0x218] sm:$0xf]
  %v150 = vld [vmem:[%s0 + $0x21c] sm:$0xf]
  %v151 = vld [vmem:[%s0 + $0x220] sm:$0xf]
  %v152 = vld [vmem:[%s0 + $0x224] sm:$0xf]
  %v153 = vld [vmem:[%s0 + $0x228] sm:$0xf]
  %v154 = vld [vmem:[%s0 + $0x22c] sm:$0xf]
  %v155 = vld [vmem:[%s0 + $0x230] sm:$0xf]
  %v156 = vld [vmem:[%s0 + $0x234] sm:$0xf]
  %v157 = vld [vmem:[%s0 + $0x238] sm:$0xf]
  %v158 = vld [vmem:[%s0 + $0x23c] sm:$0xf]
  %v159 = vld [vmem:[%s0 + $0x240] sm:$0xf]
  %v160 = vld [vmem:[%s0 + $0x244] sm:$0xf]
  %v161 = vld [vmem:[%s0 + $0x248] sm:$0xf]
  %v162 = vld [vmem:[%s0 + $0x24c] sm:$0xf]
  %v163 = vld [vmem:[%s0 + $0x250] sm:$0xf]
  %v164 = vld [vmem:[%s0 + $0x254] sm:$0xf]
  %v165 = vld [vmem:[%s0 + $0x258] sm:$0xf]
  %v166 = vld [vmem:[%s0 + $0x25c] sm:$0xf]
  %v167 = vld [vmem:[%s0 + $0x260] sm:$0xf]
  %v168 = vld [vmem:[%s0 + $0x264] sm:$0xf]
  %v169 = vld [vmem:[%s0 + $0x268] sm:$0xf]
  %v170 = vld [vmem:[%s0 + $0x26c] sm:$0xf]
  %v171 = vld [vmem:[%s0 + $0x270] sm:$0xf]
  %v172 = vld [vmem:[%s0 + $0x274] sm:$0xf]
  %v173 = vld [vmem:[%s0 + $0x278] sm:$0xf]
  %v174 = vld [vmem:[%s0 + $0x27c] sm:$0xf]
  %v175 = vld [vmem:[%s0 + $0x280] sm:$0xf]
  %v176 = vld [vmem:[%s0 + $0x284] sm:$0xf]
  %v177 = vld [vmem:[%s0 + $0x288] sm:$0xf]
  %v178 = vld [vmem:[%s0 + $0x28c] sm:$0xf]
  %v179 = vld [vmem:[%s0 + $0x290] sm:$0xf]
  %v180 = vld [vmem:[%s0 + $0x294] sm:$0xf]
  %v181 = vld [vmem:[%s0 + $0x298] sm:$0xf]
  %v182 = vld [vmem:[%s0 + $0x29c] sm:$0xf]
  %v183 = vld [vmem:[%s0 + $0x2a0] sm:$0xf]
  %v184 = vld [vmem:[%s0 + $0x2a4] sm:$0xf]
  %v185 = vld [vmem:[%s0 + $0x2a8] sm:$0xf]
  %v186 = vld [vmem:[%s0 + $0x2ac] sm:$0xf]
  %v187 = vld [vmem:[%s0 + $0x2b0] sm:$0xf]
  %v188 = vld [vmem:[%s0 + $0x2b4] sm:$0xf]
  %v189 = vld [vmem:[%s0 + $0x2b8] sm:$0xf]
  %v190 = vld [vmem:[%s0 + $0x2bc] sm:$0xf]
  %v191 = vld [vmem:[%s0 + $0x2c0] sm:$0xf]
  %v192 = vld [vmem:[%s0 + $0x2c4] sm:$0xf]
  %v193 = vld [vmem:[%s0 + $0x2c8] sm:$0xf]
  %v194 = vld [vmem:[%s0 + $0x2cc] sm:$0xf]
  %v195 = vld [vmem:[%s0 + $0x2d0] sm:$0xf]
  %v196 = vld [vmem:[%s0 + $0x2d4] sm:$0xf]
  %v197 = vld [vmem:[%s0 + $0x2d8] sm:$0xf]
  %v198 = vld [vmem:[%s0 + $0x2dc] sm:$0xf]
  %v199 = vld [vmem:[%s0 + $0x2e0] sm:$0xf]
  %v200 = vld [vmem:[%s0 + $0x2e4] sm:$0xf]
  %v201 = vld [vmem:[%s0 + $0x2e8] sm:$0xf]
  %v202 = vld [vmem:[%s0 + $0x2ec] sm:$0xf]
  %v203 = vld [vmem:[%s0 + $0x2f0] sm:$0xf]
  %v204 = vld [vmem:[%s0 + $0x2f4] sm:$0xf]
  %v205 = vld [vmem:[%s0 + $0x2f8] sm:$0xf]
  %v206 = vld [vmem:[%s0 + $0x2fc] sm:$0xf]
  %v207 = vld [vmem:[%s0 + $0x300] sm:$0xf]
  %v208 = vld [vmem:[%s0 + $0x304] sm:$0xf]
  %v209 = vld [vmem:[%s0 + $0x308] sm:$0xf]
  %v210 = vld [vmem:[%s0 + $0x30c] sm:$0xf]
  %v211 = vld [vmem:[%s1] sm:$0xf]
  %v212 = vld [vmem:[%s1 + $0x4] sm:$0xf]
  %v213 = vld [vmem:[%s1 + $0x8] sm:$0xf]
  %v214 = vld [vmem:[%s1 + $0xc] sm:$0xf]
  %v215 = vld [vmem:[%s2] sm:$0x1]
  %v217 = vlaneseq
  %v218 = vshrl.u32 %v217, 7
  %v219 = vsub.s32 0, %v218
  %v220 = vrot.slane %v215, %v219
  %v418 = vunpack.c.l.b16 %v15
  %v419 = vunpack.c.l.b16 %v16
  %v420 = vunpack.c.l.b16 %v17
  %v421 = vunpack.c.l.b16 %v18
  %v422 = vunpack.c.l.b16 %v19
  %v423 = vunpack.c.l.b16 %v20
  %v424 = vunpack.c.l.b16 %v21
  %v425 = vunpack.c.l.b16 %v22
  %v426 = vunpack.c.l.b16 %v23
  %v427 = vunpack.c.l.b16 %v24
  %v428 = vunpack.c.l.b16 %v25
  %v429 = vunpack.c.l.b16 %v26
  %v430 = vunpack.c.l.b16 %v27
  %v431 = vunpack.c.l.b16 %v28
  %v432 = vunpack.c.l.b16 %v29
  %v433 = vunpack.c.l.b16 %v30
  %v434 = vunpack.c.l.b16 %v31
  %v435 = vunpack.c.l.b16 %v32
  %v436 = vunpack.c.l.b16 %v33
  %v437 = vunpack.c.l.b16 %v34
  %v438 = vunpack.c.l.b16 %v35
  %v439 = vunpack.c.l.b16 %v36
  %v440 = vunpack.c.l.b16 %v37
  %v441 = vunpack.c.l.b16 %v38
  %v442 = vunpack.c.l.b16 %v39
  %v443 = vunpack.c.l.b16 %v40
  %v444 = vunpack.c.l.b16 %v41
  %v445 = vunpack.c.l.b16 %v42
  %v446 = vunpack.c.l.b16 %v43
  %v447 = vunpack.c.l.b16 %v44
  %v448 = vunpack.c.l.b16 %v45
  %v449 = vunpack.c.l.b16 %v46
  %v450 = vunpack.c.l.b16 %v47
  %v451 = vunpack.c.l.b16 %v48
  %v452 = vunpack.c.l.b16 %v49
  %v453 = vunpack.c.l.b16 %v50
  %v454 = vunpack.c.l.b16 %v51
  %v455 = vunpack.c.l.b16 %v52
  %v456 = vunpack.c.l.b16 %v53
  %v457 = vunpack.c.l.b16 %v54
  %v458 = vunpack.c.l.b16 %v55
  %v459 = vunpack.c.l.b16 %v56
  %v460 = vunpack.c.l.b16 %v57
  %v461 = vunpack.c.l.b16 %v58
  %v462 = vunpack.c.l.b16 %v59
  %v463 = vunpack.c.l.b16 %v60
  %v464 = vunpack.c.l.b16 %v61
  %v465 = vunpack.c.l.b16 %v62
  %v466 = vunpack.c.l.b16 %v63
  %v467 = vunpack.c.l.b16 %v64
  %v468 = vunpack.c.l.b16 %v65
  %v469 = vunpack.c.l.b16 %v66
  %v470 = vunpack.c.l.b16 %v67
  %v471 = vunpack.c.l.b16 %v68
  %v472 = vunpack.c.l.b16 %v69
  %v473 = vunpack.c.l.b16 %v70
  %v474 = vunpack.c.l.b16 %v71
  %v475 = vunpack.c.l.b16 %v72
  %v476 = vunpack.c.l.b16 %v73
  %v477 = vunpack.c.l.b16 %v74
  %v478 = vunpack.c.l.b16 %v75
  %v479 = vunpack.c.l.b16 %v76
  %v480 = vunpack.c.l.b16 %v77
  %v481 = vunpack.c.l.b16 %v78
  %v482 = vunpack.c.l.b16 %v79
  %v483 = vunpack.c.l.b16 %v80
  %v484 = vunpack.c.l.b16 %v81
  %v485 = vunpack.c.l.b16 %v82
  %v486 = vunpack.c.l.b16 %v83
  %v487 = vunpack.c.l.b16 %v84
  %v488 = vunpack.c.l.b16 %v85
  %v489 = vunpack.c.l.b16 %v86
  %v490 = vunpack.c.l.b16 %v87
  %v491 = vunpack.c.l.b16 %v88
  %v492 = vunpack.c.l.b16 %v89
  %v493 = vunpack.c.l.b16 %v90
  %v494 = vunpack.c.l.b16 %v91
  %v495 = vunpack.c.l.b16 %v92
  %v496 = vunpack.c.l.b16 %v93
  %v497 = vunpack.c.l.b16 %v94
  %v498 = vunpack.c.l.b16 %v95
  %v499 = vunpack.c.l.b16 %v96
  %v500 = vunpack.c.l.b16 %v97
  %v501 = vunpack.c.l.b16 %v98
  %v502 = vunpack.c.l.b16 %v99
  %v503 = vunpack.c.l.b16 %v100
  %v504 = vunpack.c.l.b16 %v101
  %v505 = vunpack.c.l.b16 %v102
  %v506 = vunpack.c.l.b16 %v103
  %v507 = vunpack.c.l.b16 %v104
  %v508 = vunpack.c.l.b16 %v105
  %v509 = vunpack.c.l.b16 %v106
  %v510 = vunpack.c.l.b16 %v107
  %v511 = vunpack.c.l.b16 %v108
  %v512 = vunpack.c.l.b16 %v109
  %v513 = vunpack.c.l.b16 %v110
  %v514 = vunpack.c.l.b16 %v111
  %v515 = vunpack.c.l.b16 %v112
  %v516 = vunpack.c.l.b16 %v113
  %v517 = vunpack.c.l.b16 %v114
  %v518 = vunpack.c.l.b16 %v115
  %v519 = vunpack.c.l.b16 %v116
  %v520 = vunpack.c.l.b16 %v117
  %v521 = vunpack.c.l.b16 %v118
  %v522 = vunpack.c.l.b16 %v119
  %v523 = vunpack.c.l.b16 %v120
  %v524 = vunpack.c.l.b16 %v121
  %v525 = vunpack.c.l.b16 %v122
  %v526 = vunpack.c.l.b16 %v123
  %v527 = vunpack.c.l.b16 %v124
  %v528 = vunpack.c.l.b16 %v125
  %v529 = vunpack.c.l.b16 %v126
  %v530 = vunpack.c.l.b16 %v127
  %v531 = vunpack.c.l.b16 %v128
  %v532 = vunpack.c.l.b16 %v129
  %v533 = vunpack.c.l.b16 %v130
  %v534 = vunpack.c.l.b16 %v131
  %v535 = vunpack.c.l.b16 %v132
  %v536 = vunpack.c.l.b16 %v133
  %v537 = vunpack.c.l.b16 %v134
  %v538 = vunpack.c.l.b16 %v135
  %v539 = vunpack.c.l.b16 %v136
  %v540 = vunpack.c.l.b16 %v137
  %v541 = vunpack.c.l.b16 %v138
  %v542 = vunpack.c.l.b16 %v139
  %v543 = vunpack.c.l.b16 %v140
  %v544 = vunpack.c.l.b16 %v141
  %v545 = vunpack.c.l.b16 %v142
  %v546 = vunpack.c.l.b16 %v143
  %v547 = vunpack.c.l.b16 %v144
  %v548 = vunpack.c.l.b16 %v145
  %v549 = vunpack.c.l.b16 %v146
  %v550 = vunpack.c.l.b16 %v147
  %v551 = vunpack.c.l.b16 %v148
  %v552 = vunpack.c.l.b16 %v149
  %v553 = vunpack.c.l.b16 %v150
  %v554 = vunpack.c.l.b16 %v151
  %v555 = vunpack.c.l.b16 %v152
  %v556 = vunpack.c.l.b16 %v153
  %v557 = vunpack.c.l.b16 %v154
  %v558 = vunpack.c.l.b16 %v155
  %v559 = vunpack.c.l.b16 %v156
  %v560 = vunpack.c.l.b16 %v157
  %v561 = vunpack.c.l.b16 %v158
  %v562 = vunpack.c.l.b16 %v159
  %v563 = vunpack.c.l.b16 %v160
  %v564 = vunpack.c.l.b16 %v161
  %v565 = vunpack.c.l.b16 %v162
  %v566 = vunpack.c.l.b16 %v163
  %v567 = vunpack.c.l.b16 %v164
  %v568 = vunpack.c.l.b16 %v165
  %v569 = vunpack.c.l.b16 %v166
  %v570 = vunpack.c.l.b16 %v167
  %v571 = vunpack.c.l.b16 %v168
  %v572 = vunpack.c.l.b16 %v169
  %v573 = vunpack.c.l.b16 %v170
  %v574 = vunpack.c.l.b16 %v171
  %v575 = vunpack.c.l.b16 %v172
  %v576 = vunpack.c.l.b16 %v173
  %v577 = vunpack.c.l.b16 %v174
  %v578 = vunpack.c.l.b16 %v175
  %v579 = vunpack.c.l.b16 %v176
  %v580 = vunpack.c.l.b16 %v177
  %v581 = vunpack.c.l.b16 %v178
  %v582 = vunpack.c.l.b16 %v179
  %v583 = vunpack.c.l.b16 %v180
  %v584 = vunpack.c.l.b16 %v181
  %v585 = vunpack.c.l.b16 %v182
  %v586 = vunpack.c.l.b16 %v183
  %v587 = vunpack.c.l.b16 %v184
  %v588 = vunpack.c.l.b16 %v185
  %v589 = vunpack.c.l.b16 %v186
  %v590 = vunpack.c.l.b16 %v187
  %v591 = vunpack.c.l.b16 %v188
  %v592 = vunpack.c.l.b16 %v189
  %v593 = vunpack.c.l.b16 %v190
  %v594 = vunpack.c.l.b16 %v191
  %v595 = vunpack.c.l.b16 %v192
  %v596 = vunpack.c.l.b16 %v193
  %v597 = vunpack.c.l.b16 %v194
  %v598 = vunpack.c.l.b16 %v195
  %v599 = vunpack.c.l.b16 %v196
  %v600 = vunpack.c.l.b16 %v197
  %v601 = vunpack.c.l.b16 %v198
  %v602 = vunpack.c.l.b16 %v199
  %v603 = vunpack.c.l.b16 %v200
  %v604 = vunpack.c.l.b16 %v201
  %v605 = vunpack.c.l.b16 %v202
  %v606 = vunpack.c.l.b16 %v203
  %v607 = vunpack.c.l.b16 %v204
  %v608 = vunpack.c.l.b16 %v205
  %v609 = vunpack.c.l.b16 %v206
  %v610 = vunpack.c.l.b16 %v207
  %v611 = vunpack.c.l.b16 %v208
  %v612 = vunpack.c.l.b16 %v209
  %v613 = vunpack.c.l.b16 %v210
  %v614 = vpack.c.b16 %v419, %v418
  %v615 = vpack.c.b16 %v421, %v420
  %v616 = vpack.c.b16 %v423, %v422
  %v617 = vpack.c.b16 %v425, %v424
  %v618 = vpack.c.b16 %v427, %v426
  %v619 = vpack.c.b16 %v429, %v428
  %v620 = vpack.c.b16 %v431, %v430
  %v621 = vpack.c.b16 %v433, %v432
  %v622 = vpack.c.b16 %v435, %v434
  %v623 = vpack.c.b16 %v437, %v436
  %v624 = vpack.c.b16 %v439, %v438
  %v625 = vpack.c.b16 %v441, %v440
  %v626 = vpack.c.b16 %v443, %v442
  %v627 = vpack.c.b16 %v445, %v444
  %v628 = vpack.c.b16 %v447, %v446
  %v629 = vpack.c.b16 %v449, %v448
  %v630 = vpack.c.b16 %v451, %v450
  %v631 = vpack.c.b16 %v453, %v452
  %v632 = vpack.c.b16 %v455, %v454
  %v633 = vpack.c.b16 %v457, %v456
  %v634 = vpack.c.b16 %v459, %v458
  %v635 = vpack.c.b16 %v461, %v460
  %v636 = vpack.c.b16 %v463, %v462
  %v637 = vpack.c.b16 %v465, %v464
  %v638 = vpack.c.b16 %v467, %v466
  %v639 = vpack.c.b16 %v469, %v468
  %v640 = vpack.c.b16 %v471, %v470
  %v641 = vpack.c.b16 %v473, %v472
  %v642 = vpack.c.b16 %v475, %v474
  %v643 = vpack.c.b16 %v477, %v476
  %v644 = vpack.c.b16 %v479, %v478
  %v645 = vpack.c.b16 %v481, %v480
  %v646 = vpack.c.b16 %v483, %v482
  %v647 = vpack.c.b16 %v485, %v484
  %v648 = vpack.c.b16 %v487, %v486
  %v649 = vpack.c.b16 %v489, %v488
  %v650 = vpack.c.b16 %v491, %v490
  %v651 = vpack.c.b16 %v493, %v492
  %v652 = vpack.c.b16 %v495, %v494
  %v653 = vpack.c.b16 %v497, %v496
  %v654 = vpack.c.b16 %v499, %v498
  %v655 = vpack.c.b16 %v501, %v500
  %v656 = vpack.c.b16 %v503, %v502
  %v657 = vpack.c.b16 %v505, %v504
  %v658 = vpack.c.b16 %v507, %v506
  %v659 = vpack.c.b16 %v509, %v508
  %v660 = vpack.c.b16 %v511, %v510
  %v661 = vpack.c.b16 %v513, %v512
  %v662 = vpack.c.b16 %v515, %v514
  %v663 = vpack.c.b16 %v517, %v516
  %v664 = vpack.c.b16 %v519, %v518
  %v665 = vpack.c.b16 %v521, %v520
  %v666 = vpack.c.b16 %v523, %v522
  %v667 = vpack.c.b16 %v525, %v524
  %v668 = vpack.c.b16 %v527, %v526
  %v669 = vpack.c.b16 %v529, %v528
  %v670 = vpack.c.b16 %v531, %v530
  %v671 = vpack.c.b16 %v533, %v532
  %v672 = vpack.c.b16 %v535, %v534
  %v673 = vpack.c.b16 %v537, %v536
  %v674 = vpack.c.b16 %v539, %v538
  %v675 = vpack.c.b16 %v541, %v540
  %v676 = vpack.c.b16 %v543, %v542
  %v677 = vpack.c.b16 %v545, %v544
  %v678 = vpack.c.b16 %v547, %v546
  %v679 = vpack.c.b16 %v549, %v548
  %v680 = vpack.c.b16 %v551, %v550
  %v681 = vpack.c.b16 %v553, %v552
  %v682 = vpack.c.b16 %v555, %v554
  %v683 = vpack.c.b16 %v557, %v556
  %v684 = vpack.c.b16 %v559, %v558
  %v685 = vpack.c.b16 %v561, %v560
  %v686 = vpack.c.b16 %v563, %v562
  %v687 = vpack.c.b16 %v565, %v564
  %v688 = vpack.c.b16 %v567, %v566
  %v689 = vpack.c.b16 %v569, %v568
  %v690 = vpack.c.b16 %v571, %v570
  %v691 = vpack.c.b16 %v573, %v572
  %v692 = vpack.c.b16 %v575, %v574
  %v693 = vpack.c.b16 %v577, %v576
  %v694 = vpack.c.b16 %v579, %v578
  %v695 = vpack.c.b16 %v581, %v580
  %v696 = vpack.c.b16 %v583, %v582
  %v697 = vpack.c.b16 %v585, %v584
  %v698 = vpack.c.b16 %v587, %v586
  %v699 = vpack.c.b16 %v589, %v588
  %v700 = vpack.c.b16 %v591, %v590
  %v701 = vpack.c.b16 %v593, %v592
  %v702 = vpack.c.b16 %v595, %v594
  %v703 = vpack.c.b16 %v597, %v596
  %v704 = vpack.c.b16 %v599, %v598
  %v705 = vpack.c.b16 %v601, %v600
  %v706 = vpack.c.b16 %v603, %v602
  %v707 = vpack.c.b16 %v605, %v604
  %v708 = vpack.c.b16 %v607, %v606
  %v709 = vpack.c.b16 %v609, %v608
  %v710 = vpack.c.b16 %v611, %v610
  %v711 = vpack.c.b16 %v613, %v612
  %v716 = vunpack.c.l.b16 %v211
  %v717 = vunpack.c.l.b16 %v212
  %v718 = vunpack.c.l.b16 %v213
  %v719 = vunpack.c.l.b16 %v214
  %v720 = vpack.c.b16 %v717, %v716
  %v721 = vpack.c.b16 %v719, %v718
  %vm724 = vcmask 261120
  %v726 = vsel %vm724, %v614, 0
  %v729 = vsel %vm724, %v615, 0
  %v732 = vsel %vm724, %v616, 0
  %v735 = vsel %vm724, %v617, 0
  %v738 = vsel %vm724, %v618, 0
  %v741 = vsel %vm724, %v619, 0
  %v744 = vsel %vm724, %v620, 0
  %v747 = vsel %vm724, %v621, 0
  %v750 = vsel %vm724, %v622, 0
  %v753 = vsel %vm724, %v623, 0
  %v756 = vsel %vm724, %v624, 0
  %v759 = vsel %vm724, %v625, 0
  %v762 = vsel %vm724, %v626, 0
  %v765 = vsel %vm724, %v627, 0
  %v768 = vsel %vm724, %v628, 0
  %v771 = vsel %vm724, %v629, 0
  %v774 = vsel %vm724, %v630, 0
  %v777 = vsel %vm724, %v631, 0
  %v780 = vsel %vm724, %v632, 0
  %v783 = vsel %vm724, %v633, 0
  %v786 = vsel %vm724, %v634, 0
  %v789 = vsel %vm724, %v635, 0
  %v792 = vsel %vm724, %v636, 0
  %v795 = vsel %vm724, %v637, 0
  %v798 = vsel %vm724, %v638, 0
  %v801 = vsel %vm724, %v639, 0
  %v804 = vsel %vm724, %v640, 0
  %v807 = vsel %vm724, %v641, 0
  %v810 = vsel %vm724, %v642, 0
  %v813 = vsel %vm724, %v643, 0
  %v816 = vsel %vm724, %v644, 0
  %v819 = vsel %vm724, %v645, 0
  %v822 = vsel %vm724, %v646, 0
  %v825 = vsel %vm724, %v647, 0
  %v828 = vsel %vm724, %v648, 0
  %v831 = vsel %vm724, %v649, 0
  %v834 = vsel %vm724, %v650, 0
  %v837 = vsel %vm724, %v651, 0
  %v840 = vsel %vm724, %v652, 0
  %v843 = vsel %vm724, %v653, 0
  %v846 = vsel %vm724, %v654, 0
  %v849 = vsel %vm724, %v655, 0
  %v852 = vsel %vm724, %v656, 0
  %v855 = vsel %vm724, %v657, 0
  %v858 = vsel %vm724, %v658, 0
  %v861 = vsel %vm724, %v659, 0
  %v864 = vsel %vm724, %v660, 0
  %v867 = vsel %vm724, %v661, 0
  %v870 = vsel %vm724, %v662, 0
  %v873 = vsel %vm724, %v663, 0
  %v876 = vsel %vm724, %v664, 0
  %v879 = vsel %vm724, %v665, 0
  %v882 = vsel %vm724, %v666, 0
  %v885 = vsel %vm724, %v667, 0
  %v888 = vsel %vm724, %v668, 0
  %v891 = vsel %vm724, %v669, 0
  %v894 = vsel %vm724, %v670, 0
  %v897 = vsel %vm724, %v671, 0
  %v900 = vsel %vm724, %v672, 0
  %v903 = vsel %vm724, %v673, 0
  %v906 = vsel %vm724, %v674, 0
  %v909 = vsel %vm724, %v675, 0
  %v912 = vsel %vm724, %v676, 0
  %v915 = vsel %vm724, %v677, 0
  %v918 = vsel %vm724, %v678, 0
  %v921 = vsel %vm724, %v679, 0
  %v924 = vsel %vm724, %v680, 0
  %v927 = vsel %vm724, %v681, 0
  %v930 = vsel %vm724, %v682, 0
  %v933 = vsel %vm724, %v683, 0
  %v936 = vsel %vm724, %v684, 0
  %v939 = vsel %vm724, %v685, 0
  %v942 = vsel %vm724, %v686, 0
  %v945 = vsel %vm724, %v687, 0
  %v948 = vsel %vm724, %v688, 0
  %v951 = vsel %vm724, %v689, 0
  %v954 = vsel %vm724, %v690, 0
  %v957 = vsel %vm724, %v691, 0
  %v960 = vsel %vm724, %v692, 0
  %v963 = vsel %vm724, %v693, 0
  %v966 = vsel %vm724, %v694, 0
  %v969 = vsel %vm724, %v695, 0
  %v972 = vsel %vm724, %v696, 0
  %v975 = vsel %vm724, %v697, 0
  %v978 = vsel %vm724, %v698, 0
  %v981 = vsel %vm724, %v699, 0
  %v984 = vsel %vm724, %v700, 0
  %v987 = vsel %vm724, %v701, 0
  %v990 = vsel %vm724, %v702, 0
  %v993 = vsel %vm724, %v703, 0
  %v996 = vsel %vm724, %v704, 0
  %v999 = vsel %vm724, %v705, 0
  %v1002 = vsel %vm724, %v706, 0
  %v1005 = vsel %vm724, %v707, 0
  %v1008 = vsel %vm724, %v708, 0
  %v1011 = vsel %vm724, %v709, 0
  %v1014 = vsel %vm724, %v710, 0
  %v1017 = vsel %vm724, %v711, 0
  %1019 = vmatprep.subr.bf16.mxu0 0
  %1020 = vmatpush1.bf16.msra.mxu0 %v720
  %1021 = vmatprep.subr.bf16.mxu0 0
  %1022 = vmatpush1.bf16.msra.mxu0 %v721
  %1023 = vmatprep.subr.bf16.mxu0 0
  %1024 = vmatpush1.bf16.msra.mxu0 0
  %1025 = vmatprep.subr.bf16.mxu0 0
  %1026 = vmatpush1.bf16.msra.mxu0 0
  %1027 = vmatprep.subr.bf16.mxu0 0
  %1028 = vmatpush1.bf16.msra.mxu0 0
  %1029 = vmatprep.subr.bf16.mxu0 0
  %1030 = vmatpush1.bf16.msra.mxu0 0
  %1031 = vmatprep.subr.bf16.mxu0 0
  %1032 = vmatpush1.bf16.msra.mxu0 0
  %1033 = vmatprep.subr.bf16.mxu0 0
  %1034 = vmatpush1.bf16.msra.mxu0 0
  %1035 = vmatprep.subr.bf16.mxu0 0
  %1036 = vmatpush1.bf16.msra.mxu0 0
  %1037 = vmatprep.subr.bf16.mxu0 0
  %1038 = vmatpush1.bf16.msra.mxu0 0
  %1039 = vmatprep.subr.bf16.mxu0 0
  %1040 = vmatpush1.bf16.msra.mxu0 0
  %1041 = vmatprep.subr.bf16.mxu0 0
  %1042 = vmatpush1.bf16.msra.mxu0 0
  %1043 = vmatprep.subr.bf16.mxu0 0
  %1044 = vmatpush1.bf16.msra.mxu0 0
  %1045 = vmatprep.subr.bf16.mxu0 0
  %1046 = vmatpush1.bf16.msra.mxu0 0
  %1047 = vmatprep.subr.bf16.mxu0 0
  %1048 = vmatpush1.bf16.msra.mxu0 0
  %1049 = vmatprep.subr.bf16.mxu0 0
  %1050 = vmatpush1.bf16.msra.mxu0 0
  %1051 = vmatprep.mubr.bf16.mxu0 0
  %1052 = vmatmul.mubr.bf16.gmra.mrb[0].mxu0 %v726
  %v1053 = vpop.f32.mrb[0].mxu0
  %v1054 = vadd.f32 %v220, %v1053
  %v1055 = vpop.f32.mrb[0].mxu0
  %v1056 = vpop.f32.mrb[0].mxu0
  %v1057 = vadd.f32 %v220, %v1056
  %v1058 = vpop.f32.mrb[0].mxu0
  %1059 = vmatprep.mubr.bf16.mxu0 0
  %1060 = vmatmul.mubr.bf16.gmra.mrb[0].mxu0 %v729
  %v1061 = vpop.f32.mrb[0].mxu0
  %v1062 = vadd.f32 %v220, %v1061
  %v1063 = vpop.f32.mrb[0].mxu0
  %v1064 = vpop.f32.mrb[0].mxu0
  %v1065 = vadd.f32 %v220, %v1064
  %v1066 = vpop.f32.mrb[0].mxu0
  %1067 = vmatprep.mubr.bf16.mxu0 0
  %1068 = vmatmul.mubr.bf16.gmra.mrb[0].mxu0 %v732
  %v1069 = vpop.f32.mrb[0].mxu0
  %v1070 = vadd.f32 %v220, %v1069
  %v1071 = vpop.f32.mrb[0].mxu0
  %v1072 = vpop.f32.mrb[0].mxu0
  %v1073 = vadd.f32 %v220, %v1072
  %v1074 = vpop.f32.mrb[0].mxu0
  %1075 = vmatprep.mubr.bf16.mxu0 0
  %1076 = vmatmul.mubr.bf16.gmra.mrb[0].mxu0 %v735
  %v1077 = vpop.f32.mrb[0].mxu0
  %v1078 = vadd.f32 %v220, %v1077
  %v1079 = vpop.f32.mrb[0].mxu0
  %v1080 = vpop.f32.mrb[0].mxu0
  %v1081 = vadd.f32 %v220, %v1080
  %v1082 = vpop.f32.mrb[0].mxu0
  %1083 = vmatprep.mubr.bf16.mxu0 0
  %1084 = vmatmul.mubr.bf16.gmra.mrb[0].mxu0 %v738
  %v1085 = vpop.f32.mrb[0].mxu0
  %v1086 = vadd.f32 %v220, %v1085
  %v1087 = vpop.f32.mrb[0].mxu0
  %v1088 = vpop.f32.mrb[0].mxu0
  %v1089 = vadd.f32 %v220, %v1088
  %v1090 = vpop.f32.mrb[0].mxu0
  %1091 = vmatprep.mubr.bf16.mxu0 0
  %1092 = vmatmul.mubr.bf16.gmra.mrb[0].mxu0 %v741
  %v1093 = vpop.f32.mrb[0].mxu0
  %v1094 = vadd.f32 %v220, %v1093
  %v1095 = vpop.f32.mrb[0].mxu0
  %v1096 = vpop.f32.mrb[0].mxu0
  %v1097 = vadd.f32 %v220, %v1096
  %v1098 = vpop.f32.mrb[0].mxu0
  %1099 = vmatprep.mubr.bf16.mxu0 0
  %1100 = vmatmul.mubr.bf16.gmra.mrb[0].mxu0 %v744
  %v1101 = vpop.f32.mrb[0].mxu0
  %v1102 = vadd.f32 %v220, %v1101
  %v1103 = vpop.f32.mrb[0].mxu0
  %v1104 = vpop.f32.mrb[0].mxu0
  %v1105 = vadd.f32 %v220, %v1104
  %v1106 = vpop.f32.mrb[0].mxu0
  %1107 = vmatprep.mubr.bf16.mxu0 0
  %1108 = vmatmul.mubr.bf16.gmra.mrb[0].mxu0 %v747
  %v1109 = vpop.f32.mrb[0].mxu0
  %v1110 = vadd.f32 %v220, %v1109
  %v1111 = vpop.f32.mrb[0].mxu0
  %v1112 = vpop.f32.mrb[0].mxu0
  %v1113 = vadd.f32 %v220, %v1112
  %v1114 = vpop.f32.mrb[0].mxu0
  %1115 = vmatprep.mubr.bf16.mxu0 0
  %1116 = vmatmul.mubr.bf16.gmra.mrb[0].mxu0 %v750
  %v1117 = vpop.f32.mrb[0].mxu0
  %v1118 = vadd.f32 %v220, %v1117
  %v1119 = vpop.f32.mrb[0].mxu0
  %v1120 = vpop.f32.mrb[0].mxu0
  %v1121 = vadd.f32 %v220, %v1120
  %v1122 = vpop.f32.mrb[0].mxu0
  %1123 = vmatprep.mubr.bf16.mxu0 0
  %1124 = vmatmul.mubr.bf16.gmra.mrb[0].mxu0 %v753
  %v1125 = vpop.f32.mrb[0].mxu0
  %v1126 = vadd.f32 %v220, %v1125
  %v1127 = vpop.f32.mrb[0].mxu0
  %v1128 = vpop.f32.mrb[0].mxu0
  %v1129 = vadd.f32 %v220, %v1128
  %v1130 = vpop.f32.mrb[0].mxu0
  %1131 = vmatprep.mubr.bf16.mxu0 0
  %1132 = vmatmul.mubr.bf16.gmra.mrb[0].mxu0 %v756
  %v1133 = vpop.f32.mrb[0].mxu0
  %v1134 = vadd.f32 %v220, %v1133
  %v1135 = vpop.f32.mrb[0].mxu0
  %v1136 = vpop.f32.mrb[0].mxu0
  %v1137 = vadd.f32 %v220, %v1136
  %v1138 = vpop.f32.mrb[0].mxu0
  %1139 = vmatprep.mubr.bf16.mxu0 0
  %1140 = vmatmul.mubr.bf16.gmra.mrb[0].mxu0 %v759
  %v1141 = vpop.f32.mrb[0].mxu0
  %v1142 = vadd.f32 %v220, %v1141
  %v1143 = vpop.f32.mrb[0].mxu0
  %v1144 = vpop.f32.mrb[0].mxu0
  %v1145 = vadd.f32 %v220, %v1144
  %v1146 = vpop.f32.mrb[0].mxu0
  %1147 = vmatprep.mubr.bf16.mxu0 0
  %1148 = vmatmul.mubr.bf16.gmra.mrb[0].mxu0 %v762
  %v1149 = vpop.f32.mrb[0].mxu0
  %v1150 = vadd.f32 %v220, %v1149
  %v1151 = vpop.f32.mrb[0].mxu0
  %v1152 = vpop.f32.mrb[0].mxu0
  %v1153 = vadd.f32 %v220, %v1152
  %v1154 = vpop.f32.mrb[0].mxu0
  %1155 = vmatprep.mubr.bf16.mxu0 0
  %1156 = vmatmul.mubr.bf16.gmra.mrb[0].mxu0 %v765
  %v1157 = vpop.f32.mrb[0].mxu0
  %v1158 = vadd.f32 %v220, %v1157
  %v1159 = vpop.f32.mrb[0].mxu0
  %v1160 = vpop.f32.mrb[0].mxu0
  %v1161 = vadd.f32 %v220, %v1160
  %v1162 = vpop.f32.mrb[0].mxu0
  %1163 = vmatprep.mubr.bf16.mxu0 0
  %1164 = vmatmul.mubr.bf16.gmra.mrb[0].mxu0 %v768
  %v1165 = vpop.f32.mrb[0].mxu0
  %v1166 = vadd.f32 %v220, %v1165
  %v1167 = vpop.f32.mrb[0].mxu0
  %v1168 = vpop.f32.mrb[0].mxu0
  %v1169 = vadd.f32 %v220, %v1168
  %v1170 = vpop.f32.mrb[0].mxu0
  %1171 = vmatprep.mubr.bf16.mxu0 0
  %1172 = vmatmul.mubr.bf16.gmra.mrb[0].mxu0 %v771
  %v1173 = vpop.f32.mrb[0].mxu0
  %v1174 = vadd.f32 %v220, %v1173
  %v1175 = vpop.f32.mrb[0].mxu0
  %v1176 = vpop.f32.mrb[0].mxu0
  %v1177 = vadd.f32 %v220, %v1176
  %v1178 = vpop.f32.mrb[0].mxu0
  %1179 = vmatprep.mubr.bf16.mxu0 0
  %1180 = vmatmul.mubr.bf16.gmra.mrb[0].mxu0 %v774
  %v1181 = vpop.f32.mrb[0].mxu0
  %v1182 = vadd.f32 %v220, %v1181
  %v1183 = vpop.f32.mrb[0].mxu0
  %v1184 = vpop.f32.mrb[0].mxu0
  %v1185 = vadd.f32 %v220, %v1184
  %v1186 = vpop.f32.mrb[0].mxu0
  %1187 = vmatprep.mubr.bf16.mxu0 0
  %1188 = vmatmul.mubr.bf16.gmra.mrb[0].mxu0 %v777
  %v1189 = vpop.f32.mrb[0].mxu0
  %v1190 = vadd.f32 %v220, %v1189
  %v1191 = vpop.f32.mrb[0].mxu0
  %v1192 = vpop.f32.mrb[0].mxu0
  %v1193 = vadd.f32 %v220, %v1192
  %v1194 = vpop.f32.mrb[0].mxu0
  %1195 = vmatprep.mubr.bf16.mxu0 0
  %1196 = vmatmul.mubr.bf16.gmra.mrb[0].mxu0 %v780
  %v1197 = vpop.f32.mrb[0].mxu0
  %v1198 = vadd.f32 %v220, %v1197
  %v1199 = vpop.f32.mrb[0].mxu0
  %v1200 = vpop.f32.mrb[0].mxu0
  %v1201 = vadd.f32 %v220, %v1200
  %v1202 = vpop.f32.mrb[0].mxu0
  %1203 = vmatprep.mubr.bf16.mxu0 0
  %1204 = vmatmul.mubr.bf16.gmra.mrb[0].mxu0 %v783
  %v1205 = vpop.f32.mrb[0].mxu0
  %v1206 = vadd.f32 %v220, %v1205
  %v1207 = vpop.f32.mrb[0].mxu0
  %v1208 = vpop.f32.mrb[0].mxu0
  %v1209 = vadd.f32 %v220, %v1208
  %v1210 = vpop.f32.mrb[0].mxu0
  %1211 = vmatprep.mubr.bf16.mxu0 0
  %1212 = vmatmul.mubr.bf16.gmra.mrb[0].mxu0 %v786
  %v1213 = vpop.f32.mrb[0].mxu0
  %v1214 = vadd.f32 %v220, %v1213
  %v1215 = vpop.f32.mrb[0].mxu0
  %v1216 = vpop.f32.mrb[0].mxu0
  %v1217 = vadd.f32 %v220, %v1216
  %v1218 = vpop.f32.mrb[0].mxu0
  %1219 = vmatprep.mubr.bf16.mxu0 0
  %1220 = vmatmul.mubr.bf16.gmra.mrb[0].mxu0 %v789
  %v1221 = vpop.f32.mrb[0].mxu0
  %v1222 = vadd.f32 %v220, %v1221
  %v1223 = vpop.f32.mrb[0].mxu0
  %v1224 = vpop.f32.mrb[0].mxu0
  %v1225 = vadd.f32 %v220, %v1224
  %v1226 = vpop.f32.mrb[0].mxu0
  %1227 = vmatprep.mubr.bf16.mxu0 0
  %1228 = vmatmul.mubr.bf16.gmra.mrb[0].mxu0 %v792
  %v1229 = vpop.f32.mrb[0].mxu0
  %v1230 = vadd.f32 %v220, %v1229
  %v1231 = vpop.f32.mrb[0].mxu0
  %v1232 = vpop.f32.mrb[0].mxu0
  %v1233 = vadd.f32 %v220, %v1232
  %v1234 = vpop.f32.mrb[0].mxu0
  %1235 = vmatprep.mubr.bf16.mxu0 0
  %1236 = vmatmul.mubr.bf16.gmra.mrb[0].mxu0 %v795
  %v1237 = vpop.f32.mrb[0].mxu0
  %v1238 = vadd.f32 %v220, %v1237
  %v1239 = vpop.f32.mrb[0].mxu0
  %v1240 = vpop.f32.mrb[0].mxu0
  %v1241 = vadd.f32 %v220, %v1240
  %v1242 = vpop.f32.mrb[0].mxu0
  %1243 = vmatprep.mubr.bf16.mxu0 0
  %1244 = vmatmul.mubr.bf16.gmra.mrb[0].mxu0 %v798
  %v1245 = vpop.f32.mrb[0].mxu0
  %v1246 = vadd.f32 %v220, %v1245
  %v1247 = vpop.f32.mrb[0].mxu0
  %v1248 = vpop.f32.mrb[0].mxu0
  %v1249 = vadd.f32 %v220, %v1248
  %v1250 = vpop.f32.mrb[0].mxu0
  %1251 = vmatprep.mubr.bf16.mxu0 0
  %1252 = vmatmul.mubr.bf16.gmra.mrb[0].mxu0 %v801
  %v1253 = vpop.f32.mrb[0].mxu0
  %v1254 = vadd.f32 %v220, %v1253
  %v1255 = vpop.f32.mrb[0].mxu0
  %v1256 = vpop.f32.mrb[0].mxu0
  %v1257 = vadd.f32 %v220, %v1256
  %v1258 = vpop.f32.mrb[0].mxu0
  %1259 = vmatprep.mubr.bf16.mxu0 0
  %1260 = vmatmul.mubr.bf16.gmra.mrb[0].mxu0 %v804
  %v1261 = vpop.f32.mrb[0].mxu0
  %v1262 = vadd.f32 %v220, %v1261
  %v1263 = vpop.f32.mrb[0].mxu0
  %v1264 = vpop.f32.mrb[0].mxu0
  %v1265 = vadd.f32 %v220, %v1264
  %v1266 = vpop.f32.mrb[0].mxu0
  %1267 = vmatprep.mubr.bf16.mxu0 0
  %1268 = vmatmul.mubr.bf16.gmra.mrb[0].mxu0 %v807
  %v1269 = vpop.f32.mrb[0].mxu0
  %v1270 = vadd.f32 %v220, %v1269
  %v1271 = vpop.f32.mrb[0].mxu0
  %v1272 = vpop.f32.mrb[0].mxu0
  %v1273 = vadd.f32 %v220, %v1272
  %v1274 = vpop.f32.mrb[0].mxu0
  %1275 = vmatprep.mubr.bf16.mxu0 0
  %1276 = vmatmul.mubr.bf16.gmra.mrb[0].mxu0 %v810
  %v1277 = vpop.f32.mrb[0].mxu0
  %v1278 = vadd.f32 %v220, %v1277
  %v1279 = vpop.f32.mrb[0].mxu0
  %v1280 = vpop.f32.mrb[0].mxu0
  %v1281 = vadd.f32 %v220, %v1280
  %v1282 = vpop.f32.mrb[0].mxu0
  %1283 = vmatprep.mubr.bf16.mxu0 0
  %1284 = vmatmul.mubr.bf16.gmra.mrb[0].mxu0 %v813
  %v1285 = vpop.f32.mrb[0].mxu0
  %v1286 = vadd.f32 %v220, %v1285
  %v1287 = vpop.f32.mrb[0].mxu0
  %v1288 = vpop.f32.mrb[0].mxu0
  %v1289 = vadd.f32 %v220, %v1288
  %v1290 = vpop.f32.mrb[0].mxu0
  %1291 = vmatprep.mubr.bf16.mxu0 0
  %1292 = vmatmul.mubr.bf16.gmra.mrb[0].mxu0 %v816
  %v1293 = vpop.f32.mrb[0].mxu0
  %v1294 = vadd.f32 %v220, %v1293
  %v1295 = vpop.f32.mrb[0].mxu0
  %v1296 = vpop.f32.mrb[0].mxu0
  %v1297 = vadd.f32 %v220, %v1296
  %v1298 = vpop.f32.mrb[0].mxu0
  %1299 = vmatprep.mubr.bf16.mxu0 0
  %1300 = vmatmul.mubr.bf16.gmra.mrb[0].mxu0 %v819
  %v1301 = vpop.f32.mrb[0].mxu0
  %v1302 = vadd.f32 %v220, %v1301
  %v1303 = vpop.f32.mrb[0].mxu0
  %v1304 = vpop.f32.mrb[0].mxu0
  %v1305 = vadd.f32 %v220, %v1304
  %v1306 = vpop.f32.mrb[0].mxu0
  %1307 = vmatprep.mubr.bf16.mxu0 0
  %1308 = vmatmul.mubr.bf16.gmra.mrb[0].mxu0 %v822
  %v1309 = vpop.f32.mrb[0].mxu0
  %v1310 = vadd.f32 %v220, %v1309
  %v1311 = vpop.f32.mrb[0].mxu0
  %v1312 = vpop.f32.mrb[0].mxu0
  %v1313 = vadd.f32 %v220, %v1312
  %v1314 = vpop.f32.mrb[0].mxu0
  %1315 = vmatprep.mubr.bf16.mxu0 0
  %1316 = vmatmul.mubr.bf16.gmra.mrb[0].mxu0 %v825
  %v1317 = vpop.f32.mrb[0].mxu0
  %v1318 = vadd.f32 %v220, %v1317
  %v1319 = vpop.f32.mrb[0].mxu0
  %v1320 = vpop.f32.mrb[0].mxu0
  %v1321 = vadd.f32 %v220, %v1320
  %v1322 = vpop.f32.mrb[0].mxu0
  %1323 = vmatprep.mubr.bf16.mxu0 0
  %1324 = vmatmul.mubr.bf16.gmra.mrb[0].mxu0 %v828
  %v1325 = vpop.f32.mrb[0].mxu0
  %v1326 = vadd.f32 %v220, %v1325
  %v1327 = vpop.f32.mrb[0].mxu0
  %v1328 = vpop.f32.mrb[0].mxu0
  %v1329 = vadd.f32 %v220, %v1328
  %v1330 = vpop.f32.mrb[0].mxu0
  %1331 = vmatprep.mubr.bf16.mxu0 0
  %1332 = vmatmul.mubr.bf16.gmra.mrb[0].mxu0 %v831
  %v1333 = vpop.f32.mrb[0].mxu0
  %v1334 = vadd.f32 %v220, %v1333
  %v1335 = vpop.f32.mrb[0].mxu0
  %v1336 = vpop.f32.mrb[0].mxu0
  %v1337 = vadd.f32 %v220, %v1336
  %v1338 = vpop.f32.mrb[0].mxu0
  %1339 = vmatprep.mubr.bf16.mxu0 0
  %1340 = vmatmul.mubr.bf16.gmra.mrb[0].mxu0 %v834
  %v1341 = vpop.f32.mrb[0].mxu0
  %v1342 = vadd.f32 %v220, %v1341
  %v1343 = vpop.f32.mrb[0].mxu0
  %v1344 = vpop.f32.mrb[0].mxu0
  %v1345 = vadd.f32 %v220, %v1344
  %v1346 = vpop.f32.mrb[0].mxu0
  %1347 = vmatprep.mubr.bf16.mxu0 0
  %1348 = vmatmul.mubr.bf16.gmra.mrb[0].mxu0 %v837
  %v1349 = vpop.f32.mrb[0].mxu0
  %v1350 = vadd.f32 %v220, %v1349
  %v1351 = vpop.f32.mrb[0].mxu0
  %v1352 = vpop.f32.mrb[0].mxu0
  %v1353 = vadd.f32 %v220, %v1352
  %v1354 = vpop.f32.mrb[0].mxu0
  %1355 = vmatprep.mubr.bf16.mxu0 0
  %1356 = vmatmul.mubr.bf16.gmra.mrb[0].mxu0 %v840
  %v1357 = vpop.f32.mrb[0].mxu0
  %v1358 = vadd.f32 %v220, %v1357
  %v1359 = vpop.f32.mrb[0].mxu0
  %v1360 = vpop.f32.mrb[0].mxu0
  %v1361 = vadd.f32 %v220, %v1360
  %v1362 = vpop.f32.mrb[0].mxu0
  %1363 = vmatprep.mubr.bf16.mxu0 0
  %1364 = vmatmul.mubr.bf16.gmra.mrb[0].mxu0 %v843
  %v1365 = vpop.f32.mrb[0].mxu0
  %v1366 = vadd.f32 %v220, %v1365
  %v1367 = vpop.f32.mrb[0].mxu0
  %v1368 = vpop.f32.mrb[0].mxu0
  %v1369 = vadd.f32 %v220, %v1368
  %v1370 = vpop.f32.mrb[0].mxu0
  %1371 = vmatprep.mubr.bf16.mxu0 0
  %1372 = vmatmul.mubr.bf16.gmra.mrb[0].mxu0 %v846
  %v1373 = vpop.f32.mrb[0].mxu0
  %v1374 = vadd.f32 %v220, %v1373
  %v1375 = vpop.f32.mrb[0].mxu0
  %v1376 = vpop.f32.mrb[0].mxu0
  %v1377 = vadd.f32 %v220, %v1376
  %v1378 = vpop.f32.mrb[0].mxu0
  %1379 = vmatprep.mubr.bf16.mxu0 0
  %1380 = vmatmul.mubr.bf16.gmra.mrb[0].mxu0 %v849
  %v1381 = vpop.f32.mrb[0].mxu0
  %v1382 = vadd.f32 %v220, %v1381
  %v1383 = vpop.f32.mrb[0].mxu0
  %v1384 = vpop.f32.mrb[0].mxu0
  %v1385 = vadd.f32 %v220, %v1384
  %v1386 = vpop.f32.mrb[0].mxu0
  %1387 = vmatprep.mubr.bf16.mxu0 0
  %1388 = vmatmul.mubr.bf16.gmra.mrb[0].mxu0 %v852
  %v1389 = vpop.f32.mrb[0].mxu0
  %v1390 = vadd.f32 %v220, %v1389
  %v1391 = vpop.f32.mrb[0].mxu0
  %v1392 = vpop.f32.mrb[0].mxu0
  %v1393 = vadd.f32 %v220, %v1392
  %v1394 = vpop.f32.mrb[0].mxu0
  %1395 = vmatprep.mubr.bf16.mxu0 0
  %1396 = vmatmul.mubr.bf16.gmra.mrb[0].mxu0 %v855
  %v1397 = vpop.f32.mrb[0].mxu0
  %v1398 = vadd.f32 %v220, %v1397
  %v1399 = vpop.f32.mrb[0].mxu0
  %v1400 = vpop.f32.mrb[0].mxu0
  %v1401 = vadd.f32 %v220, %v1400
  %v1402 = vpop.f32.mrb[0].mxu0
  %1403 = vmatprep.mubr.bf16.mxu0 0
  %1404 = vmatmul.mubr.bf16.gmra.mrb[0].mxu0 %v858
  %v1405 = vpop.f32.mrb[0].mxu0
  %v1406 = vadd.f32 %v220, %v1405
  %v1407 = vpop.f32.mrb[0].mxu0
  %v1408 = vpop.f32.mrb[0].mxu0
  %v1409 = vadd.f32 %v220, %v1408
  %v1410 = vpop.f32.mrb[0].mxu0
  %1411 = vmatprep.mubr.bf16.mxu0 0
  %1412 = vmatmul.mubr.bf16.gmra.mrb[0].mxu0 %v861
  %v1413 = vpop.f32.mrb[0].mxu0
  %v1414 = vadd.f32 %v220, %v1413
  %v1415 = vpop.f32.mrb[0].mxu0
  %v1416 = vpop.f32.mrb[0].mxu0
  %v1417 = vadd.f32 %v220, %v1416
  %v1418 = vpop.f32.mrb[0].mxu0
  %1419 = vmatprep.mubr.bf16.mxu0 0
  %1420 = vmatmul.mubr.bf16.gmra.mrb[0].mxu0 %v864
  %v1421 = vpop.f32.mrb[0].mxu0
  %v1422 = vadd.f32 %v220, %v1421
  %v1423 = vpop.f32.mrb[0].mxu0
  %v1424 = vpop.f32.mrb[0].mxu0
  %v1425 = vadd.f32 %v220, %v1424
  %v1426 = vpop.f32.mrb[0].mxu0
  %1427 = vmatprep.mubr.bf16.mxu0 0
  %1428 = vmatmul.mubr.bf16.gmra.mrb[0].mxu0 %v867
  %v1429 = vpop.f32.mrb[0].mxu0
  %v1430 = vadd.f32 %v220, %v1429
  %v1431 = vpop.f32.mrb[0].mxu0
  %v1432 = vpop.f32.mrb[0].mxu0
  %v1433 = vadd.f32 %v220, %v1432
  %v1434 = vpop.f32.mrb[0].mxu0
  %1435 = vmatprep.mubr.bf16.mxu0 0
  %1436 = vmatmul.mubr.bf16.gmra.mrb[0].mxu0 %v870
  %v1437 = vpop.f32.mrb[0].mxu0
  %v1438 = vadd.f32 %v220, %v1437
  %v1439 = vpop.f32.mrb[0].mxu0
  %v1440 = vpop.f32.mrb[0].mxu0
  %v1441 = vadd.f32 %v220, %v1440
  %v1442 = vpop.f32.mrb[0].mxu0
  %1443 = vmatprep.mubr.bf16.mxu0 0
  %1444 = vmatmul.mubr.bf16.gmra.mrb[0].mxu0 %v873
  %v1445 = vpop.f32.mrb[0].mxu0
  %v1446 = vadd.f32 %v220, %v1445
  %v1447 = vpop.f32.mrb[0].mxu0
  %v1448 = vpop.f32.mrb[0].mxu0
  %v1449 = vadd.f32 %v220, %v1448
  %v1450 = vpop.f32.mrb[0].mxu0
  %1451 = vmatprep.mubr.bf16.mxu0 0
  %1452 = vmatmul.mubr.bf16.gmra.mrb[0].mxu0 %v876
  %v1453 = vpop.f32.mrb[0].mxu0
  %v1454 = vadd.f32 %v220, %v1453
  %v1455 = vpop.f32.mrb[0].mxu0
  %v1456 = vpop.f32.mrb[0].mxu0
  %v1457 = vadd.f32 %v220, %v1456
  %v1458 = vpop.f32.mrb[0].mxu0
  %1459 = vmatprep.mubr.bf16.mxu0 0
  %1460 = vmatmul.mubr.bf16.gmra.mrb[0].mxu0 %v879
  %v1461 = vpop.f32.mrb[0].mxu0
  %v1462 = vadd.f32 %v220, %v1461
  %v1463 = vpop.f32.mrb[0].mxu0
  %v1464 = vpop.f32.mrb[0].mxu0
  %v1465 = vadd.f32 %v220, %v1464
  %v1466 = vpop.f32.mrb[0].mxu0
  %1467 = vmatprep.mubr.bf16.mxu0 0
  %1468 = vmatmul.mubr.bf16.gmra.mrb[0].mxu0 %v882
  %v1469 = vpop.f32.mrb[0].mxu0
  %v1470 = vadd.f32 %v220, %v1469
  %v1471 = vpop.f32.mrb[0].mxu0
  %v1472 = vpop.f32.mrb[0].mxu0
  %v1473 = vadd.f32 %v220, %v1472
  %v1474 = vpop.f32.mrb[0].mxu0
  %1475 = vmatprep.mubr.bf16.mxu0 0
  %1476 = vmatmul.mubr.bf16.gmra.mrb[0].mxu0 %v885
  %v1477 = vpop.f32.mrb[0].mxu0
  %v1478 = vadd.f32 %v220, %v1477
  %v1479 = vpop.f32.mrb[0].mxu0
  %v1480 = vpop.f32.mrb[0].mxu0
  %v1481 = vadd.f32 %v220, %v1480
  %v1482 = vpop.f32.mrb[0].mxu0
  %1483 = vmatprep.mubr.bf16.mxu0 0
  %1484 = vmatmul.mubr.bf16.gmra.mrb[0].mxu0 %v888
  %v1485 = vpop.f32.mrb[0].mxu0
  %v1486 = vadd.f32 %v220, %v1485
  %v1487 = vpop.f32.mrb[0].mxu0
  %v1488 = vpop.f32.mrb[0].mxu0
  %v1489 = vadd.f32 %v220, %v1488
  %v1490 = vpop.f32.mrb[0].mxu0
  %1491 = vmatprep.mubr.bf16.mxu0 0
  %1492 = vmatmul.mubr.bf16.gmra.mrb[0].mxu0 %v891
  %v1493 = vpop.f32.mrb[0].mxu0
  %v1494 = vadd.f32 %v220, %v1493
  %v1495 = vpop.f32.mrb[0].mxu0
  %v1496 = vpop.f32.mrb[0].mxu0
  %v1497 = vadd.f32 %v220, %v1496
  %v1498 = vpop.f32.mrb[0].mxu0
  %1499 = vmatprep.mubr.bf16.mxu0 0
  %1500 = vmatmul.mubr.bf16.gmra.mrb[0].mxu0 %v894
  %v1501 = vpop.f32.mrb[0].mxu0
  %v1502 = vadd.f32 %v220, %v1501
  %v1503 = vpop.f32.mrb[0].mxu0
  %v1504 = vpop.f32.mrb[0].mxu0
  %v1505 = vadd.f32 %v220, %v1504
  %v1506 = vpop.f32.mrb[0].mxu0
  %1507 = vmatprep.mubr.bf16.mxu0 0
  %1508 = vmatmul.mubr.bf16.gmra.mrb[0].mxu0 %v897
  %v1509 = vpop.f32.mrb[0].mxu0
  %v1510 = vadd.f32 %v220, %v1509
  %v1511 = vpop.f32.mrb[0].mxu0
  %v1512 = vpop.f32.mrb[0].mxu0
  %v1513 = vadd.f32 %v220, %v1512
  %v1514 = vpop.f32.mrb[0].mxu0
  %1515 = vmatprep.mubr.bf16.mxu0 0
  %1516 = vmatmul.mubr.bf16.gmra.mrb[0].mxu0 %v900
  %v1517 = vpop.f32.mrb[0].mxu0
  %v1518 = vadd.f32 %v220, %v1517
  %v1519 = vpop.f32.mrb[0].mxu0
  %v1520 = vpop.f32.mrb[0].mxu0
  %v1521 = vadd.f32 %v220, %v1520
  %v1522 = vpop.f32.mrb[0].mxu0
  %1523 = vmatprep.mubr.bf16.mxu0 0
  %1524 = vmatmul.mubr.bf16.gmra.mrb[0].mxu0 %v903
  %v1525 = vpop.f32.mrb[0].mxu0
  %v1526 = vadd.f32 %v220, %v1525
  %v1527 = vpop.f32.mrb[0].mxu0
  %v1528 = vpop.f32.mrb[0].mxu0
  %v1529 = vadd.f32 %v220, %v1528
  %v1530 = vpop.f32.mrb[0].mxu0
  %1531 = vmatprep.mubr.bf16.mxu0 0
  %1532 = vmatmul.mubr.bf16.gmra.mrb[0].mxu0 %v906
  %v1533 = vpop.f32.mrb[0].mxu0
  %v1534 = vadd.f32 %v220, %v1533
  %v1535 = vpop.f32.mrb[0].mxu0
  %v1536 = vpop.f32.mrb[0].mxu0
  %v1537 = vadd.f32 %v220, %v1536
  %v1538 = vpop.f32.mrb[0].mxu0
  %1539 = vmatprep.mubr.bf16.mxu0 0
  %1540 = vmatmul.mubr.bf16.gmra.mrb[0].mxu0 %v909
  %v1541 = vpop.f32.mrb[0].mxu0
  %v1542 = vadd.f32 %v220, %v1541
  %v1543 = vpop.f32.mrb[0].mxu0
  %v1544 = vpop.f32.mrb[0].mxu0
  %v1545 = vadd.f32 %v220, %v1544
  %v1546 = vpop.f32.mrb[0].mxu0
  %1547 = vmatprep.mubr.bf16.mxu0 0
  %1548 = vmatmul.mubr.bf16.gmra.mrb[0].mxu0 %v912
  %v1549 = vpop.f32.mrb[0].mxu0
  %v1550 = vadd.f32 %v220, %v1549
  %v1551 = vpop.f32.mrb[0].mxu0
  %v1552 = vpop.f32.mrb[0].mxu0
  %v1553 = vadd.f32 %v220, %v1552
  %v1554 = vpop.f32.mrb[0].mxu0
  %1555 = vmatprep.mubr.bf16.mxu0 0
  %1556 = vmatmul.mubr.bf16.gmra.mrb[0].mxu0 %v915
  %v1557 = vpop.f32.mrb[0].mxu0
  %v1558 = vadd.f32 %v220, %v1557
  %v1559 = vpop.f32.mrb[0].mxu0
  %v1560 = vpop.f32.mrb[0].mxu0
  %v1561 = vadd.f32 %v220, %v1560
  %v1562 = vpop.f32.mrb[0].mxu0
  %1563 = vmatprep.mubr.bf16.mxu0 0
  %1564 = vmatmul.mubr.bf16.gmra.mrb[0].mxu0 %v918
  %v1565 = vpop.f32.mrb[0].mxu0
  %v1566 = vadd.f32 %v220, %v1565
  %v1567 = vpop.f32.mrb[0].mxu0
  %v1568 = vpop.f32.mrb[0].mxu0
  %v1569 = vadd.f32 %v220, %v1568
  %v1570 = vpop.f32.mrb[0].mxu0
  %1571 = vmatprep.mubr.bf16.mxu0 0
  %1572 = vmatmul.mubr.bf16.gmra.mrb[0].mxu0 %v921
  %v1573 = vpop.f32.mrb[0].mxu0
  %v1574 = vadd.f32 %v220, %v1573
  %v1575 = vpop.f32.mrb[0].mxu0
  %v1576 = vpop.f32.mrb[0].mxu0
  %v1577 = vadd.f32 %v220, %v1576
  %v1578 = vpop.f32.mrb[0].mxu0
  %1579 = vmatprep.mubr.bf16.mxu0 0
  %1580 = vmatmul.mubr.bf16.gmra.mrb[0].mxu0 %v924
  %v1581 = vpop.f32.mrb[0].mxu0
  %v1582 = vadd.f32 %v220, %v1581
  %v1583 = vpop.f32.mrb[0].mxu0
  %v1584 = vpop.f32.mrb[0].mxu0
  %v1585 = vadd.f32 %v220, %v1584
  %v1586 = vpop.f32.mrb[0].mxu0
  %1587 = vmatprep.mubr.bf16.mxu0 0
  %1588 = vmatmul.mubr.bf16.gmra.mrb[0].mxu0 %v927
  %v1589 = vpop.f32.mrb[0].mxu0
  %v1590 = vadd.f32 %v220, %v1589
  %v1591 = vpop.f32.mrb[0].mxu0
  %v1592 = vpop.f32.mrb[0].mxu0
  %v1593 = vadd.f32 %v220, %v1592
  %v1594 = vpop.f32.mrb[0].mxu0
  %1595 = vmatprep.mubr.bf16.mxu0 0
  %1596 = vmatmul.mubr.bf16.gmra.mrb[0].mxu0 %v930
  %v1597 = vpop.f32.mrb[0].mxu0
  %v1598 = vadd.f32 %v220, %v1597
  %v1599 = vpop.f32.mrb[0].mxu0
  %v1600 = vpop.f32.mrb[0].mxu0
  %v1601 = vadd.f32 %v220, %v1600
  %v1602 = vpop.f32.mrb[0].mxu0
  %1603 = vmatprep.mubr.bf16.mxu0 0
  %1604 = vmatmul.mubr.bf16.gmra.mrb[0].mxu0 %v933
  %v1605 = vpop.f32.mrb[0].mxu0
  %v1606 = vadd.f32 %v220, %v1605
  %v1607 = vpop.f32.mrb[0].mxu0
  %v1608 = vpop.f32.mrb[0].mxu0
  %v1609 = vadd.f32 %v220, %v1608
  %v1610 = vpop.f32.mrb[0].mxu0
  %1611 = vmatprep.mubr.bf16.mxu0 0
  %1612 = vmatmul.mubr.bf16.gmra.mrb[0].mxu0 %v936
  %v1613 = vpop.f32.mrb[0].mxu0
  %v1614 = vadd.f32 %v220, %v1613
  %v1615 = vpop.f32.mrb[0].mxu0
  %v1616 = vpop.f32.mrb[0].mxu0
  %v1617 = vadd.f32 %v220, %v1616
  %v1618 = vpop.f32.mrb[0].mxu0
  %1619 = vmatprep.mubr.bf16.mxu0 0
  %1620 = vmatmul.mubr.bf16.gmra.mrb[0].mxu0 %v939
  %v1621 = vpop.f32.mrb[0].mxu0
  %v1622 = vadd.f32 %v220, %v1621
  %v1623 = vpop.f32.mrb[0].mxu0
  %v1624 = vpop.f32.mrb[0].mxu0
  %v1625 = vadd.f32 %v220, %v1624
  %v1626 = vpop.f32.mrb[0].mxu0
  %1627 = vmatprep.mubr.bf16.mxu0 0
  %1628 = vmatmul.mubr.bf16.gmra.mrb[0].mxu0 %v942
  %v1629 = vpop.f32.mrb[0].mxu0
  %v1630 = vadd.f32 %v220, %v1629
  %v1631 = vpop.f32.mrb[0].mxu0
  %v1632 = vpop.f32.mrb[0].mxu0
  %v1633 = vadd.f32 %v220, %v1632
  %v1634 = vpop.f32.mrb[0].mxu0
  %1635 = vmatprep.mubr.bf16.mxu0 0
  %1636 = vmatmul.mubr.bf16.gmra.mrb[0].mxu0 %v945
  %v1637 = vpop.f32.mrb[0].mxu0
  %v1638 = vadd.f32 %v220, %v1637
  %v1639 = vpop.f32.mrb[0].mxu0
  %v1640 = vpop.f32.mrb[0].mxu0
  %v1641 = vadd.f32 %v220, %v1640
  %v1642 = vpop.f32.mrb[0].mxu0
  %1643 = vmatprep.mubr.bf16.mxu0 0
  %1644 = vmatmul.mubr.bf16.gmra.mrb[0].mxu0 %v948
  %v1645 = vpop.f32.mrb[0].mxu0
  %v1646 = vadd.f32 %v220, %v1645
  %v1647 = vpop.f32.mrb[0].mxu0
  %v1648 = vpop.f32.mrb[0].mxu0
  %v1649 = vadd.f32 %v220, %v1648
  %v1650 = vpop.f32.mrb[0].mxu0
  %1651 = vmatprep.mubr.bf16.mxu0 0
  %1652 = vmatmul.mubr.bf16.gmra.mrb[0].mxu0 %v951
  %v1653 = vpop.f32.mrb[0].mxu0
  %v1654 = vadd.f32 %v220, %v1653
  %v1655 = vpop.f32.mrb[0].mxu0
  %v1656 = vpop.f32.mrb[0].mxu0
  %v1657 = vadd.f32 %v220, %v1656
  %v1658 = vpop.f32.mrb[0].mxu0
  %1659 = vmatprep.mubr.bf16.mxu0 0
  %1660 = vmatmul.mubr.bf16.gmra.mrb[0].mxu0 %v954
  %v1661 = vpop.f32.mrb[0].mxu0
  %v1662 = vadd.f32 %v220, %v1661
  %v1663 = vpop.f32.mrb[0].mxu0
  %v1664 = vpop.f32.mrb[0].mxu0
  %v1665 = vadd.f32 %v220, %v1664
  %v1666 = vpop.f32.mrb[0].mxu0
  %1667 = vmatprep.mubr.bf16.mxu0 0
  %1668 = vmatmul.mubr.bf16.gmra.mrb[0].mxu0 %v957
  %v1669 = vpop.f32.mrb[0].mxu0
  %v1670 = vadd.f32 %v220, %v1669
  %v1671 = vpop.f32.mrb[0].mxu0
  %v1672 = vpop.f32.mrb[0].mxu0
  %v1673 = vadd.f32 %v220, %v1672
  %v1674 = vpop.f32.mrb[0].mxu0
  %1675 = vmatprep.mubr.bf16.mxu0 0
  %1676 = vmatmul.mubr.bf16.gmra.mrb[0].mxu0 %v960
  %v1677 = vpop.f32.mrb[0].mxu0
  %v1678 = vadd.f32 %v220, %v1677
  %v1679 = vpop.f32.mrb[0].mxu0
  %v1680 = vpop.f32.mrb[0].mxu0
  %v1681 = vadd.f32 %v220, %v1680
  %v1682 = vpop.f32.mrb[0].mxu0
  %1683 = vmatprep.mubr.bf16.mxu0 0
  %1684 = vmatmul.mubr.bf16.gmra.mrb[0].mxu0 %v963
  %v1685 = vpop.f32.mrb[0].mxu0
  %v1686 = vadd.f32 %v220, %v1685
  %v1687 = vpop.f32.mrb[0].mxu0
  %v1688 = vpop.f32.mrb[0].mxu0
  %v1689 = vadd.f32 %v220, %v1688
  %v1690 = vpop.f32.mrb[0].mxu0
  %1691 = vmatprep.mubr.bf16.mxu0 0
  %1692 = vmatmul.mubr.bf16.gmra.mrb[0].mxu0 %v966
  %v1693 = vpop.f32.mrb[0].mxu0
  %v1694 = vadd.f32 %v220, %v1693
  %v1695 = vpop.f32.mrb[0].mxu0
  %v1696 = vpop.f32.mrb[0].mxu0
  %v1697 = vadd.f32 %v220, %v1696
  %v1698 = vpop.f32.mrb[0].mxu0
  %1699 = vmatprep.mubr.bf16.mxu0 0
  %1700 = vmatmul.mubr.bf16.gmra.mrb[0].mxu0 %v969
  %v1701 = vpop.f32.mrb[0].mxu0
  %v1702 = vadd.f32 %v220, %v1701
  %v1703 = vpop.f32.mrb[0].mxu0
  %v1704 = vpop.f32.mrb[0].mxu0
  %v1705 = vadd.f32 %v220, %v1704
  %v1706 = vpop.f32.mrb[0].mxu0
  %1707 = vmatprep.mubr.bf16.mxu0 0
  %1708 = vmatmul.mubr.bf16.gmra.mrb[0].mxu0 %v972
  %v1709 = vpop.f32.mrb[0].mxu0
  %v1710 = vadd.f32 %v220, %v1709
  %v1711 = vpop.f32.mrb[0].mxu0
  %v1712 = vpop.f32.mrb[0].mxu0
  %v1713 = vadd.f32 %v220, %v1712
  %v1714 = vpop.f32.mrb[0].mxu0
  %1715 = vmatprep.mubr.bf16.mxu0 0
  %1716 = vmatmul.mubr.bf16.gmra.mrb[0].mxu0 %v975
  %v1717 = vpop.f32.mrb[0].mxu0
  %v1718 = vadd.f32 %v220, %v1717
  %v1719 = vpop.f32.mrb[0].mxu0
  %v1720 = vpop.f32.mrb[0].mxu0
  %v1721 = vadd.f32 %v220, %v1720
  %v1722 = vpop.f32.mrb[0].mxu0
  %1723 = vmatprep.mubr.bf16.mxu0 0
  %1724 = vmatmul.mubr.bf16.gmra.mrb[0].mxu0 %v978
  %v1725 = vpop.f32.mrb[0].mxu0
  %v1726 = vadd.f32 %v220, %v1725
  %v1727 = vpop.f32.mrb[0].mxu0
  %v1728 = vpop.f32.mrb[0].mxu0
  %v1729 = vadd.f32 %v220, %v1728
  %v1730 = vpop.f32.mrb[0].mxu0
  %1731 = vmatprep.mubr.bf16.mxu0 0
  %1732 = vmatmul.mubr.bf16.gmra.mrb[0].mxu0 %v981
  %v1733 = vpop.f32.mrb[0].mxu0
  %v1734 = vadd.f32 %v220, %v1733
  %v1735 = vpop.f32.mrb[0].mxu0
  %v1736 = vpop.f32.mrb[0].mxu0
  %v1737 = vadd.f32 %v220, %v1736
  %v1738 = vpop.f32.mrb[0].mxu0
  %1739 = vmatprep.mubr.bf16.mxu0 0
  %1740 = vmatmul.mubr.bf16.gmra.mrb[0].mxu0 %v984
  %v1741 = vpop.f32.mrb[0].mxu0
  %v1742 = vadd.f32 %v220, %v1741
  %v1743 = vpop.f32.mrb[0].mxu0
  %v1744 = vpop.f32.mrb[0].mxu0
  %v1745 = vadd.f32 %v220, %v1744
  %v1746 = vpop.f32.mrb[0].mxu0
  %1747 = vmatprep.mubr.bf16.mxu0 0
  %1748 = vmatmul.mubr.bf16.gmra.mrb[0].mxu0 %v987
  %v1749 = vpop.f32.mrb[0].mxu0
  %v1750 = vadd.f32 %v220, %v1749
  %v1751 = vpop.f32.mrb[0].mxu0
  %v1752 = vpop.f32.mrb[0].mxu0
  %v1753 = vadd.f32 %v220, %v1752
  %v1754 = vpop.f32.mrb[0].mxu0
  %1755 = vmatprep.mubr.bf16.mxu0 0
  %1756 = vmatmul.mubr.bf16.gmra.mrb[0].mxu0 %v990
  %v1757 = vpop.f32.mrb[0].mxu0
  %v1758 = vadd.f32 %v220, %v1757
  %v1759 = vpop.f32.mrb[0].mxu0
  %v1760 = vpop.f32.mrb[0].mxu0
  %v1761 = vadd.f32 %v220, %v1760
  %v1762 = vpop.f32.mrb[0].mxu0
  %1763 = vmatprep.mubr.bf16.mxu0 0
  %1764 = vmatmul.mubr.bf16.gmra.mrb[0].mxu0 %v993
  %v1765 = vpop.f32.mrb[0].mxu0
  %v1766 = vadd.f32 %v220, %v1765
  %v1767 = vpop.f32.mrb[0].mxu0
  %v1768 = vpop.f32.mrb[0].mxu0
  %v1769 = vadd.f32 %v220, %v1768
  %v1770 = vpop.f32.mrb[0].mxu0
  %1771 = vmatprep.mubr.bf16.mxu0 0
  %1772 = vmatmul.mubr.bf16.gmra.mrb[0].mxu0 %v996
  %v1773 = vpop.f32.mrb[0].mxu0
  %v1774 = vadd.f32 %v220, %v1773
  %v1775 = vpop.f32.mrb[0].mxu0
  %v1776 = vpop.f32.mrb[0].mxu0
  %v1777 = vadd.f32 %v220, %v1776
  %v1778 = vpop.f32.mrb[0].mxu0
  %1779 = vmatprep.mubr.bf16.mxu0 0
  %1780 = vmatmul.mubr.bf16.gmra.mrb[0].mxu0 %v999
  %v1781 = vpop.f32.mrb[0].mxu0
  %v1782 = vadd.f32 %v220, %v1781
  %v1783 = vpop.f32.mrb[0].mxu0
  %v1784 = vpop.f32.mrb[0].mxu0
  %v1785 = vadd.f32 %v220, %v1784
  %v1786 = vpop.f32.mrb[0].mxu0
  %1787 = vmatprep.mubr.bf16.mxu0 0
  %1788 = vmatmul.mubr.bf16.gmra.mrb[0].mxu0 %v1002
  %v1789 = vpop.f32.mrb[0].mxu0
  %v1790 = vadd.f32 %v220, %v1789
  %v1791 = vpop.f32.mrb[0].mxu0
  %v1792 = vpop.f32.mrb[0].mxu0
  %v1793 = vadd.f32 %v220, %v1792
  %v1794 = vpop.f32.mrb[0].mxu0
  %1795 = vmatprep.mubr.bf16.mxu0 0
  %1796 = vmatmul.mubr.bf16.gmra.mrb[0].mxu0 %v1005
  %v1797 = vpop.f32.mrb[0].mxu0
  %v1798 = vadd.f32 %v220, %v1797
  %v1799 = vpop.f32.mrb[0].mxu0
  %v1800 = vpop.f32.mrb[0].mxu0
  %v1801 = vadd.f32 %v220, %v1800
  %v1802 = vpop.f32.mrb[0].mxu0
  %1803 = vmatprep.mubr.bf16.mxu0 0
  %1804 = vmatmul.mubr.bf16.gmra.mrb[0].mxu0 %v1008
  %v1805 = vpop.f32.mrb[0].mxu0
  %v1806 = vadd.f32 %v220, %v1805
  %v1807 = vpop.f32.mrb[0].mxu0
  %v1808 = vpop.f32.mrb[0].mxu0
  %v1809 = vadd.f32 %v220, %v1808
  %v1810 = vpop.f32.mrb[0].mxu0
  %1811 = vmatprep.mubr.bf16.mxu0 0
  %1812 = vmatmul.mubr.bf16.gmra.mrb[0].mxu0 %v1011
  %v1813 = vpop.f32.mrb[0].mxu0
  %v1814 = vadd.f32 %v220, %v1813
  %v1815 = vpop.f32.mrb[0].mxu0
  %v1816 = vpop.f32.mrb[0].mxu0
  %v1817 = vadd.f32 %v220, %v1816
  %v1818 = vpop.f32.mrb[0].mxu0
  %1819 = vmatprep.mubr.bf16.mxu0 0
  %1820 = vmatmul.mubr.bf16.gmra.mrb[0].mxu0 %v1014
  %v1821 = vpop.f32.mrb[0].mxu0
  %v1822 = vadd.f32 %v220, %v1821
  %v1823 = vpop.f32.mrb[0].mxu0
  %v1824 = vpop.f32.mrb[0].mxu0
  %v1825 = vadd.f32 %v220, %v1824
  %v1826 = vpop.f32.mrb[0].mxu0
  %1827 = vmatprep.mubr.bf16.mxu0 0
  %1828 = vmatmul.mubr.bf16.gmra.mrb[0].mxu0 %v1017
  %v1829 = vpop.f32.mrb[0].mxu0
  %v1830 = vadd.f32 %v220, %v1829
  %v1831 = vpop.f32.mrb[0].mxu0
  %v1832 = vpop.f32.mrb[0].mxu0
  %v1833 = vadd.f32 %v220, %v1832
  %v1834 = vpop.f32.mrb[0].mxu0
  %1835 = vdwg.mxu0
  %v1836 = vtanh.pop %v1054
  %v1837 = vtanh.pop %v1057
  %v1838 = vtanh.pop %v1062
  %v1839 = vtanh.pop %v1065
  %v1840 = vtanh.pop %v1070
  %v1841 = vtanh.pop %v1073
  %v1842 = vtanh.pop %v1078
  %v1843 = vtanh.pop %v1081
  %v1844 = vtanh.pop %v1086
  %v1845 = vtanh.pop %v1089
  %v1846 = vtanh.pop %v1094
  %v1847 = vtanh.pop %v1097
  %v1848 = vtanh.pop %v1102
  %v1849 = vtanh.pop %v1105
  %v1850 = vtanh.pop %v1110
  %v1851 = vtanh.pop %v1113
  %v1852 = vtanh.pop %v1118
  %v1853 = vtanh.pop %v1121
  %v1854 = vtanh.pop %v1126
  %v1855 = vtanh.pop %v1129
  %v1856 = vtanh.pop %v1134
  %v1857 = vtanh.pop %v1137
  %v1858 = vtanh.pop %v1142
  %v1859 = vtanh.pop %v1145
  %v1860 = vtanh.pop %v1150
  %v1861 = vtanh.pop %v1153
  %v1862 = vtanh.pop %v1158
  %v1863 = vtanh.pop %v1161
  %v1864 = vtanh.pop %v1166
  %v1865 = vtanh.pop %v1169
  %v1866 = vtanh.pop %v1174
  %v1867 = vtanh.pop %v1177
  %v1868 = vtanh.pop %v1182
  %v1869 = vtanh.pop %v1185
  %v1870 = vtanh.pop %v1190
  %v1871 = vtanh.pop %v1193
  %v1872 = vtanh.pop %v1198
  %v1873 = vtanh.pop %v1201
  %v1874 = vtanh.pop %v1206
  %v1875 = vtanh.pop %v1209
  %v1876 = vtanh.pop %v1214
  %v1877 = vtanh.pop %v1217
  %v1878 = vtanh.pop %v1222
  %v1879 = vtanh.pop %v1225
  %v1880 = vtanh.pop %v1230
  %v1881 = vtanh.pop %v1233
  %v1882 = vtanh.pop %v1238
  %v1883 = vtanh.pop %v1241
  %v1884 = vtanh.pop %v1246
  %v1885 = vtanh.pop %v1249
  %v1886 = vtanh.pop %v1254
  %v1887 = vtanh.pop %v1257
  %v1888 = vtanh.pop %v1262
  %v1889 = vtanh.pop %v1265
  %v1890 = vtanh.pop %v1270
  %v1891 = vtanh.pop %v1273
  %v1892 = vtanh.pop %v1278
  %v1893 = vtanh.pop %v1281
  %v1894 = vtanh.pop %v1286
  %v1895 = vtanh.pop %v1289
  %v1896 = vtanh.pop %v1294
  %v1897 = vtanh.pop %v1297
  %v1898 = vtanh.pop %v1302
  %v1899 = vtanh.pop %v1305
  %v1900 = vtanh.pop %v1310
  %v1901 = vtanh.pop %v1313
  %v1902 = vtanh.pop %v1318
  %v1903 = vtanh.pop %v1321
  %v1904 = vtanh.pop %v1326
  %v1905 = vtanh.pop %v1329
  %v1906 = vtanh.pop %v1334
  %v1907 = vtanh.pop %v1337
  %v1908 = vtanh.pop %v1342
  %v1909 = vtanh.pop %v1345
  %v1910 = vtanh.pop %v1350
  %v1911 = vtanh.pop %v1353
  %v1912 = vtanh.pop %v1358
  %v1913 = vtanh.pop %v1361
  %v1914 = vtanh.pop %v1366
  %v1915 = vtanh.pop %v1369
  %v1916 = vtanh.pop %v1374
  %v1917 = vtanh.pop %v1377
  %v1918 = vtanh.pop %v1382
  %v1919 = vtanh.pop %v1385
  %v1920 = vtanh.pop %v1390
  %v1921 = vtanh.pop %v1393
  %v1922 = vtanh.pop %v1398
  %v1923 = vtanh.pop %v1401
  %v1924 = vtanh.pop %v1406
  %v1925 = vtanh.pop %v1409
  %v1926 = vtanh.pop %v1414
  %v1927 = vtanh.pop %v1417
  %v1928 = vtanh.pop %v1422
  %v1929 = vtanh.pop %v1425
  %v1930 = vtanh.pop %v1430
  %v1931 = vtanh.pop %v1433
  %v1932 = vtanh.pop %v1438
  %v1933 = vtanh.pop %v1441
  %v1934 = vtanh.pop %v1446
  %v1935 = vtanh.pop %v1449
  %v1936 = vtanh.pop %v1454
  %v1937 = vtanh.pop %v1457
  %v1938 = vtanh.pop %v1462
  %v1939 = vtanh.pop %v1465
  %v1940 = vtanh.pop %v1470
  %v1941 = vtanh.pop %v1473
  %v1942 = vtanh.pop %v1478
  %v1943 = vtanh.pop %v1481
  %v1944 = vtanh.pop %v1486
  %v1945 = vtanh.pop %v1489
  %v1946 = vtanh.pop %v1494
  %v1947 = vtanh.pop %v1497
  %v1948 = vtanh.pop %v1502
  %v1949 = vtanh.pop %v1505
  %v1950 = vtanh.pop %v1510
  %v1951 = vtanh.pop %v1513
  %v1952 = vtanh.pop %v1518
  %v1953 = vtanh.pop %v1521
  %v1954 = vtanh.pop %v1526
  %v1955 = vtanh.pop %v1529
  %v1956 = vtanh.pop %v1534
  %v1957 = vtanh.pop %v1537
  %v1958 = vtanh.pop %v1542
  %v1959 = vtanh.pop %v1545
  %v1960 = vtanh.pop %v1550
  %v1961 = vtanh.pop %v1553
  %v1962 = vtanh.pop %v1558
  %v1963 = vtanh.pop %v1561
  %v1964 = vtanh.pop %v1566
  %v1965 = vtanh.pop %v1569
  %v1966 = vtanh.pop %v1574
  %v1967 = vtanh.pop %v1577
  %v1968 = vtanh.pop %v1582
  %v1969 = vtanh.pop %v1585
  %v1970 = vtanh.pop %v1590
  %v1971 = vtanh.pop %v1593
  %v1972 = vtanh.pop %v1598
  %v1973 = vtanh.pop %v1601
  %v1974 = vtanh.pop %v1606
  %v1975 = vtanh.pop %v1609
  %v1976 = vtanh.pop %v1614
  %v1977 = vtanh.pop %v1617
  %v1978 = vtanh.pop %v1622
  %v1979 = vtanh.pop %v1625
  %v1980 = vtanh.pop %v1630
  %v1981 = vtanh.pop %v1633
  %v1982 = vtanh.pop %v1638
  %v1983 = vtanh.pop %v1641
  %v1984 = vtanh.pop %v1646
  %v1985 = vtanh.pop %v1649
  %v1986 = vtanh.pop %v1654
  %v1987 = vtanh.pop %v1657
  %v1988 = vtanh.pop %v1662
  %v1989 = vtanh.pop %v1665
  %v1990 = vtanh.pop %v1670
  %v1991 = vtanh.pop %v1673
  %v1992 = vtanh.pop %v1678
  %v1993 = vtanh.pop %v1681
  %v1994 = vtanh.pop %v1686
  %v1995 = vtanh.pop %v1689
  %v1996 = vtanh.pop %v1694
  %v1997 = vtanh.pop %v1697
  %v1998 = vtanh.pop %v1702
  %v1999 = vtanh.pop %v1705
  %v2000 = vtanh.pop %v1710
  %v2001 = vtanh.pop %v1713
  %v2002 = vtanh.pop %v1718
  %v2003 = vtanh.pop %v1721
  %v2004 = vtanh.pop %v1726
  %v2005 = vtanh.pop %v1729
  %v2006 = vtanh.pop %v1734
  %v2007 = vtanh.pop %v1737
  %v2008 = vtanh.pop %v1742
  %v2009 = vtanh.pop %v1745
  %v2010 = vtanh.pop %v1750
  %v2011 = vtanh.pop %v1753
  %v2012 = vtanh.pop %v1758
  %v2013 = vtanh.pop %v1761
  %v2014 = vtanh.pop %v1766
  %v2015 = vtanh.pop %v1769
  %v2016 = vtanh.pop %v1774
  %v2017 = vtanh.pop %v1777
  %v2018 = vtanh.pop %v1782
  %v2019 = vtanh.pop %v1785
  %v2020 = vtanh.pop %v1790
  %v2021 = vtanh.pop %v1793
  %v2022 = vtanh.pop %v1798
  %v2023 = vtanh.pop %v1801
  %v2024 = vtanh.pop %v1806
  %v2025 = vtanh.pop %v1809
  %v2026 = vtanh.pop %v1814
  %v2027 = vtanh.pop %v1817
  %v2028 = vtanh.pop %v1822
  %v2029 = vtanh.pop %v1825
  %v2030 = vtanh.pop %v1830
  %v2031 = vtanh.pop %v1833
  %vm2032 = vcmask 31744
  %2033 = vst.msk [vmem:[%s3] sm:$0xff] %vm2032, %v1836
  %2034 = vst.msk [vmem:[%s3 + $0x8] sm:$0xff] %vm2032, %v1837
  %2035 = vst.msk [vmem:[%s3 + $0x10] sm:$0xff] %vm2032, %v1838
  %2036 = vst.msk [vmem:[%s3 + $0x18] sm:$0xff] %vm2032, %v1839
  %2037 = vst.msk [vmem:[%s3 + $0x20] sm:$0xff] %vm2032, %v1840
  %2038 = vst.msk [vmem:[%s3 + $0x28] sm:$0xff] %vm2032, %v1841
  %2039 = vst.msk [vmem:[%s3 + $0x30] sm:$0xff] %vm2032, %v1842
  %2040 = vst.msk [vmem:[%s3 + $0x38] sm:$0xff] %vm2032, %v1843
  %2041 = vst.msk [vmem:[%s3 + $0x40] sm:$0xff] %vm2032, %v1844
  %2042 = vst.msk [vmem:[%s3 + $0x48] sm:$0xff] %vm2032, %v1845
  %2043 = vst.msk [vmem:[%s3 + $0x50] sm:$0xff] %vm2032, %v1846
  %2044 = vst.msk [vmem:[%s3 + $0x58] sm:$0xff] %vm2032, %v1847
  %2045 = vst.msk [vmem:[%s3 + $0x60] sm:$0xff] %vm2032, %v1848
  %2046 = vst.msk [vmem:[%s3 + $0x68] sm:$0xff] %vm2032, %v1849
  %2047 = vst.msk [vmem:[%s3 + $0x70] sm:$0xff] %vm2032, %v1850
  %2048 = vst.msk [vmem:[%s3 + $0x78] sm:$0xff] %vm2032, %v1851
  %2049 = vst.msk [vmem:[%s3 + $0x80] sm:$0xff] %vm2032, %v1852
  %2050 = vst.msk [vmem:[%s3 + $0x88] sm:$0xff] %vm2032, %v1853
  %2051 = vst.msk [vmem:[%s3 + $0x90] sm:$0xff] %vm2032, %v1854
  %2052 = vst.msk [vmem:[%s3 + $0x98] sm:$0xff] %vm2032, %v1855
  %2053 = vst.msk [vmem:[%s3 + $0xa0] sm:$0xff] %vm2032, %v1856
  %2054 = vst.msk [vmem:[%s3 + $0xa8] sm:$0xff] %vm2032, %v1857
  %2055 = vst.msk [vmem:[%s3 + $0xb0] sm:$0xff] %vm2032, %v1858
  %2056 = vst.msk [vmem:[%s3 + $0xb8] sm:$0xff] %vm2032, %v1859
  %2057 = vst.msk [vmem:[%s3 + $0xc0] sm:$0xff] %vm2032, %v1860
  %2058 = vst.msk [vmem:[%s3 + $0xc8] sm:$0xff] %vm2032, %v1861
  %2059 = vst.msk [vmem:[%s3 + $0xd0] sm:$0xff] %vm2032, %v1862
  %2060 = vst.msk [vmem:[%s3 + $0xd8] sm:$0xff] %vm2032, %v1863
  %2061 = vst.msk [vmem:[%s3 + $0xe0] sm:$0xff] %vm2032, %v1864
  %2062 = vst.msk [vmem:[%s3 + $0xe8] sm:$0xff] %vm2032, %v1865
  %2063 = vst.msk [vmem:[%s3 + $0xf0] sm:$0xff] %vm2032, %v1866
  %2064 = vst.msk [vmem:[%s3 + $0xf8] sm:$0xff] %vm2032, %v1867
  %2065 = vst.msk [vmem:[%s3 + $0x100] sm:$0xff] %vm2032, %v1868
  %2066 = vst.msk [vmem:[%s3 + $0x108] sm:$0xff] %vm2032, %v1869
  %2067 = vst.msk [vmem:[%s3 + $0x110] sm:$0xff] %vm2032, %v1870
  %2068 = vst.msk [vmem:[%s3 + $0x118] sm:$0xff] %vm2032, %v1871
  %2069 = vst.msk [vmem:[%s3 + $0x120] sm:$0xff] %vm2032, %v1872
  %2070 = vst.msk [vmem:[%s3 + $0x128] sm:$0xff] %vm2032, %v1873
  %2071 = vst.msk [vmem:[%s3 + $0x130] sm:$0xff] %vm2032, %v1874
  %2072 = vst.msk [vmem:[%s3 + $0x138] sm:$0xff] %vm2032, %v1875
  %2073 = vst.msk [vmem:[%s3 + $0x140] sm:$0xff] %vm2032, %v1876
  %2074 = vst.msk [vmem:[%s3 + $0x148] sm:$0xff] %vm2032, %v1877
  %2075 = vst.msk [vmem:[%s3 + $0x150] sm:$0xff] %vm2032, %v1878
  %2076 = vst.msk [vmem:[%s3 + $0x158] sm:$0xff] %vm2032, %v1879
  %2077 = vst.msk [vmem:[%s3 + $0x160] sm:$0xff] %vm2032, %v1880
  %2078 = vst.msk [vmem:[%s3 + $0x168] sm:$0xff] %vm2032, %v1881
  %2079 = vst.msk [vmem:[%s3 + $0x170] sm:$0xff] %vm2032, %v1882
  %2080 = vst.msk [vmem:[%s3 + $0x178] sm:$0xff] %vm2032, %v1883
  %2081 = vst.msk [vmem:[%s3 + $0x180] sm:$0xff] %vm2032, %v1884
  %2082 = vst.msk [vmem:[%s3 + $0x188] sm:$0xff] %vm2032, %v1885
  %2083 = vst.msk [vmem:[%s3 + $0x190] sm:$0xff] %vm2032, %v1886
  %2084 = vst.msk [vmem:[%s3 + $0x198] sm:$0xff] %vm2032, %v1887
  %2085 = vst.msk [vmem:[%s3 + $0x1a0] sm:$0xff] %vm2032, %v1888
  %2086 = vst.msk [vmem:[%s3 + $0x1a8] sm:$0xff] %vm2032, %v1889
  %2087 = vst.msk [vmem:[%s3 + $0x1b0] sm:$0xff] %vm2032, %v1890
  %2088 = vst.msk [vmem:[%s3 + $0x1b8] sm:$0xff] %vm2032, %v1891
  %2089 = vst.msk [vmem:[%s3 + $0x1c0] sm:$0xff] %vm2032, %v1892
  %2090 = vst.msk [vmem:[%s3 + $0x1c8] sm:$0xff] %vm2032, %v1893
  %2091 = vst.msk [vmem:[%s3 + $0x1d0] sm:$0xff] %vm2032, %v1894
  %2092 = vst.msk [vmem:[%s3 + $0x1d8] sm:$0xff] %vm2032, %v1895
  %2093 = vst.msk [vmem:[%s3 + $0x1e0] sm:$0xff] %vm2032, %v1896
  %2094 = vst.msk [vmem:[%s3 + $0x1e8] sm:$0xff] %vm2032, %v1897
  %2095 = vst.msk [vmem:[%s3 + $0x1f0] sm:$0xff] %vm2032, %v1898
  %2096 = vst.msk [vmem:[%s3 + $0x1f8] sm:$0xff] %vm2032, %v1899
  %2097 = vst.msk [vmem:[%s3 + $0x200] sm:$0xff] %vm2032, %v1900
  %2098 = vst.msk [vmem:[%s3 + $0x208] sm:$0xff] %vm2032, %v1901
  %2099 = vst.msk [vmem:[%s3 + $0x210] sm:$0xff] %vm2032, %v1902
  %2100 = vst.msk [vmem:[%s3 + $0x218] sm:$0xff] %vm2032, %v1903
  %2101 = vst.msk [vmem:[%s3 + $0x220] sm:$0xff] %vm2032, %v1904
  %2102 = vst.msk [vmem:[%s3 + $0x228] sm:$0xff] %vm2032, %v1905
  %2103 = vst.msk [vmem:[%s3 + $0x230] sm:$0xff] %vm2032, %v1906
  %2104 = vst.msk [vmem:[%s3 + $0x238] sm:$0xff] %vm2032, %v1907
  %2105 = vst.msk [vmem:[%s3 + $0x240] sm:$0xff] %vm2032, %v1908
  %2106 = vst.msk [vmem:[%s3 + $0x248] sm:$0xff] %vm2032, %v1909
  %2107 = vst.msk [vmem:[%s3 + $0x250] sm:$0xff] %vm2032, %v1910
  %2108 = vst.msk [vmem:[%s3 + $0x258] sm:$0xff] %vm2032, %v1911
  %2109 = vst.msk [vmem:[%s3 + $0x260] sm:$0xff] %vm2032, %v1912
  %2110 = vst.msk [vmem:[%s3 + $0x268] sm:$0xff] %vm2032, %v1913
  %2111 = vst.msk [vmem:[%s3 + $0x270] sm:$0xff] %vm2032, %v1914
  %2112 = vst.msk [vmem:[%s3 + $0x278] sm:$0xff] %vm2032, %v1915
  %2113 = vst.msk [vmem:[%s3 + $0x280] sm:$0xff] %vm2032, %v1916
  %2114 = vst.msk [vmem:[%s3 + $0x288] sm:$0xff] %vm2032, %v1917
  %2115 = vst.msk [vmem:[%s3 + $0x290] sm:$0xff] %vm2032, %v1918
  %2116 = vst.msk [vmem:[%s3 + $0x298] sm:$0xff] %vm2032, %v1919
  %2117 = vst.msk [vmem:[%s3 + $0x2a0] sm:$0xff] %vm2032, %v1920
  %2118 = vst.msk [vmem:[%s3 + $0x2a8] sm:$0xff] %vm2032, %v1921
  %2119 = vst.msk [vmem:[%s3 + $0x2b0] sm:$0xff] %vm2032, %v1922
  %2120 = vst.msk [vmem:[%s3 + $0x2b8] sm:$0xff] %vm2032, %v1923
  %2121 = vst.msk [vmem:[%s3 + $0x2c0] sm:$0xff] %vm2032, %v1924
  %2122 = vst.msk [vmem:[%s3 + $0x2c8] sm:$0xff] %vm2032, %v1925
  %2123 = vst.msk [vmem:[%s3 + $0x2d0] sm:$0xff] %vm2032, %v1926
  %2124 = vst.msk [vmem:[%s3 + $0x2d8] sm:$0xff] %vm2032, %v1927
  %2125 = vst.msk [vmem:[%s3 + $0x2e0] sm:$0xff] %vm2032, %v1928
  %2126 = vst.msk [vmem:[%s3 + $0x2e8] sm:$0xff] %vm2032, %v1929
  %2127 = vst.msk [vmem:[%s3 + $0x2f0] sm:$0xff] %vm2032, %v1930
  %2128 = vst.msk [vmem:[%s3 + $0x2f8] sm:$0xff] %vm2032, %v1931
  %2129 = vst.msk [vmem:[%s3 + $0x300] sm:$0xff] %vm2032, %v1932
  %2130 = vst.msk [vmem:[%s3 + $0x308] sm:$0xff] %vm2032, %v1933
  %2131 = vst.msk [vmem:[%s3 + $0x310] sm:$0xff] %vm2032, %v1934
  %2132 = vst.msk [vmem:[%s3 + $0x318] sm:$0xff] %vm2032, %v1935
  %2133 = vst.msk [vmem:[%s3 + $0x320] sm:$0xff] %vm2032, %v1936
  %2134 = vst.msk [vmem:[%s3 + $0x328] sm:$0xff] %vm2032, %v1937
  %2135 = vst.msk [vmem:[%s3 + $0x330] sm:$0xff] %vm2032, %v1938
  %2136 = vst.msk [vmem:[%s3 + $0x338] sm:$0xff] %vm2032, %v1939
  %2137 = vst.msk [vmem:[%s3 + $0x340] sm:$0xff] %vm2032, %v1940
  %2138 = vst.msk [vmem:[%s3 + $0x348] sm:$0xff] %vm2032, %v1941
  %2139 = vst.msk [vmem:[%s3 + $0x350] sm:$0xff] %vm2032, %v1942
  %2140 = vst.msk [vmem:[%s3 + $0x358] sm:$0xff] %vm2032, %v1943
  %2141 = vst.msk [vmem:[%s3 + $0x360] sm:$0xff] %vm2032, %v1944
  %2142 = vst.msk [vmem:[%s3 + $0x368] sm:$0xff] %vm2032, %v1945
  %2143 = vst.msk [vmem:[%s3 + $0x370] sm:$0xff] %vm2032, %v1946
  %2144 = vst.msk [vmem:[%s3 + $0x378] sm:$0xff] %vm2032, %v1947
  %2145 = vst.msk [vmem:[%s3 + $0x380] sm:$0xff] %vm2032, %v1948
  %2146 = vst.msk [vmem:[%s3 + $0x388] sm:$0xff] %vm2032, %v1949
  %2147 = vst.msk [vmem:[%s3 + $0x390] sm:$0xff] %vm2032, %v1950
  %2148 = vst.msk [vmem:[%s3 + $0x398] sm:$0xff] %vm2032, %v1951
  %2149 = vst.msk [vmem:[%s3 + $0x3a0] sm:$0xff] %vm2032, %v1952
  %2150 = vst.msk [vmem:[%s3 + $0x3a8] sm:$0xff] %vm2032, %v1953
  %2151 = vst.msk [vmem:[%s3 + $0x3b0] sm:$0xff] %vm2032, %v1954
  %2152 = vst.msk [vmem:[%s3 + $0x3b8] sm:$0xff] %vm2032, %v1955
  %2153 = vst.msk [vmem:[%s3 + $0x3c0] sm:$0xff] %vm2032, %v1956
  %2154 = vst.msk [vmem:[%s3 + $0x3c8] sm:$0xff] %vm2032, %v1957
  %2155 = vst.msk [vmem:[%s3 + $0x3d0] sm:$0xff] %vm2032, %v1958
  %2156 = vst.msk [vmem:[%s3 + $0x3d8] sm:$0xff] %vm2032, %v1959
  %2157 = vst.msk [vmem:[%s3 + $0x3e0] sm:$0xff] %vm2032, %v1960
  %2158 = vst.msk [vmem:[%s3 + $0x3e8] sm:$0xff] %vm2032, %v1961
  %2159 = vst.msk [vmem:[%s3 + $0x3f0] sm:$0xff] %vm2032, %v1962
  %2160 = vst.msk [vmem:[%s3 + $0x3f8] sm:$0xff] %vm2032, %v1963
  %2161 = vst.msk [vmem:[%s3 + $0x400] sm:$0xff] %vm2032, %v1964
  %2162 = vst.msk [vmem:[%s3 + $0x408] sm:$0xff] %vm2032, %v1965
  %2163 = vst.msk [vmem:[%s3 + $0x410] sm:$0xff] %vm2032, %v1966
  %2164 = vst.msk [vmem:[%s3 + $0x418] sm:$0xff] %vm2032, %v1967
  %2165 = vst.msk [vmem:[%s3 + $0x420] sm:$0xff] %vm2032, %v1968
  %2166 = vst.msk [vmem:[%s3 + $0x428] sm:$0xff] %vm2032, %v1969
  %2167 = vst.msk [vmem:[%s3 + $0x430] sm:$0xff] %vm2032, %v1970
  %2168 = vst.msk [vmem:[%s3 + $0x438] sm:$0xff] %vm2032, %v1971
  %2169 = vst.msk [vmem:[%s3 + $0x440] sm:$0xff] %vm2032, %v1972
  %2170 = vst.msk [vmem:[%s3 + $0x448] sm:$0xff] %vm2032, %v1973
  %2171 = vst.msk [vmem:[%s3 + $0x450] sm:$0xff] %vm2032, %v1974
  %2172 = vst.msk [vmem:[%s3 + $0x458] sm:$0xff] %vm2032, %v1975
  %2173 = vst.msk [vmem:[%s3 + $0x460] sm:$0xff] %vm2032, %v1976
  %2174 = vst.msk [vmem:[%s3 + $0x468] sm:$0xff] %vm2032, %v1977
  %2175 = vst.msk [vmem:[%s3 + $0x470] sm:$0xff] %vm2032, %v1978
  %2176 = vst.msk [vmem:[%s3 + $0x478] sm:$0xff] %vm2032, %v1979
  %2177 = vst.msk [vmem:[%s3 + $0x480] sm:$0xff] %vm2032, %v1980
  %2178 = vst.msk [vmem:[%s3 + $0x488] sm:$0xff] %vm2032, %v1981
  %2179 = vst.msk [vmem:[%s3 + $0x490] sm:$0xff] %vm2032, %v1982
  %2180 = vst.msk [vmem:[%s3 + $0x498] sm:$0xff] %vm2032, %v1983
  %2181 = vst.msk [vmem:[%s3 + $0x4a0] sm:$0xff] %vm2032, %v1984
  %2182 = vst.msk [vmem:[%s3 + $0x4a8] sm:$0xff] %vm2032, %v1985
  %2183 = vst.msk [vmem:[%s3 + $0x4b0] sm:$0xff] %vm2032, %v1986
  %2184 = vst.msk [vmem:[%s3 + $0x4b8] sm:$0xff] %vm2032, %v1987
  %2185 = vst.msk [vmem:[%s3 + $0x4c0] sm:$0xff] %vm2032, %v1988
  %2186 = vst.msk [vmem:[%s3 + $0x4c8] sm:$0xff] %vm2032, %v1989
  %2187 = vst.msk [vmem:[%s3 + $0x4d0] sm:$0xff] %vm2032, %v1990
  %2188 = vst.msk [vmem:[%s3 + $0x4d8] sm:$0xff] %vm2032, %v1991
  %2189 = vst.msk [vmem:[%s3 + $0x4e0] sm:$0xff] %vm2032, %v1992
  %2190 = vst.msk [vmem:[%s3 + $0x4e8] sm:$0xff] %vm2032, %v1993
  %2191 = vst.msk [vmem:[%s3 + $0x4f0] sm:$0xff] %vm2032, %v1994
  %2192 = vst.msk [vmem:[%s3 + $0x4f8] sm:$0xff] %vm2032, %v1995
  %2193 = vst.msk [vmem:[%s3 + $0x500] sm:$0xff] %vm2032, %v1996
  %2194 = vst.msk [vmem:[%s3 + $0x508] sm:$0xff] %vm2032, %v1997
  %2195 = vst.msk [vmem:[%s3 + $0x510] sm:$0xff] %vm2032, %v1998
  %2196 = vst.msk [vmem:[%s3 + $0x518] sm:$0xff] %vm2032, %v1999
  %2197 = vst.msk [vmem:[%s3 + $0x520] sm:$0xff] %vm2032, %v2000
  %2198 = vst.msk [vmem:[%s3 + $0x528] sm:$0xff] %vm2032, %v2001
  %2199 = vst.msk [vmem:[%s3 + $0x530] sm:$0xff] %vm2032, %v2002
  %2200 = vst.msk [vmem:[%s3 + $0x538] sm:$0xff] %vm2032, %v2003
  %2201 = vst.msk [vmem:[%s3 + $0x540] sm:$0xff] %vm2032, %v2004
  %2202 = vst.msk [vmem:[%s3 + $0x548] sm:$0xff] %vm2032, %v2005
  %2203 = vst.msk [vmem:[%s3 + $0x550] sm:$0xff] %vm2032, %v2006
  %2204 = vst.msk [vmem:[%s3 + $0x558] sm:$0xff] %vm2032, %v2007
  %2205 = vst.msk [vmem:[%s3 + $0x560] sm:$0xff] %vm2032, %v2008
  %2206 = vst.msk [vmem:[%s3 + $0x568] sm:$0xff] %vm2032, %v2009
  %2207 = vst.msk [vmem:[%s3 + $0x570] sm:$0xff] %vm2032, %v2010
  %2208 = vst.msk [vmem:[%s3 + $0x578] sm:$0xff] %vm2032, %v2011
  %2209 = vst.msk [vmem:[%s3 + $0x580] sm:$0xff] %vm2032, %v2012
  %2210 = vst.msk [vmem:[%s3 + $0x588] sm:$0xff] %vm2032, %v2013
  %2211 = vst.msk [vmem:[%s3 + $0x590] sm:$0xff] %vm2032, %v2014
  %2212 = vst.msk [vmem:[%s3 + $0x598] sm:$0xff] %vm2032, %v2015
  %2213 = vst.msk [vmem:[%s3 + $0x5a0] sm:$0xff] %vm2032, %v2016
  %2214 = vst.msk [vmem:[%s3 + $0x5a8] sm:$0xff] %vm2032, %v2017
  %2215 = vst.msk [vmem:[%s3 + $0x5b0] sm:$0xff] %vm2032, %v2018
  %2216 = vst.msk [vmem:[%s3 + $0x5b8] sm:$0xff] %vm2032, %v2019
  %2217 = vst.msk [vmem:[%s3 + $0x5c0] sm:$0xff] %vm2032, %v2020
  %2218 = vst.msk [vmem:[%s3 + $0x5c8] sm:$0xff] %vm2032, %v2021
  %2219 = vst.msk [vmem:[%s3 + $0x5d0] sm:$0xff] %vm2032, %v2022
  %2220 = vst.msk [vmem:[%s3 + $0x5d8] sm:$0xff] %vm2032, %v2023
  %2221 = vst.msk [vmem:[%s3 + $0x5e0] sm:$0xff] %vm2032, %v2024
  %2222 = vst.msk [vmem:[%s3 + $0x5e8] sm:$0xff] %vm2032, %v2025
  %2223 = vst.msk [vmem:[%s3 + $0x5f0] sm:$0xff] %vm2032, %v2026
  %2224 = vst.msk [vmem:[%s3 + $0x5f8] sm:$0xff] %vm2032, %v2027
  %2225 = vst.msk [vmem:[%s3 + $0x600] sm:$0xff] %vm2032, %v2028
  %2226 = vst.msk [vmem:[%s3 + $0x608] sm:$0xff] %vm2032, %v2029
  %2227 = vst.msk [vmem:[%s3 + $0x610] sm:$0xff] %vm2032, %v2030
  %2228 = vst.msk [vmem:[%s3 + $0x618] sm:$0xff] %vm2032, %v2031
  // Predicated region
  $region14: #{autoencoder_forward.9} parent=0 // pred_check
    _
  $region15: #{autoencoder_forward.9} parent=0 // pred_check_branch
    %2230 = sbr.rel (0) target = $region17
  $region16: #{autoencoder_forward.9} parent=0 // pred_region
    _
  $region17: #{autoencoder_forward.9} parent=0 // pred_fallthru
    _
  // Predicated region
  $region18: #{autoencoder_forward.9} parent=0 // pred_check
    _
  $region19: #{autoencoder_forward.9} parent=0 // pred_check_branch
    %2232 = sbr.rel (0) target = $region21
  $region20: #{autoencoder_forward.9} parent=0 // pred_region
    _
  $region21: #{autoencoder_forward.9} parent=0 // pred_fallthru
    _

</llo_original>
